<compile_context>
chip_gen: v6e
topology: v6e:2x2x1
jax: 0.10.0
libtpu: 0.0.40
codegen_flags: <defaults>
</compile_context>

<pallas_src>
import functools

import jax
import jax.numpy as jnp
from jax.experimental import pallas as pl
from jax.experimental.pallas import tpu as pltpu

HIDDEN = 32                       # synthetic stand-in for XLS-R's 512 conv channels
KERNELS = (10, 3, 3, 3, 3, 2, 2)  # real XLS-R conv kernel sizes
STRIDES = (5, 2, 2, 2, 2, 2, 2)   # real XLS-R conv strides
LN_EPS = 1e-5                     # torch nn.LayerNorm default
_GELU_C = 0.7071067811865476      # 1/sqrt(2), exact (erf) GELU like nn.GELU default
_N_LAYERS = len(KERNELS)
_MAX_CK = max(k * (1 if i == 0 else HIDDEN) for i, k in enumerate(KERNELS))  # 96


def _conv_lengths(t):
    lens = []
    for k, s in zip(KERNELS, STRIDES):
        t = (t - k) // s + 1
        lens.append(t)
    return lens


def _mm_ln_gelu(x, w, p):
    """x: (M, CK) f32, w: (CK, C) f32, p: (3, C) = [conv bias; LN gamma; LN beta]."""
    y = jnp.dot(x, w, preferred_element_type=jnp.float32)     # MXU
    y = y + p[0:1, :]                                          # conv bias
    mu = jnp.mean(y, axis=-1, keepdims=True)                   # LayerNorm over channels
    var = jnp.mean(jnp.square(y - mu), axis=-1, keepdims=True)
    yn = (y - mu) * jax.lax.rsqrt(var + LN_EPS)
    yn = yn * p[1:2, :] + p[2:3, :]
    return 0.5 * yn * (1.0 + jax.lax.erf(yn * _GELU_C))        # exact GELU


def _encoder_kernel(t_lens, xr_ref, w_ref, p_ref, o_ref, ha_ref, hb_ref):
    """Whole 7-layer conv stack for one batch element, fully resident in VMEM.

    xr_ref: (T0+1, 5)       waveform folded by the layer-0 stride
    w_ref : (7, 96, C)      per-layer (K*Cin, C) weights, zero-padded to 96 rows
    p_ref : (7, 3, C)       per-layer [bias; gamma; beta]
    o_ref : (T_final, C)    channel-last features for this batch element
    ha/hb : (rows, C)       ping-pong activation buffers (channel-last)
    """
    # ---- layer 0: Conv1d(1 -> C, k=10, s=5) via two shifted row blocks ----
    t0 = t_lens[0]
    patches = jnp.concatenate([xr_ref[0:t0, :], xr_ref[1:t0 + 1, :]], axis=-1)  # (T0, 10)
    h = _mm_ln_gelu(patches, w_ref[0, 0:KERNELS[0], :], p_ref[0])               # (T0, C)
    ha_ref[0:t0, :] = h

    # ---- layers 1..6: Conv1d(C -> C, k, s=2), patches from strided reads ----
    src, dst = ha_ref, hb_ref
    for l in range(1, _N_LAYERS):
        k, s = KERNELS[l], STRIDES[l]
        t_out = t_lens[l]
        ck = k * HIDDEN
        # row t of `patches` = [h[s*t], h[s*t+1], ..., h[s*t+k-1]] (channel-last,
        # flattened (K, Cin) — weights were reordered to match).
        patches = jnp.concatenate(
            [src[pl.ds(j, t_out, stride=s), :] for j in range(k)], axis=-1)     # (t_out, k*C)
        h = _mm_ln_gelu(patches, w_ref[l, 0:ck, :], p_ref[l])                   # (t_out, C)
        if l < _N_LAYERS - 1:
            dst[0:t_out, :] = h
            src, dst = dst, src
        else:
            o_ref[...] = h


def xlsr_encoder_feats(x, w_all, norm_all):
    """x: (B, T) raw waveform -> (B, C, T'), exactly like the torch module."""
    B, T = x.shape
    k0, s0 = KERNELS[0], STRIDES[0]
    t_lens = _conv_lengths(T)
    t0, t_final = t_lens[0], t_lens[-1]

    # Fold the layer-0 stride into the layout: (B, T) -> (B, T0+1, 5).  This is
    # a free row-major reshape; all remaining work happens inside one kernel.
    xr = x[:, : s0 * (t0 + 1)].astype(jnp.float32).reshape(B, t0 + 1, s0)
    rows = ((t0 + 7) // 8) * 8   # scratch rows (largest intermediate activation)

    kernel = functools.partial(_encoder_kernel, tuple(t_lens))
    feats = pl.pallas_call(
        kernel,
        out_shape=jax.ShapeDtypeStruct((B, t_final, HIDDEN), jnp.float32),
        grid=(B,),
        in_specs=[
            pl.BlockSpec((None, t0 + 1, s0), lambda b: (b, 0, 0)),          # waveform tile
            pl.BlockSpec((_N_LAYERS, _MAX_CK, HIDDEN), lambda b: (0, 0, 0)),  # all weights
            pl.BlockSpec((_N_LAYERS, 3, HIDDEN), lambda b: (0, 0, 0)),        # bias/gamma/beta
        ],
        out_specs=pl.BlockSpec((None, t_final, HIDDEN), lambda b: (b, 0, 0)),
        scratch_shapes=[
            pltpu.VMEM((rows, HIDDEN), jnp.float32),
            pltpu.VMEM((rows, HIDDEN), jnp.float32),
        ],
        compiler_params=pltpu.CompilerParams(dimension_semantics=("parallel",)),
    )(xr, w_all, norm_all)

    # Wrapper returns extract_features (B, T', C); forward() permutes to (B, C, T').
    return jnp.transpose(feats, (0, 2, 1))
    # TODO(synk): the XLS-R transformer stack is not part of extract_features and
    # is therefore intentionally not implemented here.


def init_params(key):
    """Deterministic synthetic weights, generated in torch layout (Cout, Cin, K)
    and packed for the fused kernel: w_all (7, 96, C), norm_all (7, 3, C)."""
    w_all = jnp.zeros((_N_LAYERS, _MAX_CK, HIDDEN), jnp.float32)
    norm_all = jnp.zeros((_N_LAYERS, 3, HIDDEN), jnp.float32)
    for i, k in enumerate(KERNELS):
        cin = 1 if i == 0 else HIDDEN
        key, kw, kb = jax.random.split(key, 3)
        w_torch = jax.random.normal(kw, (HIDDEN, cin, k), jnp.float32) / jnp.sqrt(cin * k)
        # Kernel patches are flattened (K, Cin) (channel-last, k outer), so
        # reorder torch (Cout, Cin, K) -> (K, Cin, Cout) -> (K*Cin, Cout).
        w_mat = jnp.transpose(w_torch, (2, 1, 0)).reshape(k * cin, HIDDEN)
        w_all = w_all.at[i, : k * cin, :].set(w_mat)
        bias = 0.01 * jax.random.normal(kb, (HIDDEN,), jnp.float32)
        norm_all = norm_all.at[i, 0, :].set(bias)                             # conv bias
        norm_all = norm_all.at[i, 1, :].set(jnp.ones((HIDDEN,), jnp.float32)) # LN gamma
        # LN beta stays zero
    return w_all, norm_all


if __name__ == "__main__":
    key = jax.random.PRNGKey(0)
    kx, kp = jax.random.split(key)
    B, T = 2, 1600                                   # small raw-audio shape
    x = jax.random.normal(kx, (B, T), jnp.float32)
    w_all, norm_all = init_params(kp)

    fn = jax.jit(xlsr_encoder_feats)
    out = jax.block_until_ready(fn(x, w_all, norm_all))
    assert out.shape == (B, HIDDEN, 4), out.shape    # T'=4 for T=1600 with XLS-R strides
    assert bool(jnp.all(jnp.isfinite(out)))
    print("KERNEL_OK")
</pallas_src>

<mosaic_0001>
module attributes {stable_mosaic.version = 11 : i64} {
  func.func @_encoder_kernel(%arg0: i32, %arg1: memref<1x320x5xf32, #tpu.memory_space<vmem>>, %arg2: memref<7x96x32xf32, #tpu.memory_space<vmem>>, %arg3: memref<7x3x32xf32, #tpu.memory_space<vmem>>, %arg4: memref<1x4x32xf32, #tpu.memory_space<vmem>>, %arg5: memref<320x32xf32, #tpu.memory_space<vmem>>, %arg6: memref<320x32xf32, #tpu.memory_space<vmem>>) attributes {dimension_semantics = [#tpu.dimension_semantics<parallel>], iteration_bounds = array<i64: 2>, scalar_prefetch = 0 : i64, scratch_operands = 2 : i64, tpu.core_type = #tpu.core_type<tc>, window_params = [{transform_indices = @transform_0, window_bounds = array<i64: 1, 320, 5>}, {pipeline_mode = #tpu.pipeline_mode<synchronous>, transform_indices = @transform_1, window_bounds = array<i64: 7, 96, 32>}, {pipeline_mode = #tpu.pipeline_mode<synchronous>, transform_indices = @transform_2, window_bounds = array<i64: 7, 3, 32>}, {transform_indices = @transform_3, window_bounds = array<i64: 1, 4, 32>}]} {
    %c0 = arith.constant 0 : index
    %c0_0 = arith.constant 0 : index
    %c0_1 = arith.constant 0 : index
    %0 = vector.load %arg1[%c0, %c0_0, %c0_1] : memref<1x320x5xf32, #tpu.memory_space<vmem>>, vector<1x319x5xf32>
    %1 = vector.shape_cast %0 : vector<1x319x5xf32> to vector<319x5xf32>
    %c0_2 = arith.constant 0 : index
    %c1 = arith.constant 1 : index
    %c0_3 = arith.constant 0 : index
    %2 = vector.load %arg1[%c0_2, %c1, %c0_3] : memref<1x320x5xf32, #tpu.memory_space<vmem>>, vector<1x319x5xf32>
    %3 = vector.shape_cast %2 : vector<1x319x5xf32> to vector<319x5xf32>
    %4 = tpu.concatenate %1, %3 in 1 : vector<319x5xf32>, vector<319x5xf32> -> vector<319x10xf32>
    %c0_4 = arith.constant 0 : index
    %c0_5 = arith.constant 0 : index
    %c0_6 = arith.constant 0 : index
    %5 = vector.load %arg2[%c0_4, %c0_5, %c0_6] : memref<7x96x32xf32, #tpu.memory_space<vmem>>, vector<1x10x32xf32>
    %6 = vector.shape_cast %5 : vector<1x10x32xf32> to vector<10x32xf32>
    %c0_7 = arith.constant 0 : index
    %c0_8 = arith.constant 0 : index
    %c0_9 = arith.constant 0 : index
    %7 = vector.load %arg3[%c0_7, %c0_8, %c0_9] : memref<7x3x32xf32, #tpu.memory_space<vmem>>, vector<1x3x32xf32>
    %8 = vector.shape_cast %7 : vector<1x3x32xf32> to vector<3x32xf32>
    %cst = arith.constant dense<0.000000e+00> : vector<319x32xf32>
    %9 = tpu.matmul %4, %6, %cst {dimension_numbers = #tpu.dot_dimension_numbers<[1], [0], [0], [1], [0, 0, 1, 1], [], []>} : vector<319x10xf32>, vector<10x32xf32>, vector<319x32xf32> -> vector<319x32xf32>
    %10 = vector.extract_strided_slice %8 {offsets = [0, 0], sizes = [1, 32], strides = [1, 1]} : vector<3x32xf32> to vector<1x32xf32>
    %11 = vector.broadcast %10 : vector<1x32xf32> to vector<319x32xf32>
    %12 = arith.addf %9, %11 : vector<319x32xf32>
    %cst_10 = arith.constant dense<0.000000e+00> : vector<319xf32>
    %13 = vector.multi_reduction <add>, %12, %cst_10 [1] : vector<319x32xf32> to vector<319xf32>
    %14 = vector.shape_cast %13 : vector<319xf32> to vector<319x1xf32>
    %cst_11 = arith.constant 3.200000e+01 : f32
    %15 = vector.broadcast %cst_11 : f32 to vector<319x1xf32>
    %16 = arith.divf %14, %15 : vector<319x1xf32>
    %17 = vector.broadcast %16 : vector<319x1xf32> to vector<319x32xf32>
    %18 = arith.subf %12, %17 : vector<319x32xf32>
    %19 = arith.mulf %18, %18 : vector<319x32xf32>
    %cst_12 = arith.constant dense<0.000000e+00> : vector<319xf32>
    %20 = vector.multi_reduction <add>, %19, %cst_12 [1] : vector<319x32xf32> to vector<319xf32>
    %21 = vector.shape_cast %20 : vector<319xf32> to vector<319x1xf32>
    %cst_13 = arith.constant 3.200000e+01 : f32
    %22 = vector.broadcast %cst_13 : f32 to vector<319x1xf32>
    %23 = arith.divf %21, %22 : vector<319x1xf32>
    %24 = vector.broadcast %16 : vector<319x1xf32> to vector<319x32xf32>
    %25 = arith.subf %12, %24 : vector<319x32xf32>
    %cst_14 = arith.constant 9.99999974E-6 : f32
    %26 = vector.broadcast %cst_14 : f32 to vector<319x1xf32>
    %27 = arith.addf %23, %26 : vector<319x1xf32>
    %28 = math.rsqrt %27 : vector<319x1xf32>
    %29 = vector.broadcast %28 : vector<319x1xf32> to vector<319x32xf32>
    %30 = arith.mulf %25, %29 : vector<319x32xf32>
    %31 = vector.extract_strided_slice %8 {offsets = [1, 0], sizes = [1, 32], strides = [1, 1]} : vector<3x32xf32> to vector<1x32xf32>
    %32 = vector.broadcast %31 : vector<1x32xf32> to vector<319x32xf32>
    %33 = arith.mulf %30, %32 : vector<319x32xf32>
    %34 = vector.extract_strided_slice %8 {offsets = [2, 0], sizes = [1, 32], strides = [1, 1]} : vector<3x32xf32> to vector<1x32xf32>
    %35 = vector.broadcast %34 : vector<1x32xf32> to vector<319x32xf32>
    %36 = arith.addf %33, %35 : vector<319x32xf32>
    %cst_15 = arith.constant 5.000000e-01 : f32
    %37 = vector.broadcast %cst_15 : f32 to vector<319x32xf32>
    %38 = arith.mulf %37, %36 : vector<319x32xf32>
    %cst_16 = arith.constant 0.707106769 : f32
    %39 = vector.broadcast %cst_16 : f32 to vector<319x32xf32>
    %40 = arith.mulf %36, %39 : vector<319x32xf32>
    %41 = math.erf %40 : vector<319x32xf32>
    %cst_17 = arith.constant 1.000000e+00 : f32
    %42 = vector.broadcast %cst_17 : f32 to vector<319x32xf32>
    %43 = arith.addf %42, %41 : vector<319x32xf32>
    %44 = arith.mulf %38, %43 : vector<319x32xf32>
    %c0_18 = arith.constant 0 : index
    %c0_19 = arith.constant 0 : index
    %45 = vector.load %arg5[%c0_18, %c0_19] : memref<320x32xf32, #tpu.memory_space<vmem>>, vector<319x32xf32>
    tpu.vector_store %arg5[%c0_18, %c0_19], %44 {strides = array<i32>} : memref<320x32xf32, #tpu.memory_space<vmem>>, vector<319x32xf32>,
    %c0_20 = arith.constant 0 : index
    %c0_21 = arith.constant 0 : index
    %46 = tpu.strided_load %arg5[%c0_20, %c0_21] {strides = array<i32: 2, 1>} : memref<320x32xf32, #tpu.memory_space<vmem>>, vector<159x32xf32>
    %c1_22 = arith.constant 1 : index
    %c0_23 = arith.constant 0 : index
    %47 = tpu.strided_load %arg5[%c1_22, %c0_23] {strides = array<i32: 2, 1>} : memref<320x32xf32, #tpu.memory_space<vmem>>, vector<159x32xf32>
    %c2 = arith.constant 2 : index
    %c0_24 = arith.constant 0 : index
    %48 = tpu.strided_load %arg5[%c2, %c0_24] {strides = array<i32: 2, 1>} : memref<320x32xf32, #tpu.memory_space<vmem>>, vector<159x32xf32>
    %49 = tpu.concatenate %46, %47, %48 in 1 : vector<159x32xf32>, vector<159x32xf32>, vector<159x32xf32> -> vector<159x96xf32>
    %c1_25 = arith.constant 1 : index
    %c0_26 = arith.constant 0 : index
    %c0_27 = arith.constant 0 : index
    %50 = vector.load %arg2[%c1_25, %c0_26, %c0_27] : memref<7x96x32xf32, #tpu.memory_space<vmem>>, vector<1x96x32xf32>
    %51 = vector.shape_cast %50 : vector<1x96x32xf32> to vector<96x32xf32>
    %c1_28 = arith.constant 1 : index
    %c0_29 = arith.constant 0 : index
    %c0_30 = arith.constant 0 : index
    %52 = vector.load %arg3[%c1_28, %c0_29, %c0_30] : memref<7x3x32xf32, #tpu.memory_space<vmem>>, vector<1x3x32xf32>
    %53 = vector.shape_cast %52 : vector<1x3x32xf32> to vector<3x32xf32>
    %cst_31 = arith.constant dense<0.000000e+00> : vector<159x32xf32>
    %54 = tpu.matmul %49, %51, %cst_31 {dimension_numbers = #tpu.dot_dimension_numbers<[1], [0], [0], [1], [0, 0, 1, 1], [], []>} : vector<159x96xf32>, vector<96x32xf32>, vector<159x32xf32> -> vector<159x32xf32>
    %55 = vector.extract_strided_slice %53 {offsets = [0, 0], sizes = [1, 32], strides = [1, 1]} : vector<3x32xf32> to vector<1x32xf32>
    %56 = vector.broadcast %55 : vector<1x32xf32> to vector<159x32xf32>
    %57 = arith.addf %54, %56 : vector<159x32xf32>
    %cst_32 = arith.constant dense<0.000000e+00> : vector<159xf32>
    %58 = vector.multi_reduction <add>, %57, %cst_32 [1] : vector<159x32xf32> to vector<159xf32>
    %59 = vector.shape_cast %58 : vector<159xf32> to vector<159x1xf32>
    %cst_33 = arith.constant 3.200000e+01 : f32
    %60 = vector.broadcast %cst_33 : f32 to vector<159x1xf32>
    %61 = arith.divf %59, %60 : vector<159x1xf32>
    %62 = vector.broadcast %61 : vector<159x1xf32> to vector<159x32xf32>
    %63 = arith.subf %57, %62 : vector<159x32xf32>
    %64 = arith.mulf %63, %63 : vector<159x32xf32>
    %cst_34 = arith.constant dense<0.000000e+00> : vector<159xf32>
    %65 = vector.multi_reduction <add>, %64, %cst_34 [1] : vector<159x32xf32> to vector<159xf32>
    %66 = vector.shape_cast %65 : vector<159xf32> to vector<159x1xf32>
    %cst_35 = arith.constant 3.200000e+01 : f32
    %67 = vector.broadcast %cst_35 : f32 to vector<159x1xf32>
    %68 = arith.divf %66, %67 : vector<159x1xf32>
    %69 = vector.broadcast %61 : vector<159x1xf32> to vector<159x32xf32>
    %70 = arith.subf %57, %69 : vector<159x32xf32>
    %cst_36 = arith.constant 9.99999974E-6 : f32
    %71 = vector.broadcast %cst_36 : f32 to vector<159x1xf32>
    %72 = arith.addf %68, %71 : vector<159x1xf32>
    %73 = math.rsqrt %72 : vector<159x1xf32>
    %74 = vector.broadcast %73 : vector<159x1xf32> to vector<159x32xf32>
    %75 = arith.mulf %70, %74 : vector<159x32xf32>
    %76 = vector.extract_strided_slice %53 {offsets = [1, 0], sizes = [1, 32], strides = [1, 1]} : vector<3x32xf32> to vector<1x32xf32>
    %77 = vector.broadcast %76 : vector<1x32xf32> to vector<159x32xf32>
    %78 = arith.mulf %75, %77 : vector<159x32xf32>
    %79 = vector.extract_strided_slice %53 {offsets = [2, 0], sizes = [1, 32], strides = [1, 1]} : vector<3x32xf32> to vector<1x32xf32>
    %80 = vector.broadcast %79 : vector<1x32xf32> to vector<159x32xf32>
    %81 = arith.addf %78, %80 : vector<159x32xf32>
    %cst_37 = arith.constant 5.000000e-01 : f32
    %82 = vector.broadcast %cst_37 : f32 to vector<159x32xf32>
    %83 = arith.mulf %82, %81 : vector<159x32xf32>
    %cst_38 = arith.constant 0.707106769 : f32
    %84 = vector.broadcast %cst_38 : f32 to vector<159x32xf32>
    %85 = arith.mulf %81, %84 : vector<159x32xf32>
    %86 = math.erf %85 : vector<159x32xf32>
    %cst_39 = arith.constant 1.000000e+00 : f32
    %87 = vector.broadcast %cst_39 : f32 to vector<159x32xf32>
    %88 = arith.addf %87, %86 : vector<159x32xf32>
    %89 = arith.mulf %83, %88 : vector<159x32xf32>
    %c0_40 = arith.constant 0 : index
    %c0_41 = arith.constant 0 : index
    %90 = vector.load %arg6[%c0_40, %c0_41] : memref<320x32xf32, #tpu.memory_space<vmem>>, vector<159x32xf32>
    tpu.vector_store %arg6[%c0_40, %c0_41], %89 {strides = array<i32>} : memref<320x32xf32, #tpu.memory_space<vmem>>, vector<159x32xf32>,
    %c0_42 = arith.constant 0 : index
    %c0_43 = arith.constant 0 : index
    %91 = tpu.strided_load %arg6[%c0_42, %c0_43] {strides = array<i32: 2, 1>} : memref<320x32xf32, #tpu.memory_space<vmem>>, vector<79x32xf32>
    %c1_44 = arith.constant 1 : index
    %c0_45 = arith.constant 0 : index
    %92 = tpu.strided_load %arg6[%c1_44, %c0_45] {strides = array<i32: 2, 1>} : memref<320x32xf32, #tpu.memory_space<vmem>>, vector<79x32xf32>
    %c2_46 = arith.constant 2 : index
    %c0_47 = arith.constant 0 : index
    %93 = tpu.strided_load %arg6[%c2_46, %c0_47] {strides = array<i32: 2, 1>} : memref<320x32xf32, #tpu.memory_space<vmem>>, vector<79x32xf32>
    %94 = tpu.concatenate %91, %92, %93 in 1 : vector<79x32xf32>, vector<79x32xf32>, vector<79x32xf32> -> vector<79x96xf32>
    %c2_48 = arith.constant 2 : index
    %c0_49 = arith.constant 0 : index
    %c0_50 = arith.constant 0 : index
    %95 = vector.load %arg2[%c2_48, %c0_49, %c0_50] : memref<7x96x32xf32, #tpu.memory_space<vmem>>, vector<1x96x32xf32>
    %96 = vector.shape_cast %95 : vector<1x96x32xf32> to vector<96x32xf32>
    %c2_51 = arith.constant 2 : index
    %c0_52 = arith.constant 0 : index
    %c0_53 = arith.constant 0 : index
    %97 = vector.load %arg3[%c2_51, %c0_52, %c0_53] : memref<7x3x32xf32, #tpu.memory_space<vmem>>, vector<1x3x32xf32>
    %98 = vector.shape_cast %97 : vector<1x3x32xf32> to vector<3x32xf32>
    %cst_54 = arith.constant dense<0.000000e+00> : vector<79x32xf32>
    %99 = tpu.matmul %94, %96, %cst_54 {dimension_numbers = #tpu.dot_dimension_numbers<[1], [0], [0], [1], [0, 0, 1, 1], [], []>} : vector<79x96xf32>, vector<96x32xf32>, vector<79x32xf32> -> vector<79x32xf32>
    %100 = vector.extract_strided_slice %98 {offsets = [0, 0], sizes = [1, 32], strides = [1, 1]} : vector<3x32xf32> to vector<1x32xf32>
    %101 = vector.broadcast %100 : vector<1x32xf32> to vector<79x32xf32>
    %102 = arith.addf %99, %101 : vector<79x32xf32>
    %cst_55 = arith.constant dense<0.000000e+00> : vector<79xf32>
    %103 = vector.multi_reduction <add>, %102, %cst_55 [1] : vector<79x32xf32> to vector<79xf32>
    %104 = vector.shape_cast %103 : vector<79xf32> to vector<79x1xf32>
    %cst_56 = arith.constant 3.200000e+01 : f32
    %105 = vector.broadcast %cst_56 : f32 to vector<79x1xf32>
    %106 = arith.divf %104, %105 : vector<79x1xf32>
    %107 = vector.broadcast %106 : vector<79x1xf32> to vector<79x32xf32>
    %108 = arith.subf %102, %107 : vector<79x32xf32>
    %109 = arith.mulf %108, %108 : vector<79x32xf32>
    %cst_57 = arith.constant dense<0.000000e+00> : vector<79xf32>
    %110 = vector.multi_reduction <add>, %109, %cst_57 [1] : vector<79x32xf32> to vector<79xf32>
    %111 = vector.shape_cast %110 : vector<79xf32> to vector<79x1xf32>
    %cst_58 = arith.constant 3.200000e+01 : f32
    %112 = vector.broadcast %cst_58 : f32 to vector<79x1xf32>
    %113 = arith.divf %111, %112 : vector<79x1xf32>
    %114 = vector.broadcast %106 : vector<79x1xf32> to vector<79x32xf32>
    %115 = arith.subf %102, %114 : vector<79x32xf32>
    %cst_59 = arith.constant 9.99999974E-6 : f32
    %116 = vector.broadcast %cst_59 : f32 to vector<79x1xf32>
    %117 = arith.addf %113, %116 : vector<79x1xf32>
    %118 = math.rsqrt %117 : vector<79x1xf32>
    %119 = vector.broadcast %118 : vector<79x1xf32> to vector<79x32xf32>
    %120 = arith.mulf %115, %119 : vector<79x32xf32>
    %121 = vector.extract_strided_slice %98 {offsets = [1, 0], sizes = [1, 32], strides = [1, 1]} : vector<3x32xf32> to vector<1x32xf32>
    %122 = vector.broadcast %121 : vector<1x32xf32> to vector<79x32xf32>
    %123 = arith.mulf %120, %122 : vector<79x32xf32>
    %124 = vector.extract_strided_slice %98 {offsets = [2, 0], sizes = [1, 32], strides = [1, 1]} : vector<3x32xf32> to vector<1x32xf32>
    %125 = vector.broadcast %124 : vector<1x32xf32> to vector<79x32xf32>
    %126 = arith.addf %123, %125 : vector<79x32xf32>
    %cst_60 = arith.constant 5.000000e-01 : f32
    %127 = vector.broadcast %cst_60 : f32 to vector<79x32xf32>
    %128 = arith.mulf %127, %126 : vector<79x32xf32>
    %cst_61 = arith.constant 0.707106769 : f32
    %129 = vector.broadcast %cst_61 : f32 to vector<79x32xf32>
    %130 = arith.mulf %126, %129 : vector<79x32xf32>
    %131 = math.erf %130 : vector<79x32xf32>
    %cst_62 = arith.constant 1.000000e+00 : f32
    %132 = vector.broadcast %cst_62 : f32 to vector<79x32xf32>
    %133 = arith.addf %132, %131 : vector<79x32xf32>
    %134 = arith.mulf %128, %133 : vector<79x32xf32>
    %c0_63 = arith.constant 0 : index
    %c0_64 = arith.constant 0 : index
    %135 = vector.load %arg5[%c0_63, %c0_64] : memref<320x32xf32, #tpu.memory_space<vmem>>, vector<79x32xf32>
    tpu.vector_store %arg5[%c0_63, %c0_64], %134 {strides = array<i32>} : memref<320x32xf32, #tpu.memory_space<vmem>>, vector<79x32xf32>,
    %c0_65 = arith.constant 0 : index
    %c0_66 = arith.constant 0 : index
    %136 = tpu.strided_load %arg5[%c0_65, %c0_66] {strides = array<i32: 2, 1>} : memref<320x32xf32, #tpu.memory_space<vmem>>, vector<39x32xf32>
    %c1_67 = arith.constant 1 : index
    %c0_68 = arith.constant 0 : index
    %137 = tpu.strided_load %arg5[%c1_67, %c0_68] {strides = array<i32: 2, 1>} : memref<320x32xf32, #tpu.memory_space<vmem>>, vector<39x32xf32>
    %c2_69 = arith.constant 2 : index
    %c0_70 = arith.constant 0 : index
    %138 = tpu.strided_load %arg5[%c2_69, %c0_70] {strides = array<i32: 2, 1>} : memref<320x32xf32, #tpu.memory_space<vmem>>, vector<39x32xf32>
    %139 = tpu.concatenate %136, %137, %138 in 1 : vector<39x32xf32>, vector<39x32xf32>, vector<39x32xf32> -> vector<39x96xf32>
    %c3 = arith.constant 3 : index
    %c0_71 = arith.constant 0 : index
    %c0_72 = arith.constant 0 : index
    %140 = vector.load %arg2[%c3, %c0_71, %c0_72] : memref<7x96x32xf32, #tpu.memory_space<vmem>>, vector<1x96x32xf32>
    %141 = vector.shape_cast %140 : vector<1x96x32xf32> to vector<96x32xf32>
    %c3_73 = arith.constant 3 : index
    %c0_74 = arith.constant 0 : index
    %c0_75 = arith.constant 0 : index
    %142 = vector.load %arg3[%c3_73, %c0_74, %c0_75] : memref<7x3x32xf32, #tpu.memory_space<vmem>>, vector<1x3x32xf32>
    %143 = vector.shape_cast %142 : vector<1x3x32xf32> to vector<3x32xf32>
    %cst_76 = arith.constant dense<0.000000e+00> : vector<39x32xf32>
    %144 = tpu.matmul %139, %141, %cst_76 {dimension_numbers = #tpu.dot_dimension_numbers<[1], [0], [0], [1], [0, 0, 1, 1], [], []>} : vector<39x96xf32>, vector<96x32xf32>, vector<39x32xf32> -> vector<39x32xf32>
    %145 = vector.extract_strided_slice %143 {offsets = [0, 0], sizes = [1, 32], strides = [1, 1]} : vector<3x32xf32> to vector<1x32xf32>
    %146 = vector.broadcast %145 : vector<1x32xf32> to vector<39x32xf32>
    %147 = arith.addf %144, %146 : vector<39x32xf32>
    %cst_77 = arith.constant dense<0.000000e+00> : vector<39xf32>
    %148 = vector.multi_reduction <add>, %147, %cst_77 [1] : vector<39x32xf32> to vector<39xf32>
    %149 = vector.shape_cast %148 : vector<39xf32> to vector<39x1xf32>
    %cst_78 = arith.constant 3.200000e+01 : f32
    %150 = vector.broadcast %cst_78 : f32 to vector<39x1xf32>
    %151 = arith.divf %149, %150 : vector<39x1xf32>
    %152 = vector.broadcast %151 : vector<39x1xf32> to vector<39x32xf32>
    %153 = arith.subf %147, %152 : vector<39x32xf32>
    %154 = arith.mulf %153, %153 : vector<39x32xf32>
    %cst_79 = arith.constant dense<0.000000e+00> : vector<39xf32>
    %155 = vector.multi_reduction <add>, %154, %cst_79 [1] : vector<39x32xf32> to vector<39xf32>
    %156 = vector.shape_cast %155 : vector<39xf32> to vector<39x1xf32>
    %cst_80 = arith.constant 3.200000e+01 : f32
    %157 = vector.broadcast %cst_80 : f32 to vector<39x1xf32>
    %158 = arith.divf %156, %157 : vector<39x1xf32>
    %159 = vector.broadcast %151 : vector<39x1xf32> to vector<39x32xf32>
    %160 = arith.subf %147, %159 : vector<39x32xf32>
    %cst_81 = arith.constant 9.99999974E-6 : f32
    %161 = vector.broadcast %cst_81 : f32 to vector<39x1xf32>
    %162 = arith.addf %158, %161 : vector<39x1xf32>
    %163 = math.rsqrt %162 : vector<39x1xf32>
    %164 = vector.broadcast %163 : vector<39x1xf32> to vector<39x32xf32>
    %165 = arith.mulf %160, %164 : vector<39x32xf32>
    %166 = vector.extract_strided_slice %143 {offsets = [1, 0], sizes = [1, 32], strides = [1, 1]} : vector<3x32xf32> to vector<1x32xf32>
    %167 = vector.broadcast %166 : vector<1x32xf32> to vector<39x32xf32>
    %168 = arith.mulf %165, %167 : vector<39x32xf32>
    %169 = vector.extract_strided_slice %143 {offsets = [2, 0], sizes = [1, 32], strides = [1, 1]} : vector<3x32xf32> to vector<1x32xf32>
    %170 = vector.broadcast %169 : vector<1x32xf32> to vector<39x32xf32>
    %171 = arith.addf %168, %170 : vector<39x32xf32>
    %cst_82 = arith.constant 5.000000e-01 : f32
    %172 = vector.broadcast %cst_82 : f32 to vector<39x32xf32>
    %173 = arith.mulf %172, %171 : vector<39x32xf32>
    %cst_83 = arith.constant 0.707106769 : f32
    %174 = vector.broadcast %cst_83 : f32 to vector<39x32xf32>
    %175 = arith.mulf %171, %174 : vector<39x32xf32>
    %176 = math.erf %175 : vector<39x32xf32>
    %cst_84 = arith.constant 1.000000e+00 : f32
    %177 = vector.broadcast %cst_84 : f32 to vector<39x32xf32>
    %178 = arith.addf %177, %176 : vector<39x32xf32>
    %179 = arith.mulf %173, %178 : vector<39x32xf32>
    %c0_85 = arith.constant 0 : index
    %c0_86 = arith.constant 0 : index
    %180 = vector.load %arg6[%c0_85, %c0_86] : memref<320x32xf32, #tpu.memory_space<vmem>>, vector<39x32xf32>
    tpu.vector_store %arg6[%c0_85, %c0_86], %179 {strides = array<i32>} : memref<320x32xf32, #tpu.memory_space<vmem>>, vector<39x32xf32>,
    %c0_87 = arith.constant 0 : index
    %c0_88 = arith.constant 0 : index
    %181 = tpu.strided_load %arg6[%c0_87, %c0_88] {strides = array<i32: 2, 1>} : memref<320x32xf32, #tpu.memory_space<vmem>>, vector<19x32xf32>
    %c1_89 = arith.constant 1 : index
    %c0_90 = arith.constant 0 : index
    %182 = tpu.strided_load %arg6[%c1_89, %c0_90] {strides = array<i32: 2, 1>} : memref<320x32xf32, #tpu.memory_space<vmem>>, vector<19x32xf32>
    %c2_91 = arith.constant 2 : index
    %c0_92 = arith.constant 0 : index
    %183 = tpu.strided_load %arg6[%c2_91, %c0_92] {strides = array<i32: 2, 1>} : memref<320x32xf32, #tpu.memory_space<vmem>>, vector<19x32xf32>
    %184 = tpu.concatenate %181, %182, %183 in 1 : vector<19x32xf32>, vector<19x32xf32>, vector<19x32xf32> -> vector<19x96xf32>
    %c4 = arith.constant 4 : index
    %c0_93 = arith.constant 0 : index
    %c0_94 = arith.constant 0 : index
    %185 = vector.load %arg2[%c4, %c0_93, %c0_94] : memref<7x96x32xf32, #tpu.memory_space<vmem>>, vector<1x96x32xf32>
    %186 = vector.shape_cast %185 : vector<1x96x32xf32> to vector<96x32xf32>
    %c4_95 = arith.constant 4 : index
    %c0_96 = arith.constant 0 : index
    %c0_97 = arith.constant 0 : index
    %187 = vector.load %arg3[%c4_95, %c0_96, %c0_97] : memref<7x3x32xf32, #tpu.memory_space<vmem>>, vector<1x3x32xf32>
    %188 = vector.shape_cast %187 : vector<1x3x32xf32> to vector<3x32xf32>
    %cst_98 = arith.constant dense<0.000000e+00> : vector<19x32xf32>
    %189 = tpu.matmul %184, %186, %cst_98 {dimension_numbers = #tpu.dot_dimension_numbers<[1], [0], [0], [1], [0, 0, 1, 1], [], []>} : vector<19x96xf32>, vector<96x32xf32>, vector<19x32xf32> -> vector<19x32xf32>
    %190 = vector.extract_strided_slice %188 {offsets = [0, 0], sizes = [1, 32], strides = [1, 1]} : vector<3x32xf32> to vector<1x32xf32>
    %191 = vector.broadcast %190 : vector<1x32xf32> to vector<19x32xf32>
    %192 = arith.addf %189, %191 : vector<19x32xf32>
    %cst_99 = arith.constant dense<0.000000e+00> : vector<19xf32>
    %193 = vector.multi_reduction <add>, %192, %cst_99 [1] : vector<19x32xf32> to vector<19xf32>
    %194 = vector.shape_cast %193 : vector<19xf32> to vector<19x1xf32>
    %cst_100 = arith.constant 3.200000e+01 : f32
    %195 = vector.broadcast %cst_100 : f32 to vector<19x1xf32>
    %196 = arith.divf %194, %195 : vector<19x1xf32>
    %197 = vector.broadcast %196 : vector<19x1xf32> to vector<19x32xf32>
    %198 = arith.subf %192, %197 : vector<19x32xf32>
    %199 = arith.mulf %198, %198 : vector<19x32xf32>
    %cst_101 = arith.constant dense<0.000000e+00> : vector<19xf32>
    %200 = vector.multi_reduction <add>, %199, %cst_101 [1] : vector<19x32xf32> to vector<19xf32>
    %201 = vector.shape_cast %200 : vector<19xf32> to vector<19x1xf32>
    %cst_102 = arith.constant 3.200000e+01 : f32
    %202 = vector.broadcast %cst_102 : f32 to vector<19x1xf32>
    %203 = arith.divf %201, %202 : vector<19x1xf32>
    %204 = vector.broadcast %196 : vector<19x1xf32> to vector<19x32xf32>
    %205 = arith.subf %192, %204 : vector<19x32xf32>
    %cst_103 = arith.constant 9.99999974E-6 : f32
    %206 = vector.broadcast %cst_103 : f32 to vector<19x1xf32>
    %207 = arith.addf %203, %206 : vector<19x1xf32>
    %208 = math.rsqrt %207 : vector<19x1xf32>
    %209 = vector.broadcast %208 : vector<19x1xf32> to vector<19x32xf32>
    %210 = arith.mulf %205, %209 : vector<19x32xf32>
    %211 = vector.extract_strided_slice %188 {offsets = [1, 0], sizes = [1, 32], strides = [1, 1]} : vector<3x32xf32> to vector<1x32xf32>
    %212 = vector.broadcast %211 : vector<1x32xf32> to vector<19x32xf32>
    %213 = arith.mulf %210, %212 : vector<19x32xf32>
    %214 = vector.extract_strided_slice %188 {offsets = [2, 0], sizes = [1, 32], strides = [1, 1]} : vector<3x32xf32> to vector<1x32xf32>
    %215 = vector.broadcast %214 : vector<1x32xf32> to vector<19x32xf32>
    %216 = arith.addf %213, %215 : vector<19x32xf32>
    %cst_104 = arith.constant 5.000000e-01 : f32
    %217 = vector.broadcast %cst_104 : f32 to vector<19x32xf32>
    %218 = arith.mulf %217, %216 : vector<19x32xf32>
    %cst_105 = arith.constant 0.707106769 : f32
    %219 = vector.broadcast %cst_105 : f32 to vector<19x32xf32>
    %220 = arith.mulf %216, %219 : vector<19x32xf32>
    %221 = math.erf %220 : vector<19x32xf32>
    %cst_106 = arith.constant 1.000000e+00 : f32
    %222 = vector.broadcast %cst_106 : f32 to vector<19x32xf32>
    %223 = arith.addf %222, %221 : vector<19x32xf32>
    %224 = arith.mulf %218, %223 : vector<19x32xf32>
    %c0_107 = arith.constant 0 : index
    %c0_108 = arith.constant 0 : index
    %225 = vector.load %arg5[%c0_107, %c0_108] : memref<320x32xf32, #tpu.memory_space<vmem>>, vector<19x32xf32>
    tpu.vector_store %arg5[%c0_107, %c0_108], %224 {strides = array<i32>} : memref<320x32xf32, #tpu.memory_space<vmem>>, vector<19x32xf32>,
    %c0_109 = arith.constant 0 : index
    %c0_110 = arith.constant 0 : index
    %226 = tpu.strided_load %arg5[%c0_109, %c0_110] {strides = array<i32: 2, 1>} : memref<320x32xf32, #tpu.memory_space<vmem>>, vector<9x32xf32>
    %c1_111 = arith.constant 1 : index
    %c0_112 = arith.constant 0 : index
    %227 = tpu.strided_load %arg5[%c1_111, %c0_112] {strides = array<i32: 2, 1>} : memref<320x32xf32, #tpu.memory_space<vmem>>, vector<9x32xf32>
    %228 = tpu.concatenate %226, %227 in 1 : vector<9x32xf32>, vector<9x32xf32> -> vector<9x64xf32>
    %c5 = arith.constant 5 : index
    %c0_113 = arith.constant 0 : index
    %c0_114 = arith.constant 0 : index
    %229 = vector.load %arg2[%c5, %c0_113, %c0_114] : memref<7x96x32xf32, #tpu.memory_space<vmem>>, vector<1x64x32xf32>
    %230 = vector.shape_cast %229 : vector<1x64x32xf32> to vector<64x32xf32>
    %c5_115 = arith.constant 5 : index
    %c0_116 = arith.constant 0 : index
    %c0_117 = arith.constant 0 : index
    %231 = vector.load %arg3[%c5_115, %c0_116, %c0_117] : memref<7x3x32xf32, #tpu.memory_space<vmem>>, vector<1x3x32xf32>
    %232 = vector.shape_cast %231 : vector<1x3x32xf32> to vector<3x32xf32>
    %cst_118 = arith.constant dense<0.000000e+00> : vector<9x32xf32>
    %233 = tpu.matmul %228, %230, %cst_118 {dimension_numbers = #tpu.dot_dimension_numbers<[1], [0], [0], [1], [0, 0, 1, 1], [], []>} : vector<9x64xf32>, vector<64x32xf32>, vector<9x32xf32> -> vector<9x32xf32>
    %234 = vector.extract_strided_slice %232 {offsets = [0, 0], sizes = [1, 32], strides = [1, 1]} : vector<3x32xf32> to vector<1x32xf32>
    %235 = vector.broadcast %234 : vector<1x32xf32> to vector<9x32xf32>
    %236 = arith.addf %233, %235 : vector<9x32xf32>
    %cst_119 = arith.constant dense<0.000000e+00> : vector<9xf32>
    %237 = vector.multi_reduction <add>, %236, %cst_119 [1] : vector<9x32xf32> to vector<9xf32>
    %238 = vector.shape_cast %237 : vector<9xf32> to vector<9x1xf32>
    %cst_120 = arith.constant 3.200000e+01 : f32
    %239 = vector.broadcast %cst_120 : f32 to vector<9x1xf32>
    %240 = arith.divf %238, %239 : vector<9x1xf32>
    %241 = vector.broadcast %240 : vector<9x1xf32> to vector<9x32xf32>
    %242 = arith.subf %236, %241 : vector<9x32xf32>
    %243 = arith.mulf %242, %242 : vector<9x32xf32>
    %cst_121 = arith.constant dense<0.000000e+00> : vector<9xf32>
    %244 = vector.multi_reduction <add>, %243, %cst_121 [1] : vector<9x32xf32> to vector<9xf32>
    %245 = vector.shape_cast %244 : vector<9xf32> to vector<9x1xf32>
    %cst_122 = arith.constant 3.200000e+01 : f32
    %246 = vector.broadcast %cst_122 : f32 to vector<9x1xf32>
    %247 = arith.divf %245, %246 : vector<9x1xf32>
    %248 = vector.broadcast %240 : vector<9x1xf32> to vector<9x32xf32>
    %249 = arith.subf %236, %248 : vector<9x32xf32>
    %cst_123 = arith.constant 9.99999974E-6 : f32
    %250 = vector.broadcast %cst_123 : f32 to vector<9x1xf32>
    %251 = arith.addf %247, %250 : vector<9x1xf32>
    %252 = math.rsqrt %251 : vector<9x1xf32>
    %253 = vector.broadcast %252 : vector<9x1xf32> to vector<9x32xf32>
    %254 = arith.mulf %249, %253 : vector<9x32xf32>
    %255 = vector.extract_strided_slice %232 {offsets = [1, 0], sizes = [1, 32], strides = [1, 1]} : vector<3x32xf32> to vector<1x32xf32>
    %256 = vector.broadcast %255 : vector<1x32xf32> to vector<9x32xf32>
    %257 = arith.mulf %254, %256 : vector<9x32xf32>
    %258 = vector.extract_strided_slice %232 {offsets = [2, 0], sizes = [1, 32], strides = [1, 1]} : vector<3x32xf32> to vector<1x32xf32>
    %259 = vector.broadcast %258 : vector<1x32xf32> to vector<9x32xf32>
    %260 = arith.addf %257, %259 : vector<9x32xf32>
    %cst_124 = arith.constant 5.000000e-01 : f32
    %261 = vector.broadcast %cst_124 : f32 to vector<9x32xf32>
    %262 = arith.mulf %261, %260 : vector<9x32xf32>
    %cst_125 = arith.constant 0.707106769 : f32
    %263 = vector.broadcast %cst_125 : f32 to vector<9x32xf32>
    %264 = arith.mulf %260, %263 : vector<9x32xf32>
    %265 = math.erf %264 : vector<9x32xf32>
    %cst_126 = arith.constant 1.000000e+00 : f32
    %266 = vector.broadcast %cst_126 : f32 to vector<9x32xf32>
    %267 = arith.addf %266, %265 : vector<9x32xf32>
    %268 = arith.mulf %262, %267 : vector<9x32xf32>
    %c0_127 = arith.constant 0 : index
    %c0_128 = arith.constant 0 : index
    %269 = vector.load %arg6[%c0_127, %c0_128] : memref<320x32xf32, #tpu.memory_space<vmem>>, vector<9x32xf32>
    tpu.vector_store %arg6[%c0_127, %c0_128], %268 {strides = array<i32>} : memref<320x32xf32, #tpu.memory_space<vmem>>, vector<9x32xf32>,
    %c0_129 = arith.constant 0 : index
    %c0_130 = arith.constant 0 : index
    %270 = tpu.strided_load %arg6[%c0_129, %c0_130] {strides = array<i32: 2, 1>} : memref<320x32xf32, #tpu.memory_space<vmem>>, vector<4x32xf32>
    %c1_131 = arith.constant 1 : index
    %c0_132 = arith.constant 0 : index
    %271 = tpu.strided_load %arg6[%c1_131, %c0_132] {strides = array<i32: 2, 1>} : memref<320x32xf32, #tpu.memory_space<vmem>>, vector<4x32xf32>
    %272 = tpu.concatenate %270, %271 in 1 : vector<4x32xf32>, vector<4x32xf32> -> vector<4x64xf32>
    %c6 = arith.constant 6 : index
    %c0_133 = arith.constant 0 : index
    %c0_134 = arith.constant 0 : index
    %273 = vector.load %arg2[%c6, %c0_133, %c0_134] : memref<7x96x32xf32, #tpu.memory_space<vmem>>, vector<1x64x32xf32>
    %274 = vector.shape_cast %273 : vector<1x64x32xf32> to vector<64x32xf32>
    %c6_135 = arith.constant 6 : index
    %c0_136 = arith.constant 0 : index
    %c0_137 = arith.constant 0 : index
    %275 = vector.load %arg3[%c6_135, %c0_136, %c0_137] : memref<7x3x32xf32, #tpu.memory_space<vmem>>, vector<1x3x32xf32>
    %276 = vector.shape_cast %275 : vector<1x3x32xf32> to vector<3x32xf32>
    %cst_138 = arith.constant dense<0.000000e+00> : vector<4x32xf32>
    %277 = tpu.matmul %272, %274, %cst_138 {dimension_numbers = #tpu.dot_dimension_numbers<[1], [0], [0], [1], [0, 0, 1, 1], [], []>} : vector<4x64xf32>, vector<64x32xf32>, vector<4x32xf32> -> vector<4x32xf32>
    %278 = vector.extract_strided_slice %276 {offsets = [0, 0], sizes = [1, 32], strides = [1, 1]} : vector<3x32xf32> to vector<1x32xf32>
    %279 = vector.broadcast %278 : vector<1x32xf32> to vector<4x32xf32>
    %280 = arith.addf %277, %279 : vector<4x32xf32>
    %cst_139 = arith.constant dense<0.000000e+00> : vector<4xf32>
    %281 = vector.multi_reduction <add>, %280, %cst_139 [1] : vector<4x32xf32> to vector<4xf32>
    %282 = vector.shape_cast %281 : vector<4xf32> to vector<4x1xf32>
    %cst_140 = arith.constant 3.200000e+01 : f32
    %283 = vector.broadcast %cst_140 : f32 to vector<4x1xf32>
    %284 = arith.divf %282, %283 : vector<4x1xf32>
    %285 = vector.broadcast %284 : vector<4x1xf32> to vector<4x32xf32>
    %286 = arith.subf %280, %285 : vector<4x32xf32>
    %287 = arith.mulf %286, %286 : vector<4x32xf32>
    %cst_141 = arith.constant dense<0.000000e+00> : vector<4xf32>
    %288 = vector.multi_reduction <add>, %287, %cst_141 [1] : vector<4x32xf32> to vector<4xf32>
    %289 = vector.shape_cast %288 : vector<4xf32> to vector<4x1xf32>
    %cst_142 = arith.constant 3.200000e+01 : f32
    %290 = vector.broadcast %cst_142 : f32 to vector<4x1xf32>
    %291 = arith.divf %289, %290 : vector<4x1xf32>
    %292 = vector.broadcast %284 : vector<4x1xf32> to vector<4x32xf32>
    %293 = arith.subf %280, %292 : vector<4x32xf32>
    %cst_143 = arith.constant 9.99999974E-6 : f32
    %294 = vector.broadcast %cst_143 : f32 to vector<4x1xf32>
    %295 = arith.addf %291, %294 : vector<4x1xf32>
    %296 = math.rsqrt %295 : vector<4x1xf32>
    %297 = vector.broadcast %296 : vector<4x1xf32> to vector<4x32xf32>
    %298 = arith.mulf %293, %297 : vector<4x32xf32>
    %299 = vector.extract_strided_slice %276 {offsets = [1, 0], sizes = [1, 32], strides = [1, 1]} : vector<3x32xf32> to vector<1x32xf32>
    %300 = vector.broadcast %299 : vector<1x32xf32> to vector<4x32xf32>
    %301 = arith.mulf %298, %300 : vector<4x32xf32>
    %302 = vector.extract_strided_slice %276 {offsets = [2, 0], sizes = [1, 32], strides = [1, 1]} : vector<3x32xf32> to vector<1x32xf32>
    %303 = vector.broadcast %302 : vector<1x32xf32> to vector<4x32xf32>
    %304 = arith.addf %301, %303 : vector<4x32xf32>
    %cst_144 = arith.constant 5.000000e-01 : f32
    %305 = vector.broadcast %cst_144 : f32 to vector<4x32xf32>
    %306 = arith.mulf %305, %304 : vector<4x32xf32>
    %cst_145 = arith.constant 0.707106769 : f32
    %307 = vector.broadcast %cst_145 : f32 to vector<4x32xf32>
    %308 = arith.mulf %304, %307 : vector<4x32xf32>
    %309 = math.erf %308 : vector<4x32xf32>
    %cst_146 = arith.constant 1.000000e+00 : f32
    %310 = vector.broadcast %cst_146 : f32 to vector<4x32xf32>
    %311 = arith.addf %310, %309 : vector<4x32xf32>
    %312 = arith.mulf %306, %311 : vector<4x32xf32>
    %c0_147 = arith.constant 0 : index
    %c0_148 = arith.constant 0 : index
    %c0_149 = arith.constant 0 : index
    %313 = vector.load %arg4[%c0_147, %c0_148, %c0_149] : memref<1x4x32xf32, #tpu.memory_space<vmem>>, vector<1x4x32xf32>
    %314 = vector.shape_cast %313 : vector<1x4x32xf32> to vector<4x32xf32>
    %315 = vector.shape_cast %312 : vector<4x32xf32> to vector<1x4x32xf32>
    tpu.vector_store %arg4[%c0_147, %c0_148, %c0_149], %315 {strides = array<i32>} : memref<1x4x32xf32, #tpu.memory_space<vmem>>, vector<1x4x32xf32>,
    return
  }
  func.func @transform_0(%arg0: i32) -> (i32, i32, i32) {
    %c0_i32 = arith.constant 0 : i32
    %c0_i32_0 = arith.constant 0 : i32
    %c0_i32_1 = arith.constant 0 : i32
    return %arg0, %c0_i32, %c0_i32_0 : i32, i32, i32
  }
  func.func @transform_1(%arg0: i32) -> (i32, i32, i32) {
    %c0_i32 = arith.constant 0 : i32
    %c0_i32_0 = arith.constant 0 : i32
    %c0_i32_1 = arith.constant 0 : i32
    %c0_i32_2 = arith.constant 0 : i32
    return %c0_i32, %c0_i32_0, %c0_i32_1 : i32, i32, i32
  }
  func.func @transform_2(%arg0: i32) -> (i32, i32, i32) {
    %c0_i32 = arith.constant 0 : i32
    %c0_i32_0 = arith.constant 0 : i32
    %c0_i32_1 = arith.constant 0 : i32
    %c0_i32_2 = arith.constant 0 : i32
    return %c0_i32, %c0_i32_0, %c0_i32_1 : i32, i32, i32
  }
  func.func @transform_3(%arg0: i32) -> (i32, i32, i32) {
    %c0_i32 = arith.constant 0 : i32
    %c0_i32_0 = arith.constant 0 : i32
    %c0_i32_1 = arith.constant 0 : i32
    return %arg0, %c0_i32, %c0_i32_0 : i32, i32, i32
  }
}

</mosaic_0001>

<llo_original>
// kernel: xlsr_encoder_feats.1
$region0: #{xlsr_encoder_feats.1}
  #allocation0 [shape = 'u32[]', space=smem, size = 0x4, offset = 0x4, fixed_abs, tag = 'smem constant byte address 0x4 - core index']
  #allocation1 [shape = 'u32[144,128]{1,0:T(1,128)}', space=vmem, size = 0x12000, scoped, tag = 'internal scratch']
  #allocation2 [shape = 'f32[320,32]{1,0:T(8,128)}', space=vmem, size = 0x28000, scoped, tag = 'scratch operand']
  #allocation3 [shape = 'f32[320,32]{1,0:T(8,128)}', space=vmem, size = 0x28000, scoped, tag = 'scratch operand']
  %s0 = inlined_call_operand.vmem [shape: f32[2,320,5], index: 0, kind: input, shape index: {}]
  %s1 = inlined_call_operand.vmem [shape: f32[7,96,32], index: 1, kind: input, shape index: {}]
  %s2 = inlined_call_operand.vmem [shape: f32[7,3,32], index: 2, kind: input, shape index: {}]
  %s3 = inlined_call_operand.hbm [shape: f32[2,4,32], index: 3, kind: output, shape index: {}]
  %s4 = sld [smem:[#allocation0]]
  $region45: #{xlsr_encoder_feats.1} parent=0
    _
  %s6 = ssub.s32 1, %s4
  %s7 = scalar_select 0, %s6, %s4
  $region1: #{xlsr_encoder_feats.1} parent=0
    #allocation4 [shape = 'u8[4096]{0}', space=vmem, size = 0x1000, scoped, tag = 'output window, operand 0']
    #allocation5 [shape = 's32[2]{0}', space=sflag, size = 0x8, scoped, tag = 'scoped memory for xlsr_encoder_feats.1']
    %8 = vsyncpa [#allocation5], 0
    %s9 = scalar_lea.sflag [#allocation5], 1
    %10 = vsyncpa %s9, 0
    loop: start=0, step=1, limit=4
    $region2: #{xlsr_encoder_feats.1} parent=1 // loop_pre_header
      _
    $region3: #{xlsr_encoder_feats.1} parent=1 // loop_header
      %s12 = sphi 0, %s16
      %p13 = scmp.ge.s32.totalorder %s12, 4
      %s22 = sphi 0, %s24
      %s25 = sphi 0, %s22
      %s26 = sphi 0, %s25
      %s42 = sphi 0, %s26
      %s46 = sphi 0, %s46
      %s48 = sphi 0, %s46
      %s49 = sphi 0, %s48
      %s63 = sphi 0, %s49
      %s67 = sphi 0, %s67
      %s69 = sphi 0, %s67
      %s70 = sphi 0, %s69
      %s84 = sphi 0, %s70
      %s90 = sphi 0, %s92
      %s93 = sphi 0, %s90
      %s94 = sphi 0, %s93
      %s110 = sphi 0, %s94
    $region4: #{xlsr_encoder_feats.1} parent=1 // loop_header_branch
      %15 = sbr.rel (%p13) target = $region8
    $region5: #{xlsr_encoder_feats.1} parent=1 // loop_body
      %s17 = ssub.s32 %s12, 1
      %s18 = ssub.s32 %s12, 2
      %s19 = sadd.s32 %s12, 1
      %s20 = ssub.s32 %s12, %s19
      %p21 = scmp.eq.s32.totalorder %s20, 0
      %s23 = sadd.s32 %s22, 1
      %s24 = scalar_select %p21, %s22, %s23
      %p27 = pneg %p21
      %p28 = scmp.eq.s32.totalorder %s12, 1
      %p29 = por %p27, %p28
      %p30 = scmp.ne.s32.totalorder %s22, %s25
      %p31 = scmp.eq.s32.totalorder %s12, 0
      %p32 = por %p30, %p31
      %p33 = scmp.ne.s32.totalorder %s22, %s25
      %p34 = scmp.eq.s32.totalorder %s17, 1
      %p35 = por %p33, %p34
      %p36 = scmp.ne.s32.totalorder %s25, %s26
      %p37 = scmp.eq.s32.totalorder %s17, 0
      %p38 = por %p36, %p37
      %p39 = scmp.ne.s32.totalorder %s25, %s26
      %p40 = scmp.eq.s32.totalorder %s18, 1
      %p41 = por %p39, %p40
      %p43 = scmp.ne.s32.totalorder %s26, %s42
      %p44 = scmp.eq.s32.totalorder %s18, 0
      %p45 = por %p43, %p44
      %s47 = sadd.s32 %s46, 1
      %p50 = scmp.eq.s32.totalorder %s12, 1
      %p51 = scmp.ne.s32.totalorder %s46, %s48
      %p52 = scmp.eq.s32.totalorder %s12, 0
      %p53 = por %p51, %p52
      %p54 = scmp.ne.s32.totalorder %s46, %s48
      %p55 = scmp.eq.s32.totalorder %s17, 1
      %p56 = por %p54, %p55
      %p57 = scmp.ne.s32.totalorder %s48, %s49
      %p58 = scmp.eq.s32.totalorder %s17, 0
      %p59 = por %p57, %p58
      %p60 = scmp.ne.s32.totalorder %s48, %s49
      %p61 = scmp.eq.s32.totalorder %s18, 1
      %p62 = por %p60, %p61
      %p64 = scmp.ne.s32.totalorder %s49, %s63
      %p65 = scmp.eq.s32.totalorder %s18, 0
      %p66 = por %p64, %p65
      %s68 = sadd.s32 %s67, 1
      %p71 = scmp.eq.s32.totalorder %s12, 1
      %p72 = scmp.ne.s32.totalorder %s67, %s69
      %p73 = scmp.eq.s32.totalorder %s12, 0
      %p74 = por %p72, %p73
      %p75 = scmp.ne.s32.totalorder %s67, %s69
      %p76 = scmp.eq.s32.totalorder %s17, 1
      %p77 = por %p75, %p76
      %p78 = scmp.ne.s32.totalorder %s69, %s70
      %p79 = scmp.eq.s32.totalorder %s17, 0
      %p80 = por %p78, %p79
      %p81 = scmp.ne.s32.totalorder %s69, %s70
      %p82 = scmp.eq.s32.totalorder %s18, 1
      %p83 = por %p81, %p82
      %p85 = scmp.ne.s32.totalorder %s70, %s84
      %p86 = scmp.eq.s32.totalorder %s18, 0
      %p87 = por %p85, %p86
      %s88 = ssub.s32 %s12, %s19
      %p89 = scmp.eq.s32.totalorder %s88, 0
      %s91 = sadd.s32 %s90, 1
      %s92 = scalar_select %p89, %s90, %s91
      %p95 = pneg %p89
      %p96 = scmp.eq.s32.totalorder %s12, 1
      %p97 = por %p95, %p96
      %p98 = scmp.ne.s32.totalorder %s90, %s93
      %p99 = scmp.eq.s32.totalorder %s12, 0
      %p100 = por %p98, %p99
      %p101 = scmp.ne.s32.totalorder %s90, %s93
      %p102 = scmp.eq.s32.totalorder %s17, 1
      %p103 = por %p101, %p102
      %p104 = scmp.ne.s32.totalorder %s93, %s94
      %p105 = scmp.eq.s32.totalorder %s17, 0
      %p106 = por %p104, %p105
      %p107 = scmp.ne.s32.totalorder %s93, %s94
      %p108 = scmp.eq.s32.totalorder %s18, 1
      %p109 = por %p107, %p108
      %p111 = scmp.ne.s32.totalorder %s94, %s110
      %p112 = scmp.eq.s32.totalorder %s18, 0
      %p113 = por %p111, %p112
      %p114 = scmp.le.s32.totalorder 1, %s12
      %p115 = scmp.lt.s32.totalorder %s12, 3
      %p116 = pnand %p114, %p115
      %p117 = pneg %p116
      // Predicated region
      $region9: #{xlsr_encoder_feats.1} parent=5 // pred_check
        _
      $region10: #{xlsr_encoder_feats.1} parent=5 // pred_check_branch
        %119 = sbr.rel (%p116) target = $region12
      $region11: #{xlsr_encoder_feats.1} parent=5 // pred_region
        %s120 = ssub.s32 %s12, 1
        // Predicated region
        $region13: #{xlsr_encoder_feats.1} parent=11 // pred_check
          %p121 = pneg %p59
        $region14: #{xlsr_encoder_feats.1} parent=11 // pred_check_branch
          %123 = sbr.rel (%p121) target = $region16
        $region15: #{xlsr_encoder_feats.1} parent=11 // pred_region
          _
        $region16: #{xlsr_encoder_feats.1} parent=11 // pred_fallthru
          _
        // Predicated region
        $region17: #{xlsr_encoder_feats.1} parent=11 // pred_check
          %p124 = pneg %p80
        $region18: #{xlsr_encoder_feats.1} parent=11 // pred_check_branch
          %126 = sbr.rel (%p124) target = $region20
        $region19: #{xlsr_encoder_feats.1} parent=11 // pred_region
          _
        $region20: #{xlsr_encoder_feats.1} parent=11 // pred_fallthru
          _
      $region12: #{xlsr_encoder_feats.1} parent=5 // pred_fallthru
        _
      %p127 = scmp.lt.s32.totalorder %s12, 2
      // Predicated region
      $region21: #{xlsr_encoder_feats.1} parent=5 // pred_check
        %p128 = pneg %p127
      $region22: #{xlsr_encoder_feats.1} parent=5 // pred_check_branch
        %130 = sbr.rel (%p128) target = $region24
      $region23: #{xlsr_encoder_feats.1} parent=5 // pred_region
        // Predicated region
        $region25: #{xlsr_encoder_feats.1} parent=23 // pred_check
          %p131 = pneg %p32
        $region26: #{xlsr_encoder_feats.1} parent=23 // pred_check_branch
          %133 = sbr.rel (%p131) target = $region28
        $region27: #{xlsr_encoder_feats.1} parent=23 // pred_region
          %p134 = scmp.lt.s32.totalorder %s12, 1
          %s135 = scalar_select %p134, %s12, 1
          %s136 = smul.addr %s135, 40
          %s137 = smul.addr %s136, 8
          %s138 = scalar_lea.vmem %s0, %s137
        $region28: #{xlsr_encoder_feats.1} parent=23 // pred_fallthru
          _
      $region24: #{xlsr_encoder_feats.1} parent=5 // pred_fallthru
        _
      %p139 = scmp.le.s32.totalorder 1, %s12
      %p140 = scmp.lt.s32.totalorder %s12, 3
      %p141 = pnand %p139, %p140
      %p142 = pneg %p141
      // Predicated region
      $region29: #{xlsr_encoder_feats.1} parent=5 // pred_check
        _
      $region30: #{xlsr_encoder_feats.1} parent=5 // pred_check_branch
        %144 = sbr.rel (%p141) target = $region32
      $region31: #{xlsr_encoder_feats.1} parent=5 // pred_region
        %s145 = ssub.s32 %s12, 1
        %p146 = scmp.lt.s32.totalorder %s17, 1
        %s147 = scalar_select %p146, %s17, 1
        %s148 = smul.addr %s147, 40
        %s149 = smul.addr %s148, 8
        %s150 = scalar_lea.vmem %s0, %s149
        %p151 = pneg %p38
        %p152 = pneg %p35
        %p153 = pneg %p59
        %p154 = pneg %p56
        %p155 = pneg %p80
        %p156 = pneg %p77
        %p157 = pneg %p106
        %p158 = pneg %p103
        %s159 = sand.u32 %s93, 1
        %s160 = scalar_lea.sflag [#allocation5], %s159
        %s161 = sand.u32 %s93, 1
        %s162 = smul.addr %s161, 4
        %s163 = scalar_lea.vmem [#allocation4], %s162
        %p164 = scmp.lt.s32.totalorder %s17, 1
        %s165 = scalar_select %p164, %s17, 1
        %s166 = smul.addr %s165, 40
        %s167 = smul.addr %s166, 8
        %s168 = scalar_lea.vmem %s0, %s167
        %v169 = vld [vmem:[%s168] sm:$0xff]
        %v170 = vld [vmem:[%s168 + $0x8] sm:$0xff]
        %v171 = vld [vmem:[%s168 + $0x10] sm:$0xff]
        %v172 = vld [vmem:[%s168 + $0x18] sm:$0xff]
        %v173 = vld [vmem:[%s168 + $0x20] sm:$0xff]
        %v174 = vld [vmem:[%s168 + $0x28] sm:$0xff]
        %v175 = vld [vmem:[%s168 + $0x30] sm:$0xff]
        %v176 = vld [vmem:[%s168 + $0x38] sm:$0xff]
        %v177 = vld [vmem:[%s168 + $0x40] sm:$0xff]
        %v178 = vld [vmem:[%s168 + $0x48] sm:$0xff]
        %v179 = vld [vmem:[%s168 + $0x50] sm:$0xff]
        %v180 = vld [vmem:[%s168 + $0x58] sm:$0xff]
        %v181 = vld [vmem:[%s168 + $0x60] sm:$0xff]
        %v182 = vld [vmem:[%s168 + $0x68] sm:$0xff]
        %v183 = vld [vmem:[%s168 + $0x70] sm:$0xff]
        %v184 = vld [vmem:[%s168 + $0x78] sm:$0xff]
        %v185 = vld [vmem:[%s168 + $0x80] sm:$0xff]
        %v186 = vld [vmem:[%s168 + $0x88] sm:$0xff]
        %v187 = vld [vmem:[%s168 + $0x90] sm:$0xff]
        %v188 = vld [vmem:[%s168 + $0x98] sm:$0xff]
        %v189 = vld [vmem:[%s168 + $0xa0] sm:$0xff]
        %v190 = vld [vmem:[%s168 + $0xa8] sm:$0xff]
        %v191 = vld [vmem:[%s168 + $0xb0] sm:$0xff]
        %v192 = vld [vmem:[%s168 + $0xb8] sm:$0xff]
        %v193 = vld [vmem:[%s168 + $0xc0] sm:$0xff]
        %v194 = vld [vmem:[%s168 + $0xc8] sm:$0xff]
        %v195 = vld [vmem:[%s168 + $0xd0] sm:$0xff]
        %v196 = vld [vmem:[%s168 + $0xd8] sm:$0xff]
        %v197 = vld [vmem:[%s168 + $0xe0] sm:$0xff]
        %v198 = vld [vmem:[%s168 + $0xe8] sm:$0xff]
        %v199 = vld [vmem:[%s168 + $0xf0] sm:$0xff]
        %v200 = vld [vmem:[%s168 + $0xf8] sm:$0xff]
        %v201 = vld [vmem:[%s168 + $0x100] sm:$0xff]
        %v202 = vld [vmem:[%s168 + $0x108] sm:$0xff]
        %v203 = vld [vmem:[%s168 + $0x110] sm:$0xff]
        %v204 = vld [vmem:[%s168 + $0x118] sm:$0xff]
        %v205 = vld [vmem:[%s168 + $0x120] sm:$0xff]
        %v206 = vld [vmem:[%s168 + $0x128] sm:$0xff]
        %v207 = vld [vmem:[%s168 + $0x130] sm:$0xff]
        %v208 = vld [vmem:[%s168 + $0x138] sm:$0x7f]
        %v209 = vld [vmem:[%s168 + $0x1] sm:$0xff]
        %v210 = vld [vmem:[%s168 + $0x9] sm:$0xff]
        %v211 = vld [vmem:[%s168 + $0x11] sm:$0xff]
        %v212 = vld [vmem:[%s168 + $0x19] sm:$0xff]
        %v213 = vld [vmem:[%s168 + $0x21] sm:$0xff]
        %v214 = vld [vmem:[%s168 + $0x29] sm:$0xff]
        %v215 = vld [vmem:[%s168 + $0x31] sm:$0xff]
        %v216 = vld [vmem:[%s168 + $0x39] sm:$0xff]
        %v217 = vld [vmem:[%s168 + $0x41] sm:$0xff]
        %v218 = vld [vmem:[%s168 + $0x49] sm:$0xff]
        %v219 = vld [vmem:[%s168 + $0x51] sm:$0xff]
        %v220 = vld [vmem:[%s168 + $0x59] sm:$0xff]
        %v221 = vld [vmem:[%s168 + $0x61] sm:$0xff]
        %v222 = vld [vmem:[%s168 + $0x69] sm:$0xff]
        %v223 = vld [vmem:[%s168 + $0x71] sm:$0xff]
        %v224 = vld [vmem:[%s168 + $0x79] sm:$0xff]
        %v225 = vld [vmem:[%s168 + $0x81] sm:$0xff]
        %v226 = vld [vmem:[%s168 + $0x89] sm:$0xff]
        %v227 = vld [vmem:[%s168 + $0x91] sm:$0xff]
        %v228 = vld [vmem:[%s168 + $0x99] sm:$0xff]
        %v229 = vld [vmem:[%s168 + $0xa1] sm:$0xff]
        %v230 = vld [vmem:[%s168 + $0xa9] sm:$0xff]
        %v231 = vld [vmem:[%s168 + $0xb1] sm:$0xff]
        %v232 = vld [vmem:[%s168 + $0xb9] sm:$0xff]
        %v233 = vld [vmem:[%s168 + $0xc1] sm:$0xff]
        %v234 = vld [vmem:[%s168 + $0xc9] sm:$0xff]
        %v235 = vld [vmem:[%s168 + $0xd1] sm:$0xff]
        %v236 = vld [vmem:[%s168 + $0xd9] sm:$0xff]
        %v237 = vld [vmem:[%s168 + $0xe1] sm:$0xff]
        %v238 = vld [vmem:[%s168 + $0xe9] sm:$0xff]
        %v239 = vld [vmem:[%s168 + $0xf1] sm:$0xff]
        %v240 = vld [vmem:[%s168 + $0xf9] sm:$0xff]
        %v241 = vld [vmem:[%s168 + $0x101] sm:$0xff]
        %v242 = vld [vmem:[%s168 + $0x109] sm:$0xff]
        %v243 = vld [vmem:[%s168 + $0x111] sm:$0xff]
        %v244 = vld [vmem:[%s168 + $0x119] sm:$0xff]
        %v245 = vld [vmem:[%s168 + $0x121] sm:$0xff]
        %v246 = vld [vmem:[%s168 + $0x129] sm:$0xff]
        %v247 = vld [vmem:[%s168 + $0x131] sm:$0xff]
        %v248 = vld [vmem:[%s168 + $0x139] sm:$0x7f]
        %289 = vrot.lane.b32.xlu0 %v209, 5
        %v290 = vpop.permute.xlu0 %289
        %291 = vrot.lane.b32.xlu0 %v210, 5
        %v292 = vpop.permute.xlu0 %291
        %293 = vrot.lane.b32.xlu0 %v211, 5
        %v294 = vpop.permute.xlu0 %293
        %295 = vrot.lane.b32.xlu0 %v212, 5
        %v296 = vpop.permute.xlu0 %295
        %297 = vrot.lane.b32.xlu0 %v213, 5
        %v298 = vpop.permute.xlu0 %297
        %299 = vrot.lane.b32.xlu0 %v214, 5
        %v300 = vpop.permute.xlu0 %299
        %301 = vrot.lane.b32.xlu0 %v215, 5
        %v302 = vpop.permute.xlu0 %301
        %303 = vrot.lane.b32.xlu0 %v216, 5
        %v304 = vpop.permute.xlu0 %303
        %305 = vrot.lane.b32.xlu0 %v217, 5
        %v306 = vpop.permute.xlu0 %305
        %307 = vrot.lane.b32.xlu0 %v218, 5
        %v308 = vpop.permute.xlu0 %307
        %309 = vrot.lane.b32.xlu0 %v219, 5
        %v310 = vpop.permute.xlu0 %309
        %311 = vrot.lane.b32.xlu0 %v220, 5
        %v312 = vpop.permute.xlu0 %311
        %313 = vrot.lane.b32.xlu0 %v221, 5
        %v314 = vpop.permute.xlu0 %313
        %315 = vrot.lane.b32.xlu0 %v222, 5
        %v316 = vpop.permute.xlu0 %315
        %317 = vrot.lane.b32.xlu0 %v223, 5
        %v318 = vpop.permute.xlu0 %317
        %319 = vrot.lane.b32.xlu0 %v224, 5
        %v320 = vpop.permute.xlu0 %319
        %321 = vrot.lane.b32.xlu0 %v225, 5
        %v322 = vpop.permute.xlu0 %321
        %323 = vrot.lane.b32.xlu0 %v226, 5
        %v324 = vpop.permute.xlu0 %323
        %325 = vrot.lane.b32.xlu0 %v227, 5
        %v326 = vpop.permute.xlu0 %325
        %327 = vrot.lane.b32.xlu0 %v228, 5
        %v328 = vpop.permute.xlu0 %327
        %329 = vrot.lane.b32.xlu0 %v229, 5
        %v330 = vpop.permute.xlu0 %329
        %331 = vrot.lane.b32.xlu0 %v230, 5
        %v332 = vpop.permute.xlu0 %331
        %333 = vrot.lane.b32.xlu0 %v231, 5
        %v334 = vpop.permute.xlu0 %333
        %335 = vrot.lane.b32.xlu0 %v232, 5
        %v336 = vpop.permute.xlu0 %335
        %337 = vrot.lane.b32.xlu0 %v233, 5
        %v338 = vpop.permute.xlu0 %337
        %339 = vrot.lane.b32.xlu0 %v234, 5
        %v340 = vpop.permute.xlu0 %339
        %341 = vrot.lane.b32.xlu0 %v235, 5
        %v342 = vpop.permute.xlu0 %341
        %343 = vrot.lane.b32.xlu0 %v236, 5
        %v344 = vpop.permute.xlu0 %343
        %345 = vrot.lane.b32.xlu0 %v237, 5
        %v346 = vpop.permute.xlu0 %345
        %347 = vrot.lane.b32.xlu0 %v238, 5
        %v348 = vpop.permute.xlu0 %347
        %349 = vrot.lane.b32.xlu0 %v239, 5
        %v350 = vpop.permute.xlu0 %349
        %351 = vrot.lane.b32.xlu0 %v240, 5
        %v352 = vpop.permute.xlu0 %351
        %353 = vrot.lane.b32.xlu0 %v241, 5
        %v354 = vpop.permute.xlu0 %353
        %355 = vrot.lane.b32.xlu0 %v242, 5
        %v356 = vpop.permute.xlu0 %355
        %357 = vrot.lane.b32.xlu0 %v243, 5
        %v358 = vpop.permute.xlu0 %357
        %359 = vrot.lane.b32.xlu0 %v244, 5
        %v360 = vpop.permute.xlu0 %359
        %361 = vrot.lane.b32.xlu0 %v245, 5
        %v362 = vpop.permute.xlu0 %361
        %363 = vrot.lane.b32.xlu0 %v246, 5
        %v364 = vpop.permute.xlu0 %363
        %365 = vrot.lane.b32.xlu0 %v247, 5
        %v366 = vpop.permute.xlu0 %365
        %367 = vrot.lane.b32.xlu0 %v248, 5
        %v368 = vpop.permute.xlu0 %367
        %vm409 = vcmask 39936
        %v410 = vsel %vm409, %v169, %v290
        %v411 = vsel %vm409, %v170, %v292
        %v412 = vsel %vm409, %v171, %v294
        %v413 = vsel %vm409, %v172, %v296
        %v414 = vsel %vm409, %v173, %v298
        %v415 = vsel %vm409, %v174, %v300
        %v416 = vsel %vm409, %v175, %v302
        %v417 = vsel %vm409, %v176, %v304
        %v418 = vsel %vm409, %v177, %v306
        %v419 = vsel %vm409, %v178, %v308
        %v420 = vsel %vm409, %v179, %v310
        %v421 = vsel %vm409, %v180, %v312
        %v422 = vsel %vm409, %v181, %v314
        %v423 = vsel %vm409, %v182, %v316
        %v424 = vsel %vm409, %v183, %v318
        %v425 = vsel %vm409, %v184, %v320
        %v426 = vsel %vm409, %v185, %v322
        %v427 = vsel %vm409, %v186, %v324
        %v428 = vsel %vm409, %v187, %v326
        %v429 = vsel %vm409, %v188, %v328
        %v430 = vsel %vm409, %v189, %v330
        %v431 = vsel %vm409, %v190, %v332
        %v432 = vsel %vm409, %v191, %v334
        %v433 = vsel %vm409, %v192, %v336
        %v434 = vsel %vm409, %v193, %v338
        %v435 = vsel %vm409, %v194, %v340
        %v436 = vsel %vm409, %v195, %v342
        %v437 = vsel %vm409, %v196, %v344
        %v438 = vsel %vm409, %v197, %v346
        %v439 = vsel %vm409, %v198, %v348
        %v440 = vsel %vm409, %v199, %v350
        %v441 = vsel %vm409, %v200, %v352
        %v442 = vsel %vm409, %v201, %v354
        %v443 = vsel %vm409, %v202, %v356
        %v444 = vsel %vm409, %v203, %v358
        %v445 = vsel %vm409, %v204, %v360
        %v446 = vsel %vm409, %v205, %v362
        %v447 = vsel %vm409, %v206, %v364
        %v448 = vsel %vm409, %v207, %v366
        %v449 = vsel %vm409, %v208, %v368
        %v450 = vld [vmem:[%s1] sm:$0xff]
        %v451 = vld [vmem:[%s1 + $0x8] sm:$0x3]
        %v452 = vld [vmem:[%s2] sm:$0x7]
        %v453 = vlaneseq
        %v454 = vshrl.u32 %v453, 7
        %v455 = vsub.s32 0, %v454
        %v456 = vrot.slane %v452, %v455
        %vm457 = vcmask 80896
        %v459 = vsel %vm457, %v410, 0
        %v462 = vsel %vm457, %v411, 0
        %v465 = vsel %vm457, %v412, 0
        %v468 = vsel %vm457, %v413, 0
        %v471 = vsel %vm457, %v414, 0
        %v474 = vsel %vm457, %v415, 0
        %v477 = vsel %vm457, %v416, 0
        %v480 = vsel %vm457, %v417, 0
        %v483 = vsel %vm457, %v418, 0
        %v486 = vsel %vm457, %v419, 0
        %v489 = vsel %vm457, %v420, 0
        %v492 = vsel %vm457, %v421, 0
        %v495 = vsel %vm457, %v422, 0
        %v498 = vsel %vm457, %v423, 0
        %v501 = vsel %vm457, %v424, 0
        %v504 = vsel %vm457, %v425, 0
        %v507 = vsel %vm457, %v426, 0
        %v510 = vsel %vm457, %v427, 0
        %v513 = vsel %vm457, %v428, 0
        %v516 = vsel %vm457, %v429, 0
        %v519 = vsel %vm457, %v430, 0
        %v522 = vsel %vm457, %v431, 0
        %v525 = vsel %vm457, %v432, 0
        %v528 = vsel %vm457, %v433, 0
        %v531 = vsel %vm457, %v434, 0
        %v534 = vsel %vm457, %v435, 0
        %v537 = vsel %vm457, %v436, 0
        %v540 = vsel %vm457, %v437, 0
        %v543 = vsel %vm457, %v438, 0
        %v546 = vsel %vm457, %v439, 0
        %v549 = vsel %vm457, %v440, 0
        %v552 = vsel %vm457, %v441, 0
        %v555 = vsel %vm457, %v442, 0
        %v558 = vsel %vm457, %v443, 0
        %v561 = vsel %vm457, %v444, 0
        %v564 = vsel %vm457, %v445, 0
        %v567 = vsel %vm457, %v446, 0
        %v570 = vsel %vm457, %v447, 0
        %v573 = vsel %vm457, %v448, 0
        %v576 = vsel %vm457, %v449, 0
        %vm578 = vcmask 1041408
        %v580 = vsel %vm578, %v451, 0
        %582 = vmatprep.subr.mxu0 0.0
        %583 = vmatpush1.msra.mxu0 0.0
        %584 = vmatprep.subr.mxu0 0.0
        %585 = vmatpush1.msra.mxu0 0.0
        %586 = vmatprep.subr.mxu0 0.0
        %587 = vmatpush1.msra.mxu0 0.0
        %588 = vmatprep.subr.mxu0 0.0
        %589 = vmatpush1.msra.mxu0 0.0
        %590 = vmatprep.subr.mxu0 0.0
        %591 = vmatpush1.msra.mxu0 0.0
        %592 = vmatprep.subr.mxu0 0.0
        %593 = vmatpush1.msra.mxu0 0.0
        %594 = vmatprep.subr.mxu0 0.0
        %595 = vmatpush1.msra.mxu0 0.0
        %596 = vmatprep.subr.mxu0 0.0
        %597 = vmatpush1.msra.mxu0 0.0
        %598 = vmatprep.subr.mxu0 0.0
        %599 = vmatpush1.msra.mxu0 0.0
        %600 = vmatprep.subr.mxu0 0.0
        %601 = vmatpush1.msra.mxu0 0.0
        %602 = vmatprep.subr.mxu0 0.0
        %603 = vmatpush1.msra.mxu0 0.0
        %604 = vmatprep.subr.mxu0 0.0
        %605 = vmatpush1.msra.mxu0 0.0
        %606 = vmatprep.subr.mxu0 0.0
        %607 = vmatpush1.msra.mxu0 0.0
        %608 = vmatprep.subr.mxu0 0.0
        %609 = vmatpush1.msra.mxu0 0.0
        %610 = vmatprep.subr.mxu0 0.0
        %611 = vmatpush1.msra.mxu0 %v580
        %612 = vmatprep.subr.mxu0 0.0
        %613 = vmatpush1.msra.mxu0 %v450
        %614 = vmatprep.subr.mxu0 0.0
        %615 = vmatpush2.msra.mxu0 0.0
        %616 = vmatprep.subr.mxu0 0.0
        %617 = vmatpush2.msra.mxu0 0.0
        %618 = vmatprep.subr.mxu0 0.0
        %619 = vmatpush2.msra.mxu0 0.0
        %620 = vmatprep.subr.mxu0 0.0
        %621 = vmatpush2.msra.mxu0 0.0
        %622 = vmatprep.subr.mxu0 0.0
        %623 = vmatpush2.msra.mxu0 0.0
        %624 = vmatprep.subr.mxu0 0.0
        %625 = vmatpush2.msra.mxu0 0.0
        %626 = vmatprep.subr.mxu0 0.0
        %627 = vmatpush2.msra.mxu0 0.0
        %628 = vmatprep.subr.mxu0 0.0
        %629 = vmatpush2.msra.mxu0 0.0
        %630 = vmatprep.subr.mxu0 0.0
        %631 = vmatpush2.msra.mxu0 0.0
        %632 = vmatprep.subr.mxu0 0.0
        %633 = vmatpush2.msra.mxu0 0.0
        %634 = vmatprep.subr.mxu0 0.0
        %635 = vmatpush2.msra.mxu0 0.0
        %636 = vmatprep.subr.mxu0 0.0
        %637 = vmatpush2.msra.mxu0 0.0
        %638 = vmatprep.subr.mxu0 0.0
        %639 = vmatpush2.msra.mxu0 0.0
        %640 = vmatprep.subr.mxu0 0.0
        %641 = vmatpush2.msra.mxu0 0.0
        %642 = vmatprep.subr.mxu0 0.0
        %643 = vmatpush2.msra.mxu0 0.0
        %644 = vmatprep.subr.mxu0 0.0
        %645 = vmatpush2.msra.mxu0 0.0
        %646 = vmatprep.mubr.f32.mxu0 0.0
        %647 = vmatmul.mubr.f32.gmra.mxu0 %v459
        %v648 = vpop.f32.mrf.mxu0
        %v649 = vadd.f32 %v456, %v648
        %v650 = vpop.f32.mrf.mxu0
        %651 = vmatprep.mubr.f32.mxu0 0.0
        %652 = vmatmul.mubr.f32.gmra.mxu0 %v462
        %v653 = vpop.f32.mrf.mxu0
        %v654 = vadd.f32 %v456, %v653
        %v655 = vpop.f32.mrf.mxu0
        %656 = vmatprep.mubr.f32.mxu0 0.0
        %657 = vmatmul.mubr.f32.gmra.mxu0 %v465
        %v658 = vpop.f32.mrf.mxu0
        %v659 = vadd.f32 %v456, %v658
        %v660 = vpop.f32.mrf.mxu0
        %661 = vmatprep.mubr.f32.mxu0 0.0
        %662 = vmatmul.mubr.f32.gmra.mxu0 %v468
        %v663 = vpop.f32.mrf.mxu0
        %v664 = vadd.f32 %v456, %v663
        %v665 = vpop.f32.mrf.mxu0
        %666 = vmatprep.mubr.f32.mxu0 0.0
        %667 = vmatmul.mubr.f32.gmra.mxu0 %v471
        %v668 = vpop.f32.mrf.mxu0
        %v669 = vadd.f32 %v456, %v668
        %v670 = vpop.f32.mrf.mxu0
        %671 = vmatprep.mubr.f32.mxu0 0.0
        %672 = vmatmul.mubr.f32.gmra.mxu0 %v474
        %v673 = vpop.f32.mrf.mxu0
        %v674 = vadd.f32 %v456, %v673
        %v675 = vpop.f32.mrf.mxu0
        %676 = vmatprep.mubr.f32.mxu0 0.0
        %677 = vmatmul.mubr.f32.gmra.mxu0 %v477
        %v678 = vpop.f32.mrf.mxu0
        %v679 = vadd.f32 %v456, %v678
        %v680 = vpop.f32.mrf.mxu0
        %681 = vmatprep.mubr.f32.mxu0 0.0
        %682 = vmatmul.mubr.f32.gmra.mxu0 %v480
        %v683 = vpop.f32.mrf.mxu0
        %v684 = vadd.f32 %v456, %v683
        %v685 = vpop.f32.mrf.mxu0
        %686 = vmatprep.mubr.f32.mxu0 0.0
        %687 = vmatmul.mubr.f32.gmra.mxu0 %v483
        %v688 = vpop.f32.mrf.mxu0
        %v689 = vadd.f32 %v456, %v688
        %v690 = vpop.f32.mrf.mxu0
        %691 = vmatprep.mubr.f32.mxu0 0.0
        %692 = vmatmul.mubr.f32.gmra.mxu0 %v486
        %v693 = vpop.f32.mrf.mxu0
        %v694 = vadd.f32 %v456, %v693
        %v695 = vpop.f32.mrf.mxu0
        %696 = vmatprep.mubr.f32.mxu0 0.0
        %697 = vmatmul.mubr.f32.gmra.mxu0 %v489
        %v698 = vpop.f32.mrf.mxu0
        %v699 = vadd.f32 %v456, %v698
        %v700 = vpop.f32.mrf.mxu0
        %701 = vmatprep.mubr.f32.mxu0 0.0
        %702 = vmatmul.mubr.f32.gmra.mxu0 %v492
        %v703 = vpop.f32.mrf.mxu0
        %v704 = vadd.f32 %v456, %v703
        %v705 = vpop.f32.mrf.mxu0
        %706 = vmatprep.mubr.f32.mxu0 0.0
        %707 = vmatmul.mubr.f32.gmra.mxu0 %v495
        %v708 = vpop.f32.mrf.mxu0
        %v709 = vadd.f32 %v456, %v708
        %v710 = vpop.f32.mrf.mxu0
        %711 = vmatprep.mubr.f32.mxu0 0.0
        %712 = vmatmul.mubr.f32.gmra.mxu0 %v498
        %v713 = vpop.f32.mrf.mxu0
        %v714 = vadd.f32 %v456, %v713
        %v715 = vpop.f32.mrf.mxu0
        %716 = vmatprep.mubr.f32.mxu0 0.0
        %717 = vmatmul.mubr.f32.gmra.mxu0 %v501
        %v718 = vpop.f32.mrf.mxu0
        %v719 = vadd.f32 %v456, %v718
        %v720 = vpop.f32.mrf.mxu0
        %721 = vmatprep.mubr.f32.mxu0 0.0
        %722 = vmatmul.mubr.f32.gmra.mxu0 %v504
        %v723 = vpop.f32.mrf.mxu0
        %v724 = vadd.f32 %v456, %v723
        %v725 = vpop.f32.mrf.mxu0
        %726 = vmatprep.mubr.f32.mxu0 0.0
        %727 = vmatmul.mubr.f32.gmra.mxu0 %v507
        %v728 = vpop.f32.mrf.mxu0
        %v729 = vadd.f32 %v456, %v728
        %v730 = vpop.f32.mrf.mxu0
        %731 = vmatprep.mubr.f32.mxu0 0.0
        %732 = vmatmul.mubr.f32.gmra.mxu0 %v510
        %v733 = vpop.f32.mrf.mxu0
        %v734 = vadd.f32 %v456, %v733
        %v735 = vpop.f32.mrf.mxu0
        %736 = vmatprep.mubr.f32.mxu0 0.0
        %737 = vmatmul.mubr.f32.gmra.mxu0 %v513
        %v738 = vpop.f32.mrf.mxu0
        %v739 = vadd.f32 %v456, %v738
        %v740 = vpop.f32.mrf.mxu0
        %741 = vmatprep.mubr.f32.mxu0 0.0
        %742 = vmatmul.mubr.f32.gmra.mxu0 %v516
        %v743 = vpop.f32.mrf.mxu0
        %v744 = vadd.f32 %v456, %v743
        %v745 = vpop.f32.mrf.mxu0
        %746 = vmatprep.mubr.f32.mxu0 0.0
        %747 = vmatmul.mubr.f32.gmra.mxu0 %v519
        %v748 = vpop.f32.mrf.mxu0
        %v749 = vadd.f32 %v456, %v748
        %v750 = vpop.f32.mrf.mxu0
        %751 = vmatprep.mubr.f32.mxu0 0.0
        %752 = vmatmul.mubr.f32.gmra.mxu0 %v522
        %v753 = vpop.f32.mrf.mxu0
        %v754 = vadd.f32 %v456, %v753
        %v755 = vpop.f32.mrf.mxu0
        %756 = vmatprep.mubr.f32.mxu0 0.0
        %757 = vmatmul.mubr.f32.gmra.mxu0 %v525
        %v758 = vpop.f32.mrf.mxu0
        %v759 = vadd.f32 %v456, %v758
        %v760 = vpop.f32.mrf.mxu0
        %761 = vmatprep.mubr.f32.mxu0 0.0
        %762 = vmatmul.mubr.f32.gmra.mxu0 %v528
        %v763 = vpop.f32.mrf.mxu0
        %v764 = vadd.f32 %v456, %v763
        %v765 = vpop.f32.mrf.mxu0
        %766 = vmatprep.mubr.f32.mxu0 0.0
        %767 = vmatmul.mubr.f32.gmra.mxu0 %v531
        %v768 = vpop.f32.mrf.mxu0
        %v769 = vadd.f32 %v456, %v768
        %v770 = vpop.f32.mrf.mxu0
        %771 = vmatprep.mubr.f32.mxu0 0.0
        %772 = vmatmul.mubr.f32.gmra.mxu0 %v534
        %v773 = vpop.f32.mrf.mxu0
        %v774 = vadd.f32 %v456, %v773
        %v775 = vpop.f32.mrf.mxu0
        %776 = vmatprep.mubr.f32.mxu0 0.0
        %777 = vmatmul.mubr.f32.gmra.mxu0 %v537
        %v778 = vpop.f32.mrf.mxu0
        %v779 = vadd.f32 %v456, %v778
        %v780 = vpop.f32.mrf.mxu0
        %781 = vmatprep.mubr.f32.mxu0 0.0
        %782 = vmatmul.mubr.f32.gmra.mxu0 %v540
        %v783 = vpop.f32.mrf.mxu0
        %v784 = vadd.f32 %v456, %v783
        %v785 = vpop.f32.mrf.mxu0
        %786 = vmatprep.mubr.f32.mxu0 0.0
        %787 = vmatmul.mubr.f32.gmra.mxu0 %v543
        %v788 = vpop.f32.mrf.mxu0
        %v789 = vadd.f32 %v456, %v788
        %v790 = vpop.f32.mrf.mxu0
        %791 = vmatprep.mubr.f32.mxu0 0.0
        %792 = vmatmul.mubr.f32.gmra.mxu0 %v546
        %v793 = vpop.f32.mrf.mxu0
        %v794 = vadd.f32 %v456, %v793
        %v795 = vpop.f32.mrf.mxu0
        %796 = vmatprep.mubr.f32.mxu0 0.0
        %797 = vmatmul.mubr.f32.gmra.mxu0 %v549
        %v798 = vpop.f32.mrf.mxu0
        %v799 = vadd.f32 %v456, %v798
        %v800 = vpop.f32.mrf.mxu0
        %801 = vmatprep.mubr.f32.mxu0 0.0
        %802 = vmatmul.mubr.f32.gmra.mxu0 %v552
        %v803 = vpop.f32.mrf.mxu0
        %v804 = vadd.f32 %v456, %v803
        %v805 = vpop.f32.mrf.mxu0
        %806 = vmatprep.mubr.f32.mxu0 0.0
        %807 = vmatmul.mubr.f32.gmra.mxu0 %v555
        %v808 = vpop.f32.mrf.mxu0
        %v809 = vadd.f32 %v456, %v808
        %v810 = vpop.f32.mrf.mxu0
        %811 = vmatprep.mubr.f32.mxu0 0.0
        %812 = vmatmul.mubr.f32.gmra.mxu0 %v558
        %v813 = vpop.f32.mrf.mxu0
        %v814 = vadd.f32 %v456, %v813
        %v815 = vpop.f32.mrf.mxu0
        %816 = vmatprep.mubr.f32.mxu0 0.0
        %817 = vmatmul.mubr.f32.gmra.mxu0 %v561
        %v818 = vpop.f32.mrf.mxu0
        %v819 = vadd.f32 %v456, %v818
        %v820 = vpop.f32.mrf.mxu0
        %821 = vmatprep.mubr.f32.mxu0 0.0
        %822 = vmatmul.mubr.f32.gmra.mxu0 %v564
        %v823 = vpop.f32.mrf.mxu0
        %v824 = vadd.f32 %v456, %v823
        %v825 = vpop.f32.mrf.mxu0
        %826 = vmatprep.mubr.f32.mxu0 0.0
        %827 = vmatmul.mubr.f32.gmra.mxu0 %v567
        %v828 = vpop.f32.mrf.mxu0
        %v829 = vadd.f32 %v456, %v828
        %v830 = vpop.f32.mrf.mxu0
        %831 = vmatprep.mubr.f32.mxu0 0.0
        %832 = vmatmul.mubr.f32.gmra.mxu0 %v570
        %v833 = vpop.f32.mrf.mxu0
        %v834 = vadd.f32 %v456, %v833
        %v835 = vpop.f32.mrf.mxu0
        %836 = vmatprep.mubr.f32.mxu0 0.0
        %837 = vmatmul.mubr.f32.gmra.mxu0 %v573
        %v838 = vpop.f32.mrf.mxu0
        %v839 = vadd.f32 %v456, %v838
        %v840 = vpop.f32.mrf.mxu0
        %841 = vmatprep.mubr.f32.mxu0 0.0
        %842 = vmatmul.mubr.f32.gmra.mxu0 %v576
        %v843 = vpop.f32.mrf.mxu0
        %v844 = vadd.f32 %v456, %v843
        %v845 = vpop.f32.mrf.mxu0
        %846 = vdwg.mxu0
        %vm847 = vcmask 261120
        %v848 = vsel %vm847, %v649, 0.0
        %849 = vadd.xlane.f32.xlu0 %v848
        %v850 = vpop.xlane.xlu0 %849
        %v851 = vsel %vm847, %v654, 0.0
        %852 = vadd.xlane.f32.xlu0 %v851
        %v853 = vpop.xlane.xlu0 %852
        %v854 = vsel %vm847, %v659, 0.0
        %855 = vadd.xlane.f32.xlu0 %v854
        %v856 = vpop.xlane.xlu0 %855
        %v857 = vsel %vm847, %v664, 0.0
        %858 = vadd.xlane.f32.xlu0 %v857
        %v859 = vpop.xlane.xlu0 %858
        %v860 = vsel %vm847, %v669, 0.0
        %861 = vadd.xlane.f32.xlu0 %v860
        %v862 = vpop.xlane.xlu0 %861
        %v863 = vsel %vm847, %v674, 0.0
        %864 = vadd.xlane.f32.xlu0 %v863
        %v865 = vpop.xlane.xlu0 %864
        %v866 = vsel %vm847, %v679, 0.0
        %867 = vadd.xlane.f32.xlu0 %v866
        %v868 = vpop.xlane.xlu0 %867
        %v869 = vsel %vm847, %v684, 0.0
        %870 = vadd.xlane.f32.xlu0 %v869
        %v871 = vpop.xlane.xlu0 %870
        %v872 = vsel %vm847, %v689, 0.0
        %873 = vadd.xlane.f32.xlu0 %v872
        %v874 = vpop.xlane.xlu0 %873
        %v875 = vsel %vm847, %v694, 0.0
        %876 = vadd.xlane.f32.xlu0 %v875
        %v877 = vpop.xlane.xlu0 %876
        %v878 = vsel %vm847, %v699, 0.0
        %879 = vadd.xlane.f32.xlu0 %v878
        %v880 = vpop.xlane.xlu0 %879
        %v881 = vsel %vm847, %v704, 0.0
        %882 = vadd.xlane.f32.xlu0 %v881
        %v883 = vpop.xlane.xlu0 %882
        %v884 = vsel %vm847, %v709, 0.0
        %885 = vadd.xlane.f32.xlu0 %v884
        %v886 = vpop.xlane.xlu0 %885
        %v887 = vsel %vm847, %v714, 0.0
        %888 = vadd.xlane.f32.xlu0 %v887
        %v889 = vpop.xlane.xlu0 %888
        %v890 = vsel %vm847, %v719, 0.0
        %891 = vadd.xlane.f32.xlu0 %v890
        %v892 = vpop.xlane.xlu0 %891
        %v893 = vsel %vm847, %v724, 0.0
        %894 = vadd.xlane.f32.xlu0 %v893
        %v895 = vpop.xlane.xlu0 %894
        %v896 = vsel %vm847, %v729, 0.0
        %897 = vadd.xlane.f32.xlu0 %v896
        %v898 = vpop.xlane.xlu0 %897
        %v899 = vsel %vm847, %v734, 0.0
        %900 = vadd.xlane.f32.xlu0 %v899
        %v901 = vpop.xlane.xlu0 %900
        %v902 = vsel %vm847, %v739, 0.0
        %903 = vadd.xlane.f32.xlu0 %v902
        %v904 = vpop.xlane.xlu0 %903
        %v905 = vsel %vm847, %v744, 0.0
        %906 = vadd.xlane.f32.xlu0 %v905
        %v907 = vpop.xlane.xlu0 %906
        %v908 = vsel %vm847, %v749, 0.0
        %909 = vadd.xlane.f32.xlu0 %v908
        %v910 = vpop.xlane.xlu0 %909
        %v911 = vsel %vm847, %v754, 0.0
        %912 = vadd.xlane.f32.xlu0 %v911
        %v913 = vpop.xlane.xlu0 %912
        %v914 = vsel %vm847, %v759, 0.0
        %915 = vadd.xlane.f32.xlu0 %v914
        %v916 = vpop.xlane.xlu0 %915
        %v917 = vsel %vm847, %v764, 0.0
        %918 = vadd.xlane.f32.xlu0 %v917
        %v919 = vpop.xlane.xlu0 %918
        %v920 = vsel %vm847, %v769, 0.0
        %921 = vadd.xlane.f32.xlu0 %v920
        %v922 = vpop.xlane.xlu0 %921
        %v923 = vsel %vm847, %v774, 0.0
        %924 = vadd.xlane.f32.xlu0 %v923
        %v925 = vpop.xlane.xlu0 %924
        %v926 = vsel %vm847, %v779, 0.0
        %927 = vadd.xlane.f32.xlu0 %v926
        %v928 = vpop.xlane.xlu0 %927
        %v929 = vsel %vm847, %v784, 0.0
        %930 = vadd.xlane.f32.xlu0 %v929
        %v931 = vpop.xlane.xlu0 %930
        %v932 = vsel %vm847, %v789, 0.0
        %933 = vadd.xlane.f32.xlu0 %v932
        %v934 = vpop.xlane.xlu0 %933
        %v935 = vsel %vm847, %v794, 0.0
        %936 = vadd.xlane.f32.xlu0 %v935
        %v937 = vpop.xlane.xlu0 %936
        %v938 = vsel %vm847, %v799, 0.0
        %939 = vadd.xlane.f32.xlu0 %v938
        %v940 = vpop.xlane.xlu0 %939
        %v941 = vsel %vm847, %v804, 0.0
        %942 = vadd.xlane.f32.xlu0 %v941
        %v943 = vpop.xlane.xlu0 %942
        %v944 = vsel %vm847, %v809, 0.0
        %945 = vadd.xlane.f32.xlu0 %v944
        %v946 = vpop.xlane.xlu0 %945
        %v947 = vsel %vm847, %v814, 0.0
        %948 = vadd.xlane.f32.xlu0 %v947
        %v949 = vpop.xlane.xlu0 %948
        %v950 = vsel %vm847, %v819, 0.0
        %951 = vadd.xlane.f32.xlu0 %v950
        %v952 = vpop.xlane.xlu0 %951
        %v953 = vsel %vm847, %v824, 0.0
        %954 = vadd.xlane.f32.xlu0 %v953
        %v955 = vpop.xlane.xlu0 %954
        %v956 = vsel %vm847, %v829, 0.0
        %957 = vadd.xlane.f32.xlu0 %v956
        %v958 = vpop.xlane.xlu0 %957
        %v959 = vsel %vm847, %v834, 0.0
        %960 = vadd.xlane.f32.xlu0 %v959
        %v961 = vpop.xlane.xlu0 %960
        %v962 = vsel %vm847, %v839, 0.0
        %963 = vadd.xlane.f32.xlu0 %v962
        %v964 = vpop.xlane.xlu0 %963
        %vm965 = vcmask 260096
        %v966 = vsel %vm965, %v844, 0.0
        %967 = vadd.xlane.f32.xlu0 %v966
        %v968 = vpop.xlane.xlu0 %967
        %v969 = vrcp.pop 32.0
        %v970 = vmul.f32 %v850, %v969
        %v971 = vmul.f32 %v853, %v969
        %v972 = vmul.f32 %v856, %v969
        %v973 = vmul.f32 %v859, %v969
        %v974 = vmul.f32 %v862, %v969
        %v975 = vmul.f32 %v865, %v969
        %v976 = vmul.f32 %v868, %v969
        %v977 = vmul.f32 %v871, %v969
        %v978 = vmul.f32 %v874, %v969
        %v979 = vmul.f32 %v877, %v969
        %v980 = vmul.f32 %v880, %v969
        %v981 = vmul.f32 %v883, %v969
        %v982 = vmul.f32 %v886, %v969
        %v983 = vmul.f32 %v889, %v969
        %v984 = vmul.f32 %v892, %v969
        %v985 = vmul.f32 %v895, %v969
        %v986 = vmul.f32 %v898, %v969
        %v987 = vmul.f32 %v901, %v969
        %v988 = vmul.f32 %v904, %v969
        %v989 = vmul.f32 %v907, %v969
        %v990 = vmul.f32 %v910, %v969
        %v991 = vmul.f32 %v913, %v969
        %v992 = vmul.f32 %v916, %v969
        %v993 = vmul.f32 %v919, %v969
        %v994 = vmul.f32 %v922, %v969
        %v995 = vmul.f32 %v925, %v969
        %v996 = vmul.f32 %v928, %v969
        %v997 = vmul.f32 %v931, %v969
        %v998 = vmul.f32 %v934, %v969
        %v999 = vmul.f32 %v937, %v969
        %v1000 = vmul.f32 %v940, %v969
        %v1001 = vmul.f32 %v943, %v969
        %v1002 = vmul.f32 %v946, %v969
        %v1003 = vmul.f32 %v949, %v969
        %v1004 = vmul.f32 %v952, %v969
        %v1005 = vmul.f32 %v955, %v969
        %v1006 = vmul.f32 %v958, %v969
        %v1007 = vmul.f32 %v961, %v969
        %v1008 = vmul.f32 %v964, %v969
        %v1009 = vmul.f32 %v968, %v969
        %v1010 = vsub.f32 %v649, %v970
        %v1011 = vsub.f32 %v654, %v971
        %v1012 = vsub.f32 %v659, %v972
        %v1013 = vsub.f32 %v664, %v973
        %v1014 = vsub.f32 %v669, %v974
        %v1015 = vsub.f32 %v674, %v975
        %v1016 = vsub.f32 %v679, %v976
        %v1017 = vsub.f32 %v684, %v977
        %v1018 = vsub.f32 %v689, %v978
        %v1019 = vsub.f32 %v694, %v979
        %v1020 = vsub.f32 %v699, %v980
        %v1021 = vsub.f32 %v704, %v981
        %v1022 = vsub.f32 %v709, %v982
        %v1023 = vsub.f32 %v714, %v983
        %v1024 = vsub.f32 %v719, %v984
        %v1025 = vsub.f32 %v724, %v985
        %v1026 = vsub.f32 %v729, %v986
        %v1027 = vsub.f32 %v734, %v987
        %v1028 = vsub.f32 %v739, %v988
        %v1029 = vsub.f32 %v744, %v989
        %v1030 = vsub.f32 %v749, %v990
        %v1031 = vsub.f32 %v754, %v991
        %v1032 = vsub.f32 %v759, %v992
        %v1033 = vsub.f32 %v764, %v993
        %v1034 = vsub.f32 %v769, %v994
        %v1035 = vsub.f32 %v774, %v995
        %v1036 = vsub.f32 %v779, %v996
        %v1037 = vsub.f32 %v784, %v997
        %v1038 = vsub.f32 %v789, %v998
        %v1039 = vsub.f32 %v794, %v999
        %v1040 = vsub.f32 %v799, %v1000
        %v1041 = vsub.f32 %v804, %v1001
        %v1042 = vsub.f32 %v809, %v1002
        %v1043 = vsub.f32 %v814, %v1003
        %v1044 = vsub.f32 %v819, %v1004
        %v1045 = vsub.f32 %v824, %v1005
        %v1046 = vsub.f32 %v829, %v1006
        %v1047 = vsub.f32 %v834, %v1007
        %v1048 = vsub.f32 %v839, %v1008
        %v1049 = vsub.f32 %v844, %v1009
        %v1050 = vmul.f32 %v1010, %v1010
        %v1051 = vmul.f32 %v1011, %v1011
        %v1052 = vmul.f32 %v1012, %v1012
        %v1053 = vmul.f32 %v1013, %v1013
        %v1054 = vmul.f32 %v1014, %v1014
        %v1055 = vmul.f32 %v1015, %v1015
        %v1056 = vmul.f32 %v1016, %v1016
        %v1057 = vmul.f32 %v1017, %v1017
        %v1058 = vmul.f32 %v1018, %v1018
        %v1059 = vmul.f32 %v1019, %v1019
        %v1060 = vmul.f32 %v1020, %v1020
        %v1061 = vmul.f32 %v1021, %v1021
        %v1062 = vmul.f32 %v1022, %v1022
        %v1063 = vmul.f32 %v1023, %v1023
        %v1064 = vmul.f32 %v1024, %v1024
        %v1065 = vmul.f32 %v1025, %v1025
        %v1066 = vmul.f32 %v1026, %v1026
        %v1067 = vmul.f32 %v1027, %v1027
        %v1068 = vmul.f32 %v1028, %v1028
        %v1069 = vmul.f32 %v1029, %v1029
        %v1070 = vmul.f32 %v1030, %v1030
        %v1071 = vmul.f32 %v1031, %v1031
        %v1072 = vmul.f32 %v1032, %v1032
        %v1073 = vmul.f32 %v1033, %v1033
        %v1074 = vmul.f32 %v1034, %v1034
        %v1075 = vmul.f32 %v1035, %v1035
        %v1076 = vmul.f32 %v1036, %v1036
        %v1077 = vmul.f32 %v1037, %v1037
        %v1078 = vmul.f32 %v1038, %v1038
        %v1079 = vmul.f32 %v1039, %v1039
        %v1080 = vmul.f32 %v1040, %v1040
        %v1081 = vmul.f32 %v1041, %v1041
        %v1082 = vmul.f32 %v1042, %v1042
        %v1083 = vmul.f32 %v1043, %v1043
        %v1084 = vmul.f32 %v1044, %v1044
        %v1085 = vmul.f32 %v1045, %v1045
        %v1086 = vmul.f32 %v1046, %v1046
        %v1087 = vmul.f32 %v1047, %v1047
        %v1088 = vmul.f32 %v1048, %v1048
        %v1089 = vmul.f32 %v1049, %v1049
        %v1090 = vsel %vm847, %v1050, 0.0
        %1091 = vadd.xlane.f32.xlu0 %v1090
        %v1092 = vpop.xlane.xlu0 %1091
        %v1093 = vsel %vm847, %v1051, 0.0
        %1094 = vadd.xlane.f32.xlu0 %v1093
        %v1095 = vpop.xlane.xlu0 %1094
        %v1096 = vsel %vm847, %v1052, 0.0
        %1097 = vadd.xlane.f32.xlu0 %v1096
        %v1098 = vpop.xlane.xlu0 %1097
        %v1099 = vsel %vm847, %v1053, 0.0
        %1100 = vadd.xlane.f32.xlu0 %v1099
        %v1101 = vpop.xlane.xlu0 %1100
        %v1102 = vsel %vm847, %v1054, 0.0
        %1103 = vadd.xlane.f32.xlu0 %v1102
        %v1104 = vpop.xlane.xlu0 %1103
        %v1105 = vsel %vm847, %v1055, 0.0
        %1106 = vadd.xlane.f32.xlu0 %v1105
        %v1107 = vpop.xlane.xlu0 %1106
        %v1108 = vsel %vm847, %v1056, 0.0
        %1109 = vadd.xlane.f32.xlu0 %v1108
        %v1110 = vpop.xlane.xlu0 %1109
        %v1111 = vsel %vm847, %v1057, 0.0
        %1112 = vadd.xlane.f32.xlu0 %v1111
        %v1113 = vpop.xlane.xlu0 %1112
        %v1114 = vsel %vm847, %v1058, 0.0
        %1115 = vadd.xlane.f32.xlu0 %v1114
        %v1116 = vpop.xlane.xlu0 %1115
        %v1117 = vsel %vm847, %v1059, 0.0
        %1118 = vadd.xlane.f32.xlu0 %v1117
        %v1119 = vpop.xlane.xlu0 %1118
        %v1120 = vsel %vm847, %v1060, 0.0
        %1121 = vadd.xlane.f32.xlu0 %v1120
        %v1122 = vpop.xlane.xlu0 %1121
        %v1123 = vsel %vm847, %v1061, 0.0
        %1124 = vadd.xlane.f32.xlu0 %v1123
        %v1125 = vpop.xlane.xlu0 %1124
        %v1126 = vsel %vm847, %v1062, 0.0
        %1127 = vadd.xlane.f32.xlu0 %v1126
        %v1128 = vpop.xlane.xlu0 %1127
        %v1129 = vsel %vm847, %v1063, 0.0
        %1130 = vadd.xlane.f32.xlu0 %v1129
        %v1131 = vpop.xlane.xlu0 %1130
        %v1132 = vsel %vm847, %v1064, 0.0
        %1133 = vadd.xlane.f32.xlu0 %v1132
        %v1134 = vpop.xlane.xlu0 %1133
        %v1135 = vsel %vm847, %v1065, 0.0
        %1136 = vadd.xlane.f32.xlu0 %v1135
        %v1137 = vpop.xlane.xlu0 %1136
        %v1138 = vsel %vm847, %v1066, 0.0
        %1139 = vadd.xlane.f32.xlu0 %v1138
        %v1140 = vpop.xlane.xlu0 %1139
        %v1141 = vsel %vm847, %v1067, 0.0
        %1142 = vadd.xlane.f32.xlu0 %v1141
        %v1143 = vpop.xlane.xlu0 %1142
        %v1144 = vsel %vm847, %v1068, 0.0
        %1145 = vadd.xlane.f32.xlu0 %v1144
        %v1146 = vpop.xlane.xlu0 %1145
        %v1147 = vsel %vm847, %v1069, 0.0
        %1148 = vadd.xlane.f32.xlu0 %v1147
        %v1149 = vpop.xlane.xlu0 %1148
        %v1150 = vsel %vm847, %v1070, 0.0
        %1151 = vadd.xlane.f32.xlu0 %v1150
        %v1152 = vpop.xlane.xlu0 %1151
        %v1153 = vsel %vm847, %v1071, 0.0
        %1154 = vadd.xlane.f32.xlu0 %v1153
        %v1155 = vpop.xlane.xlu0 %1154
        %v1156 = vsel %vm847, %v1072, 0.0
        %1157 = vadd.xlane.f32.xlu0 %v1156
        %v1158 = vpop.xlane.xlu0 %1157
        %v1159 = vsel %vm847, %v1073, 0.0
        %1160 = vadd.xlane.f32.xlu0 %v1159
        %v1161 = vpop.xlane.xlu0 %1160
        %v1162 = vsel %vm847, %v1074, 0.0
        %1163 = vadd.xlane.f32.xlu0 %v1162
        %v1164 = vpop.xlane.xlu0 %1163
        %v1165 = vsel %vm847, %v1075, 0.0
        %1166 = vadd.xlane.f32.xlu0 %v1165
        %v1167 = vpop.xlane.xlu0 %1166
        %v1168 = vsel %vm847, %v1076, 0.0
        %1169 = vadd.xlane.f32.xlu0 %v1168
        %v1170 = vpop.xlane.xlu0 %1169
        %v1171 = vsel %vm847, %v1077, 0.0
        %1172 = vadd.xlane.f32.xlu0 %v1171
        %v1173 = vpop.xlane.xlu0 %1172
        %v1174 = vsel %vm847, %v1078, 0.0
        %1175 = vadd.xlane.f32.xlu0 %v1174
        %v1176 = vpop.xlane.xlu0 %1175
        %v1177 = vsel %vm847, %v1079, 0.0
        %1178 = vadd.xlane.f32.xlu0 %v1177
        %v1179 = vpop.xlane.xlu0 %1178
        %v1180 = vsel %vm847, %v1080, 0.0
        %1181 = vadd.xlane.f32.xlu0 %v1180
        %v1182 = vpop.xlane.xlu0 %1181
        %v1183 = vsel %vm847, %v1081, 0.0
        %1184 = vadd.xlane.f32.xlu0 %v1183
        %v1185 = vpop.xlane.xlu0 %1184
        %v1186 = vsel %vm847, %v1082, 0.0
        %1187 = vadd.xlane.f32.xlu0 %v1186
        %v1188 = vpop.xlane.xlu0 %1187
        %v1189 = vsel %vm847, %v1083, 0.0
        %1190 = vadd.xlane.f32.xlu0 %v1189
        %v1191 = vpop.xlane.xlu0 %1190
        %v1192 = vsel %vm847, %v1084, 0.0
        %1193 = vadd.xlane.f32.xlu0 %v1192
        %v1194 = vpop.xlane.xlu0 %1193
        %v1195 = vsel %vm847, %v1085, 0.0
        %1196 = vadd.xlane.f32.xlu0 %v1195
        %v1197 = vpop.xlane.xlu0 %1196
        %v1198 = vsel %vm847, %v1086, 0.0
        %1199 = vadd.xlane.f32.xlu0 %v1198
        %v1200 = vpop.xlane.xlu0 %1199
        %v1201 = vsel %vm847, %v1087, 0.0
        %1202 = vadd.xlane.f32.xlu0 %v1201
        %v1203 = vpop.xlane.xlu0 %1202
        %v1204 = vsel %vm847, %v1088, 0.0
        %1205 = vadd.xlane.f32.xlu0 %v1204
        %v1206 = vpop.xlane.xlu0 %1205
        %v1207 = vsel %vm965, %v1089, 0.0
        %1208 = vadd.xlane.f32.xlu0 %v1207
        %v1209 = vpop.xlane.xlu0 %1208
        %v1210 = vmul.f32 %v1092, %v969
        %v1211 = vmul.f32 %v1095, %v969
        %v1212 = vmul.f32 %v1098, %v969
        %v1213 = vmul.f32 %v1101, %v969
        %v1214 = vmul.f32 %v1104, %v969
        %v1215 = vmul.f32 %v1107, %v969
        %v1216 = vmul.f32 %v1110, %v969
        %v1217 = vmul.f32 %v1113, %v969
        %v1218 = vmul.f32 %v1116, %v969
        %v1219 = vmul.f32 %v1119, %v969
        %v1220 = vmul.f32 %v1122, %v969
        %v1221 = vmul.f32 %v1125, %v969
        %v1222 = vmul.f32 %v1128, %v969
        %v1223 = vmul.f32 %v1131, %v969
        %v1224 = vmul.f32 %v1134, %v969
        %v1225 = vmul.f32 %v1137, %v969
        %v1226 = vmul.f32 %v1140, %v969
        %v1227 = vmul.f32 %v1143, %v969
        %v1228 = vmul.f32 %v1146, %v969
        %v1229 = vmul.f32 %v1149, %v969
        %v1230 = vmul.f32 %v1152, %v969
        %v1231 = vmul.f32 %v1155, %v969
        %v1232 = vmul.f32 %v1158, %v969
        %v1233 = vmul.f32 %v1161, %v969
        %v1234 = vmul.f32 %v1164, %v969
        %v1235 = vmul.f32 %v1167, %v969
        %v1236 = vmul.f32 %v1170, %v969
        %v1237 = vmul.f32 %v1173, %v969
        %v1238 = vmul.f32 %v1176, %v969
        %v1239 = vmul.f32 %v1179, %v969
        %v1240 = vmul.f32 %v1182, %v969
        %v1241 = vmul.f32 %v1185, %v969
        %v1242 = vmul.f32 %v1188, %v969
        %v1243 = vmul.f32 %v1191, %v969
        %v1244 = vmul.f32 %v1194, %v969
        %v1245 = vmul.f32 %v1197, %v969
        %v1246 = vmul.f32 %v1200, %v969
        %v1247 = vmul.f32 %v1203, %v969
        %v1248 = vmul.f32 %v1206, %v969
        %v1249 = vmul.f32 %v1209, %v969
        %v1250 = vadd.f32 %v1210, 1e-05
        %v1251 = vadd.f32 %v1211, 1e-05
        %v1252 = vadd.f32 %v1212, 1e-05
        %v1253 = vadd.f32 %v1213, 1e-05
        %v1254 = vadd.f32 %v1214, 1e-05
        %v1255 = vadd.f32 %v1215, 1e-05
        %v1256 = vadd.f32 %v1216, 1e-05
        %v1257 = vadd.f32 %v1217, 1e-05
        %v1258 = vadd.f32 %v1218, 1e-05
        %v1259 = vadd.f32 %v1219, 1e-05
        %v1260 = vadd.f32 %v1220, 1e-05
        %v1261 = vadd.f32 %v1221, 1e-05
        %v1262 = vadd.f32 %v1222, 1e-05
        %v1263 = vadd.f32 %v1223, 1e-05
        %v1264 = vadd.f32 %v1224, 1e-05
        %v1265 = vadd.f32 %v1225, 1e-05
        %v1266 = vadd.f32 %v1226, 1e-05
        %v1267 = vadd.f32 %v1227, 1e-05
        %v1268 = vadd.f32 %v1228, 1e-05
        %v1269 = vadd.f32 %v1229, 1e-05
        %v1270 = vadd.f32 %v1230, 1e-05
        %v1271 = vadd.f32 %v1231, 1e-05
        %v1272 = vadd.f32 %v1232, 1e-05
        %v1273 = vadd.f32 %v1233, 1e-05
        %v1274 = vadd.f32 %v1234, 1e-05
        %v1275 = vadd.f32 %v1235, 1e-05
        %v1276 = vadd.f32 %v1236, 1e-05
        %v1277 = vadd.f32 %v1237, 1e-05
        %v1278 = vadd.f32 %v1238, 1e-05
        %v1279 = vadd.f32 %v1239, 1e-05
        %v1280 = vadd.f32 %v1240, 1e-05
        %v1281 = vadd.f32 %v1241, 1e-05
        %v1282 = vadd.f32 %v1242, 1e-05
        %v1283 = vadd.f32 %v1243, 1e-05
        %v1284 = vadd.f32 %v1244, 1e-05
        %v1285 = vadd.f32 %v1245, 1e-05
        %v1286 = vadd.f32 %v1246, 1e-05
        %v1287 = vadd.f32 %v1247, 1e-05
        %v1288 = vadd.f32 %v1248, 1e-05
        %v1289 = vadd.f32 %v1249, 1e-05
        %v1290 = vrsqrt.pop %v1250
        %v1291 = vrsqrt.pop %v1251
        %v1292 = vrsqrt.pop %v1252
        %v1293 = vrsqrt.pop %v1253
        %v1294 = vrsqrt.pop %v1254
        %v1295 = vrsqrt.pop %v1255
        %v1296 = vrsqrt.pop %v1256
        %v1297 = vrsqrt.pop %v1257
        %v1298 = vrsqrt.pop %v1258
        %v1299 = vrsqrt.pop %v1259
        %v1300 = vrsqrt.pop %v1260
        %v1301 = vrsqrt.pop %v1261
        %v1302 = vrsqrt.pop %v1262
        %v1303 = vrsqrt.pop %v1263
        %v1304 = vrsqrt.pop %v1264
        %v1305 = vrsqrt.pop %v1265
        %v1306 = vrsqrt.pop %v1266
        %v1307 = vrsqrt.pop %v1267
        %v1308 = vrsqrt.pop %v1268
        %v1309 = vrsqrt.pop %v1269
        %v1310 = vrsqrt.pop %v1270
        %v1311 = vrsqrt.pop %v1271
        %v1312 = vrsqrt.pop %v1272
        %v1313 = vrsqrt.pop %v1273
        %v1314 = vrsqrt.pop %v1274
        %v1315 = vrsqrt.pop %v1275
        %v1316 = vrsqrt.pop %v1276
        %v1317 = vrsqrt.pop %v1277
        %v1318 = vrsqrt.pop %v1278
        %v1319 = vrsqrt.pop %v1279
        %v1320 = vrsqrt.pop %v1280
        %v1321 = vrsqrt.pop %v1281
        %v1322 = vrsqrt.pop %v1282
        %v1323 = vrsqrt.pop %v1283
        %v1324 = vrsqrt.pop %v1284
        %v1325 = vrsqrt.pop %v1285
        %v1326 = vrsqrt.pop %v1286
        %v1327 = vrsqrt.pop %v1287
        %v1328 = vrsqrt.pop %v1288
        %v1329 = vrsqrt.pop %v1289
        %v1330 = vmul.f32 %v1010, %v1290
        %v1331 = vmul.f32 %v1011, %v1291
        %v1332 = vmul.f32 %v1012, %v1292
        %v1333 = vmul.f32 %v1013, %v1293
        %v1334 = vmul.f32 %v1014, %v1294
        %v1335 = vmul.f32 %v1015, %v1295
        %v1336 = vmul.f32 %v1016, %v1296
        %v1337 = vmul.f32 %v1017, %v1297
        %v1338 = vmul.f32 %v1018, %v1298
        %v1339 = vmul.f32 %v1019, %v1299
        %v1340 = vmul.f32 %v1020, %v1300
        %v1341 = vmul.f32 %v1021, %v1301
        %v1342 = vmul.f32 %v1022, %v1302
        %v1343 = vmul.f32 %v1023, %v1303
        %v1344 = vmul.f32 %v1024, %v1304
        %v1345 = vmul.f32 %v1025, %v1305
        %v1346 = vmul.f32 %v1026, %v1306
        %v1347 = vmul.f32 %v1027, %v1307
        %v1348 = vmul.f32 %v1028, %v1308
        %v1349 = vmul.f32 %v1029, %v1309
        %v1350 = vmul.f32 %v1030, %v1310
        %v1351 = vmul.f32 %v1031, %v1311
        %v1352 = vmul.f32 %v1032, %v1312
        %v1353 = vmul.f32 %v1033, %v1313
        %v1354 = vmul.f32 %v1034, %v1314
        %v1355 = vmul.f32 %v1035, %v1315
        %v1356 = vmul.f32 %v1036, %v1316
        %v1357 = vmul.f32 %v1037, %v1317
        %v1358 = vmul.f32 %v1038, %v1318
        %v1359 = vmul.f32 %v1039, %v1319
        %v1360 = vmul.f32 %v1040, %v1320
        %v1361 = vmul.f32 %v1041, %v1321
        %v1362 = vmul.f32 %v1042, %v1322
        %v1363 = vmul.f32 %v1043, %v1323
        %v1364 = vmul.f32 %v1044, %v1324
        %v1365 = vmul.f32 %v1045, %v1325
        %v1366 = vmul.f32 %v1046, %v1326
        %v1367 = vmul.f32 %v1047, %v1327
        %v1368 = vmul.f32 %v1048, %v1328
        %v1369 = vmul.f32 %v1049, %v1329
        %v1370 = vlaneseq
        %v1371 = vshrl.u32 %v1370, 7
        %v1372 = vsub.s32 1, %v1371
        %v1373 = vrot.slane %v452, %v1372
        %v1374 = vmul.f32 %v1330, %v1373
        %v1375 = vmul.f32 %v1331, %v1373
        %v1376 = vmul.f32 %v1332, %v1373
        %v1377 = vmul.f32 %v1333, %v1373
        %v1378 = vmul.f32 %v1334, %v1373
        %v1379 = vmul.f32 %v1335, %v1373
        %v1380 = vmul.f32 %v1336, %v1373
        %v1381 = vmul.f32 %v1337, %v1373
        %v1382 = vmul.f32 %v1338, %v1373
        %v1383 = vmul.f32 %v1339, %v1373
        %v1384 = vmul.f32 %v1340, %v1373
        %v1385 = vmul.f32 %v1341, %v1373
        %v1386 = vmul.f32 %v1342, %v1373
        %v1387 = vmul.f32 %v1343, %v1373
        %v1388 = vmul.f32 %v1344, %v1373
        %v1389 = vmul.f32 %v1345, %v1373
        %v1390 = vmul.f32 %v1346, %v1373
        %v1391 = vmul.f32 %v1347, %v1373
        %v1392 = vmul.f32 %v1348, %v1373
        %v1393 = vmul.f32 %v1349, %v1373
        %v1394 = vmul.f32 %v1350, %v1373
        %v1395 = vmul.f32 %v1351, %v1373
        %v1396 = vmul.f32 %v1352, %v1373
        %v1397 = vmul.f32 %v1353, %v1373
        %v1398 = vmul.f32 %v1354, %v1373
        %v1399 = vmul.f32 %v1355, %v1373
        %v1400 = vmul.f32 %v1356, %v1373
        %v1401 = vmul.f32 %v1357, %v1373
        %v1402 = vmul.f32 %v1358, %v1373
        %v1403 = vmul.f32 %v1359, %v1373
        %v1404 = vmul.f32 %v1360, %v1373
        %v1405 = vmul.f32 %v1361, %v1373
        %v1406 = vmul.f32 %v1362, %v1373
        %v1407 = vmul.f32 %v1363, %v1373
        %v1408 = vmul.f32 %v1364, %v1373
        %v1409 = vmul.f32 %v1365, %v1373
        %v1410 = vmul.f32 %v1366, %v1373
        %v1411 = vmul.f32 %v1367, %v1373
        %v1412 = vmul.f32 %v1368, %v1373
        %v1413 = vmul.f32 %v1369, %v1373
        %v1414 = vlaneseq
        %v1415 = vshrl.u32 %v1414, 7
        %v1416 = vsub.s32 2, %v1415
        %v1417 = vrot.slane %v452, %v1416
        %v1418 = vadd.f32 %v1374, %v1417
        %v1419 = vadd.f32 %v1375, %v1417
        %v1420 = vadd.f32 %v1376, %v1417
        %v1421 = vadd.f32 %v1377, %v1417
        %v1422 = vadd.f32 %v1378, %v1417
        %v1423 = vadd.f32 %v1379, %v1417
        %v1424 = vadd.f32 %v1380, %v1417
        %v1425 = vadd.f32 %v1381, %v1417
        %v1426 = vadd.f32 %v1382, %v1417
        %v1427 = vadd.f32 %v1383, %v1417
        %v1428 = vadd.f32 %v1384, %v1417
        %v1429 = vadd.f32 %v1385, %v1417
        %v1430 = vadd.f32 %v1386, %v1417
        %v1431 = vadd.f32 %v1387, %v1417
        %v1432 = vadd.f32 %v1388, %v1417
        %v1433 = vadd.f32 %v1389, %v1417
        %v1434 = vadd.f32 %v1390, %v1417
        %v1435 = vadd.f32 %v1391, %v1417
        %v1436 = vadd.f32 %v1392, %v1417
        %v1437 = vadd.f32 %v1393, %v1417
        %v1438 = vadd.f32 %v1394, %v1417
        %v1439 = vadd.f32 %v1395, %v1417
        %v1440 = vadd.f32 %v1396, %v1417
        %v1441 = vadd.f32 %v1397, %v1417
        %v1442 = vadd.f32 %v1398, %v1417
        %v1443 = vadd.f32 %v1399, %v1417
        %v1444 = vadd.f32 %v1400, %v1417
        %v1445 = vadd.f32 %v1401, %v1417
        %v1446 = vadd.f32 %v1402, %v1417
        %v1447 = vadd.f32 %v1403, %v1417
        %v1448 = vadd.f32 %v1404, %v1417
        %v1449 = vadd.f32 %v1405, %v1417
        %v1450 = vadd.f32 %v1406, %v1417
        %v1451 = vadd.f32 %v1407, %v1417
        %v1452 = vadd.f32 %v1408, %v1417
        %v1453 = vadd.f32 %v1409, %v1417
        %v1454 = vadd.f32 %v1410, %v1417
        %v1455 = vadd.f32 %v1411, %v1417
        %v1456 = vadd.f32 %v1412, %v1417
        %v1457 = vadd.f32 %v1413, %v1417
        %v1458 = vmul.f32 %v1418, 0.5
        %v1459 = vmul.f32 %v1419, 0.5
        %v1460 = vmul.f32 %v1420, 0.5
        %v1461 = vmul.f32 %v1421, 0.5
        %v1462 = vmul.f32 %v1422, 0.5
        %v1463 = vmul.f32 %v1423, 0.5
        %v1464 = vmul.f32 %v1424, 0.5
        %v1465 = vmul.f32 %v1425, 0.5
        %v1466 = vmul.f32 %v1426, 0.5
        %v1467 = vmul.f32 %v1427, 0.5
        %v1468 = vmul.f32 %v1428, 0.5
        %v1469 = vmul.f32 %v1429, 0.5
        %v1470 = vmul.f32 %v1430, 0.5
        %v1471 = vmul.f32 %v1431, 0.5
        %v1472 = vmul.f32 %v1432, 0.5
        %v1473 = vmul.f32 %v1433, 0.5
        %v1474 = vmul.f32 %v1434, 0.5
        %v1475 = vmul.f32 %v1435, 0.5
        %v1476 = vmul.f32 %v1436, 0.5
        %v1477 = vmul.f32 %v1437, 0.5
        %v1478 = vmul.f32 %v1438, 0.5
        %v1479 = vmul.f32 %v1439, 0.5
        %v1480 = vmul.f32 %v1440, 0.5
        %v1481 = vmul.f32 %v1441, 0.5
        %v1482 = vmul.f32 %v1442, 0.5
        %v1483 = vmul.f32 %v1443, 0.5
        %v1484 = vmul.f32 %v1444, 0.5
        %v1485 = vmul.f32 %v1445, 0.5
        %v1486 = vmul.f32 %v1446, 0.5
        %v1487 = vmul.f32 %v1447, 0.5
        %v1488 = vmul.f32 %v1448, 0.5
        %v1489 = vmul.f32 %v1449, 0.5
        %v1490 = vmul.f32 %v1450, 0.5
        %v1491 = vmul.f32 %v1451, 0.5
        %v1492 = vmul.f32 %v1452, 0.5
        %v1493 = vmul.f32 %v1453, 0.5
        %v1494 = vmul.f32 %v1454, 0.5
        %v1495 = vmul.f32 %v1455, 0.5
        %v1496 = vmul.f32 %v1456, 0.5
        %v1497 = vmul.f32 %v1457, 0.5
        %v1498 = vmul.f32 %v1418, 0.70710677
        %v1499 = vmul.f32 %v1419, 0.70710677
        %v1500 = vmul.f32 %v1420, 0.70710677
        %v1501 = vmul.f32 %v1421, 0.70710677
        %v1502 = vmul.f32 %v1422, 0.70710677
        %v1503 = vmul.f32 %v1423, 0.70710677
        %v1504 = vmul.f32 %v1424, 0.70710677
        %v1505 = vmul.f32 %v1425, 0.70710677
        %v1506 = vmul.f32 %v1426, 0.70710677
        %v1507 = vmul.f32 %v1427, 0.70710677
        %v1508 = vmul.f32 %v1428, 0.70710677
        %v1509 = vmul.f32 %v1429, 0.70710677
        %v1510 = vmul.f32 %v1430, 0.70710677
        %v1511 = vmul.f32 %v1431, 0.70710677
        %v1512 = vmul.f32 %v1432, 0.70710677
        %v1513 = vmul.f32 %v1433, 0.70710677
        %v1514 = vmul.f32 %v1434, 0.70710677
        %v1515 = vmul.f32 %v1435, 0.70710677
        %v1516 = vmul.f32 %v1436, 0.70710677
        %v1517 = vmul.f32 %v1437, 0.70710677
        %v1518 = vmul.f32 %v1438, 0.70710677
        %v1519 = vmul.f32 %v1439, 0.70710677
        %v1520 = vmul.f32 %v1440, 0.70710677
        %v1521 = vmul.f32 %v1441, 0.70710677
        %v1522 = vmul.f32 %v1442, 0.70710677
        %v1523 = vmul.f32 %v1443, 0.70710677
        %v1524 = vmul.f32 %v1444, 0.70710677
        %v1525 = vmul.f32 %v1445, 0.70710677
        %v1526 = vmul.f32 %v1446, 0.70710677
        %v1527 = vmul.f32 %v1447, 0.70710677
        %v1528 = vmul.f32 %v1448, 0.70710677
        %v1529 = vmul.f32 %v1449, 0.70710677
        %v1530 = vmul.f32 %v1450, 0.70710677
        %v1531 = vmul.f32 %v1451, 0.70710677
        %v1532 = vmul.f32 %v1452, 0.70710677
        %v1533 = vmul.f32 %v1453, 0.70710677
        %v1534 = vmul.f32 %v1454, 0.70710677
        %v1535 = vmul.f32 %v1455, 0.70710677
        %v1536 = vmul.f32 %v1456, 0.70710677
        %v1537 = vmul.f32 %v1457, 0.70710677
        %v1538 = verf.f32.pop %v1498
        %v1539 = verf.f32.pop %v1499
        %v1540 = verf.f32.pop %v1500
        %v1541 = verf.f32.pop %v1501
        %v1542 = verf.f32.pop %v1502
        %v1543 = verf.f32.pop %v1503
        %v1544 = verf.f32.pop %v1504
        %v1545 = verf.f32.pop %v1505
        %v1546 = verf.f32.pop %v1506
        %v1547 = verf.f32.pop %v1507
        %v1548 = verf.f32.pop %v1508
        %v1549 = verf.f32.pop %v1509
        %v1550 = verf.f32.pop %v1510
        %v1551 = verf.f32.pop %v1511
        %v1552 = verf.f32.pop %v1512
        %v1553 = verf.f32.pop %v1513
        %v1554 = verf.f32.pop %v1514
        %v1555 = verf.f32.pop %v1515
        %v1556 = verf.f32.pop %v1516
        %v1557 = verf.f32.pop %v1517
        %v1558 = verf.f32.pop %v1518
        %v1559 = verf.f32.pop %v1519
        %v1560 = verf.f32.pop %v1520
        %v1561 = verf.f32.pop %v1521
        %v1562 = verf.f32.pop %v1522
        %v1563 = verf.f32.pop %v1523
        %v1564 = verf.f32.pop %v1524
        %v1565 = verf.f32.pop %v1525
        %v1566 = verf.f32.pop %v1526
        %v1567 = verf.f32.pop %v1527
        %v1568 = verf.f32.pop %v1528
        %v1569 = verf.f32.pop %v1529
        %v1570 = verf.f32.pop %v1530
        %v1571 = verf.f32.pop %v1531
        %v1572 = verf.f32.pop %v1532
        %v1573 = verf.f32.pop %v1533
        %v1574 = verf.f32.pop %v1534
        %v1575 = verf.f32.pop %v1535
        %v1576 = verf.f32.pop %v1536
        %v1577 = verf.f32.pop %v1537
        %v1578 = vadd.f32 %v1538, 1.0
        %v1579 = vadd.f32 %v1539, 1.0
        %v1580 = vadd.f32 %v1540, 1.0
        %v1581 = vadd.f32 %v1541, 1.0
        %v1582 = vadd.f32 %v1542, 1.0
        %v1583 = vadd.f32 %v1543, 1.0
        %v1584 = vadd.f32 %v1544, 1.0
        %v1585 = vadd.f32 %v1545, 1.0
        %v1586 = vadd.f32 %v1546, 1.0
        %v1587 = vadd.f32 %v1547, 1.0
        %v1588 = vadd.f32 %v1548, 1.0
        %v1589 = vadd.f32 %v1549, 1.0
        %v1590 = vadd.f32 %v1550, 1.0
        %v1591 = vadd.f32 %v1551, 1.0
        %v1592 = vadd.f32 %v1552, 1.0
        %v1593 = vadd.f32 %v1553, 1.0
        %v1594 = vadd.f32 %v1554, 1.0
        %v1595 = vadd.f32 %v1555, 1.0
        %v1596 = vadd.f32 %v1556, 1.0
        %v1597 = vadd.f32 %v1557, 1.0
        %v1598 = vadd.f32 %v1558, 1.0
        %v1599 = vadd.f32 %v1559, 1.0
        %v1600 = vadd.f32 %v1560, 1.0
        %v1601 = vadd.f32 %v1561, 1.0
        %v1602 = vadd.f32 %v1562, 1.0
        %v1603 = vadd.f32 %v1563, 1.0
        %v1604 = vadd.f32 %v1564, 1.0
        %v1605 = vadd.f32 %v1565, 1.0
        %v1606 = vadd.f32 %v1566, 1.0
        %v1607 = vadd.f32 %v1567, 1.0
        %v1608 = vadd.f32 %v1568, 1.0
        %v1609 = vadd.f32 %v1569, 1.0
        %v1610 = vadd.f32 %v1570, 1.0
        %v1611 = vadd.f32 %v1571, 1.0
        %v1612 = vadd.f32 %v1572, 1.0
        %v1613 = vadd.f32 %v1573, 1.0
        %v1614 = vadd.f32 %v1574, 1.0
        %v1615 = vadd.f32 %v1575, 1.0
        %v1616 = vadd.f32 %v1576, 1.0
        %v1617 = vadd.f32 %v1577, 1.0
        %v1618 = vmul.f32 %v1458, %v1578
        %v1619 = vmul.f32 %v1459, %v1579
        %v1620 = vmul.f32 %v1460, %v1580
        %v1621 = vmul.f32 %v1461, %v1581
        %v1622 = vmul.f32 %v1462, %v1582
        %v1623 = vmul.f32 %v1463, %v1583
        %v1624 = vmul.f32 %v1464, %v1584
        %v1625 = vmul.f32 %v1465, %v1585
        %v1626 = vmul.f32 %v1466, %v1586
        %v1627 = vmul.f32 %v1467, %v1587
        %v1628 = vmul.f32 %v1468, %v1588
        %v1629 = vmul.f32 %v1469, %v1589
        %v1630 = vmul.f32 %v1470, %v1590
        %v1631 = vmul.f32 %v1471, %v1591
        %v1632 = vmul.f32 %v1472, %v1592
        %v1633 = vmul.f32 %v1473, %v1593
        %v1634 = vmul.f32 %v1474, %v1594
        %v1635 = vmul.f32 %v1475, %v1595
        %v1636 = vmul.f32 %v1476, %v1596
        %v1637 = vmul.f32 %v1477, %v1597
        %v1638 = vmul.f32 %v1478, %v1598
        %v1639 = vmul.f32 %v1479, %v1599
        %v1640 = vmul.f32 %v1480, %v1600
        %v1641 = vmul.f32 %v1481, %v1601
        %v1642 = vmul.f32 %v1482, %v1602
        %v1643 = vmul.f32 %v1483, %v1603
        %v1644 = vmul.f32 %v1484, %v1604
        %v1645 = vmul.f32 %v1485, %v1605
        %v1646 = vmul.f32 %v1486, %v1606
        %v1647 = vmul.f32 %v1487, %v1607
        %v1648 = vmul.f32 %v1488, %v1608
        %v1649 = vmul.f32 %v1489, %v1609
        %v1650 = vmul.f32 %v1490, %v1610
        %v1651 = vmul.f32 %v1491, %v1611
        %v1652 = vmul.f32 %v1492, %v1612
        %v1653 = vmul.f32 %v1493, %v1613
        %v1654 = vmul.f32 %v1494, %v1614
        %v1655 = vmul.f32 %v1495, %v1615
        %v1656 = vmul.f32 %v1496, %v1616
        %v1657 = vmul.f32 %v1497, %v1617
        %1658 = vst.msk [vmem:[#allocation2] sm:$0xff] %vm847, %v1618
        %1659 = vst.msk [vmem:[#allocation2 + $0x8] sm:$0xff] %vm847, %v1619
        %1660 = vst.msk [vmem:[#allocation2 + $0x10] sm:$0xff] %vm847, %v1620
        %1661 = vst.msk [vmem:[#allocation2 + $0x18] sm:$0xff] %vm847, %v1621
        %1662 = vst.msk [vmem:[#allocation2 + $0x20] sm:$0xff] %vm847, %v1622
        %1663 = vst.msk [vmem:[#allocation2 + $0x28] sm:$0xff] %vm847, %v1623
        %1664 = vst.msk [vmem:[#allocation2 + $0x30] sm:$0xff] %vm847, %v1624
        %1665 = vst.msk [vmem:[#allocation2 + $0x38] sm:$0xff] %vm847, %v1625
        %1666 = vst.msk [vmem:[#allocation2 + $0x40] sm:$0xff] %vm847, %v1626
        %1667 = vst.msk [vmem:[#allocation2 + $0x48] sm:$0xff] %vm847, %v1627
        %1668 = vst.msk [vmem:[#allocation2 + $0x50] sm:$0xff] %vm847, %v1628
        %1669 = vst.msk [vmem:[#allocation2 + $0x58] sm:$0xff] %vm847, %v1629
        %1670 = vst.msk [vmem:[#allocation2 + $0x60] sm:$0xff] %vm847, %v1630
        %1671 = vst.msk [vmem:[#allocation2 + $0x68] sm:$0xff] %vm847, %v1631
        %1672 = vst.msk [vmem:[#allocation2 + $0x70] sm:$0xff] %vm847, %v1632
        %1673 = vst.msk [vmem:[#allocation2 + $0x78] sm:$0xff] %vm847, %v1633
        %1674 = vst.msk [vmem:[#allocation2 + $0x80] sm:$0xff] %vm847, %v1634
        %1675 = vst.msk [vmem:[#allocation2 + $0x88] sm:$0xff] %vm847, %v1635
        %1676 = vst.msk [vmem:[#allocation2 + $0x90] sm:$0xff] %vm847, %v1636
        %1677 = vst.msk [vmem:[#allocation2 + $0x98] sm:$0xff] %vm847, %v1637
        %1678 = vst.msk [vmem:[#allocation2 + $0xa0] sm:$0xff] %vm847, %v1638
        %1679 = vst.msk [vmem:[#allocation2 + $0xa8] sm:$0xff] %vm847, %v1639
        %1680 = vst.msk [vmem:[#allocation2 + $0xb0] sm:$0xff] %vm847, %v1640
        %1681 = vst.msk [vmem:[#allocation2 + $0xb8] sm:$0xff] %vm847, %v1641
        %1682 = vst.msk [vmem:[#allocation2 + $0xc0] sm:$0xff] %vm847, %v1642
        %1683 = vst.msk [vmem:[#allocation2 + $0xc8] sm:$0xff] %vm847, %v1643
        %1684 = vst.msk [vmem:[#allocation2 + $0xd0] sm:$0xff] %vm847, %v1644
        %1685 = vst.msk [vmem:[#allocation2 + $0xd8] sm:$0xff] %vm847, %v1645
        %1686 = vst.msk [vmem:[#allocation2 + $0xe0] sm:$0xff] %vm847, %v1646
        %1687 = vst.msk [vmem:[#allocation2 + $0xe8] sm:$0xff] %vm847, %v1647
        %1688 = vst.msk [vmem:[#allocation2 + $0xf0] sm:$0xff] %vm847, %v1648
        %1689 = vst.msk [vmem:[#allocation2 + $0xf8] sm:$0xff] %vm847, %v1649
        %1690 = vst.msk [vmem:[#allocation2 + $0x100] sm:$0xff] %vm847, %v1650
        %1691 = vst.msk [vmem:[#allocation2 + $0x108] sm:$0xff] %vm847, %v1651
        %1692 = vst.msk [vmem:[#allocation2 + $0x110] sm:$0xff] %vm847, %v1652
        %1693 = vst.msk [vmem:[#allocation2 + $0x118] sm:$0xff] %vm847, %v1653
        %1694 = vst.msk [vmem:[#allocation2 + $0x120] sm:$0xff] %vm847, %v1654
        %1695 = vst.msk [vmem:[#allocation2 + $0x128] sm:$0xff] %vm847, %v1655
        %1696 = vst.msk [vmem:[#allocation2 + $0x130] sm:$0xff] %vm847, %v1656
        %1697 = vst.msk [vmem:[#allocation2 + $0x138] sm:$0x7f] %vm965, %v1657
        %v1698 = vld [vmem:[#allocation2] ss:$2 sm:$0xff]
        %s1699 = scalar_lea.vmem [#allocation2], 16
        %v1700 = vld [vmem:[%s1699] ss:$2 sm:$0xff]
        %s1701 = scalar_lea.vmem [#allocation2], 32
        %v1702 = vld [vmem:[%s1701] ss:$2 sm:$0xff]
        %s1703 = scalar_lea.vmem [#allocation2], 48
        %v1704 = vld [vmem:[%s1703] ss:$2 sm:$0xff]
        %s1705 = scalar_lea.vmem [#allocation2], 64
        %v1706 = vld [vmem:[%s1705] ss:$2 sm:$0xff]
        %s1707 = scalar_lea.vmem [#allocation2], 80
        %v1708 = vld [vmem:[%s1707] ss:$2 sm:$0xff]
        %s1709 = scalar_lea.vmem [#allocation2], 96
        %v1710 = vld [vmem:[%s1709] ss:$2 sm:$0xff]
        %s1711 = scalar_lea.vmem [#allocation2], 112
        %v1712 = vld [vmem:[%s1711] ss:$2 sm:$0xff]
        %s1713 = scalar_lea.vmem [#allocation2], 128
        %v1714 = vld [vmem:[%s1713] ss:$2 sm:$0xff]
        %s1715 = scalar_lea.vmem [#allocation2], 144
        %v1716 = vld [vmem:[%s1715] ss:$2 sm:$0xff]
        %s1717 = scalar_lea.vmem [#allocation2], 160
        %v1718 = vld [vmem:[%s1717] ss:$2 sm:$0xff]
        %s1719 = scalar_lea.vmem [#allocation2], 176
        %v1720 = vld [vmem:[%s1719] ss:$2 sm:$0xff]
        %s1721 = scalar_lea.vmem [#allocation2], 192
        %v1722 = vld [vmem:[%s1721] ss:$2 sm:$0xff]
        %s1723 = scalar_lea.vmem [#allocation2], 208
        %v1724 = vld [vmem:[%s1723] ss:$2 sm:$0xff]
        %s1725 = scalar_lea.vmem [#allocation2], 224
        %v1726 = vld [vmem:[%s1725] ss:$2 sm:$0xff]
        %s1727 = scalar_lea.vmem [#allocation2], 240
        %v1728 = vld [vmem:[%s1727] ss:$2 sm:$0xff]
        %s1729 = scalar_lea.vmem [#allocation2], 256
        %v1730 = vld [vmem:[%s1729] ss:$2 sm:$0xff]
        %s1731 = scalar_lea.vmem [#allocation2], 272
        %v1732 = vld [vmem:[%s1731] ss:$2 sm:$0xff]
        %s1733 = scalar_lea.vmem [#allocation2], 288
        %v1734 = vld [vmem:[%s1733] ss:$2 sm:$0xff]
        %s1735 = scalar_lea.vmem [#allocation2], 304
        %v1736 = vld [vmem:[%s1735] ss:$2 sm:$0x7f]
        %s1737 = scalar_lea.vmem [#allocation2], 1
        %v1738 = vld [vmem:[%s1737] ss:$2 sm:$0xff]
        %s1739 = scalar_lea.vmem [#allocation2], 17
        %v1740 = vld [vmem:[%s1739] ss:$2 sm:$0xff]
        %s1741 = scalar_lea.vmem [#allocation2], 33
        %v1742 = vld [vmem:[%s1741] ss:$2 sm:$0xff]
        %s1743 = scalar_lea.vmem [#allocation2], 49
        %v1744 = vld [vmem:[%s1743] ss:$2 sm:$0xff]
        %s1745 = scalar_lea.vmem [#allocation2], 65
        %v1746 = vld [vmem:[%s1745] ss:$2 sm:$0xff]
        %s1747 = scalar_lea.vmem [#allocation2], 81
        %v1748 = vld [vmem:[%s1747] ss:$2 sm:$0xff]
        %s1749 = scalar_lea.vmem [#allocation2], 97
        %v1750 = vld [vmem:[%s1749] ss:$2 sm:$0xff]
        %s1751 = scalar_lea.vmem [#allocation2], 113
        %v1752 = vld [vmem:[%s1751] ss:$2 sm:$0xff]
        %s1753 = scalar_lea.vmem [#allocation2], 129
        %v1754 = vld [vmem:[%s1753] ss:$2 sm:$0xff]
        %s1755 = scalar_lea.vmem [#allocation2], 145
        %v1756 = vld [vmem:[%s1755] ss:$2 sm:$0xff]
        %s1757 = scalar_lea.vmem [#allocation2], 161
        %v1758 = vld [vmem:[%s1757] ss:$2 sm:$0xff]
        %s1759 = scalar_lea.vmem [#allocation2], 177
        %v1760 = vld [vmem:[%s1759] ss:$2 sm:$0xff]
        %s1761 = scalar_lea.vmem [#allocation2], 193
        %v1762 = vld [vmem:[%s1761] ss:$2 sm:$0xff]
        %s1763 = scalar_lea.vmem [#allocation2], 209
        %v1764 = vld [vmem:[%s1763] ss:$2 sm:$0xff]
        %s1765 = scalar_lea.vmem [#allocation2], 225
        %v1766 = vld [vmem:[%s1765] ss:$2 sm:$0xff]
        %s1767 = scalar_lea.vmem [#allocation2], 241
        %v1768 = vld [vmem:[%s1767] ss:$2 sm:$0xff]
        %s1769 = scalar_lea.vmem [#allocation2], 257
        %v1770 = vld [vmem:[%s1769] ss:$2 sm:$0xff]
        %s1771 = scalar_lea.vmem [#allocation2], 273
        %v1772 = vld [vmem:[%s1771] ss:$2 sm:$0xff]
        %s1773 = scalar_lea.vmem [#allocation2], 289
        %v1774 = vld [vmem:[%s1773] ss:$2 sm:$0xff]
        %s1775 = scalar_lea.vmem [#allocation2], 305
        %v1776 = vld [vmem:[%s1775] ss:$2 sm:$0x7f]
        %s1777 = scalar_lea.vmem [#allocation2], 2
        %v1778 = vld [vmem:[%s1777] ss:$2 sm:$0xff]
        %s1779 = scalar_lea.vmem [#allocation2], 18
        %v1780 = vld [vmem:[%s1779] ss:$2 sm:$0xff]
        %s1781 = scalar_lea.vmem [#allocation2], 34
        %v1782 = vld [vmem:[%s1781] ss:$2 sm:$0xff]
        %s1783 = scalar_lea.vmem [#allocation2], 50
        %v1784 = vld [vmem:[%s1783] ss:$2 sm:$0xff]
        %s1785 = scalar_lea.vmem [#allocation2], 66
        %v1786 = vld [vmem:[%s1785] ss:$2 sm:$0xff]
        %s1787 = scalar_lea.vmem [#allocation2], 82
        %v1788 = vld [vmem:[%s1787] ss:$2 sm:$0xff]
        %s1789 = scalar_lea.vmem [#allocation2], 98
        %v1790 = vld [vmem:[%s1789] ss:$2 sm:$0xff]
        %s1791 = scalar_lea.vmem [#allocation2], 114
        %v1792 = vld [vmem:[%s1791] ss:$2 sm:$0xff]
        %s1793 = scalar_lea.vmem [#allocation2], 130
        %v1794 = vld [vmem:[%s1793] ss:$2 sm:$0xff]
        %s1795 = scalar_lea.vmem [#allocation2], 146
        %v1796 = vld [vmem:[%s1795] ss:$2 sm:$0xff]
        %s1797 = scalar_lea.vmem [#allocation2], 162
        %v1798 = vld [vmem:[%s1797] ss:$2 sm:$0xff]
        %s1799 = scalar_lea.vmem [#allocation2], 178
        %v1800 = vld [vmem:[%s1799] ss:$2 sm:$0xff]
        %s1801 = scalar_lea.vmem [#allocation2], 194
        %v1802 = vld [vmem:[%s1801] ss:$2 sm:$0xff]
        %s1803 = scalar_lea.vmem [#allocation2], 210
        %v1804 = vld [vmem:[%s1803] ss:$2 sm:$0xff]
        %s1805 = scalar_lea.vmem [#allocation2], 226
        %v1806 = vld [vmem:[%s1805] ss:$2 sm:$0xff]
        %s1807 = scalar_lea.vmem [#allocation2], 242
        %v1808 = vld [vmem:[%s1807] ss:$2 sm:$0xff]
        %s1809 = scalar_lea.vmem [#allocation2], 258
        %v1810 = vld [vmem:[%s1809] ss:$2 sm:$0xff]
        %s1811 = scalar_lea.vmem [#allocation2], 274
        %v1812 = vld [vmem:[%s1811] ss:$2 sm:$0xff]
        %s1813 = scalar_lea.vmem [#allocation2], 290
        %v1814 = vld [vmem:[%s1813] ss:$2 sm:$0xff]
        %s1815 = scalar_lea.vmem [#allocation2], 306
        %v1816 = vld [vmem:[%s1815] ss:$2 sm:$0x7f]
        %1837 = vrot.lane.b32.xlu0 %v1738, 32
        %v1838 = vpop.permute.xlu0 %1837
        %1839 = vrot.lane.b32.xlu0 %v1740, 32
        %v1840 = vpop.permute.xlu0 %1839
        %1841 = vrot.lane.b32.xlu0 %v1742, 32
        %v1842 = vpop.permute.xlu0 %1841
        %1843 = vrot.lane.b32.xlu0 %v1744, 32
        %v1844 = vpop.permute.xlu0 %1843
        %1845 = vrot.lane.b32.xlu0 %v1746, 32
        %v1846 = vpop.permute.xlu0 %1845
        %1847 = vrot.lane.b32.xlu0 %v1748, 32
        %v1848 = vpop.permute.xlu0 %1847
        %1849 = vrot.lane.b32.xlu0 %v1750, 32
        %v1850 = vpop.permute.xlu0 %1849
        %1851 = vrot.lane.b32.xlu0 %v1752, 32
        %v1852 = vpop.permute.xlu0 %1851
        %1853 = vrot.lane.b32.xlu0 %v1754, 32
        %v1854 = vpop.permute.xlu0 %1853
        %1855 = vrot.lane.b32.xlu0 %v1756, 32
        %v1856 = vpop.permute.xlu0 %1855
        %1857 = vrot.lane.b32.xlu0 %v1758, 32
        %v1858 = vpop.permute.xlu0 %1857
        %1859 = vrot.lane.b32.xlu0 %v1760, 32
        %v1860 = vpop.permute.xlu0 %1859
        %1861 = vrot.lane.b32.xlu0 %v1762, 32
        %v1862 = vpop.permute.xlu0 %1861
        %1863 = vrot.lane.b32.xlu0 %v1764, 32
        %v1864 = vpop.permute.xlu0 %1863
        %1865 = vrot.lane.b32.xlu0 %v1766, 32
        %v1866 = vpop.permute.xlu0 %1865
        %1867 = vrot.lane.b32.xlu0 %v1768, 32
        %v1868 = vpop.permute.xlu0 %1867
        %1869 = vrot.lane.b32.xlu0 %v1770, 32
        %v1870 = vpop.permute.xlu0 %1869
        %1871 = vrot.lane.b32.xlu0 %v1772, 32
        %v1872 = vpop.permute.xlu0 %1871
        %1873 = vrot.lane.b32.xlu0 %v1774, 32
        %v1874 = vpop.permute.xlu0 %1873
        %1875 = vrot.lane.b32.xlu0 %v1776, 32
        %v1876 = vpop.permute.xlu0 %1875
        %1917 = vrot.lane.b32.xlu0 %v1778, 64
        %v1918 = vpop.permute.xlu0 %1917
        %1919 = vrot.lane.b32.xlu0 %v1780, 64
        %v1920 = vpop.permute.xlu0 %1919
        %1921 = vrot.lane.b32.xlu0 %v1782, 64
        %v1922 = vpop.permute.xlu0 %1921
        %1923 = vrot.lane.b32.xlu0 %v1784, 64
        %v1924 = vpop.permute.xlu0 %1923
        %1925 = vrot.lane.b32.xlu0 %v1786, 64
        %v1926 = vpop.permute.xlu0 %1925
        %1927 = vrot.lane.b32.xlu0 %v1788, 64
        %v1928 = vpop.permute.xlu0 %1927
        %1929 = vrot.lane.b32.xlu0 %v1790, 64
        %v1930 = vpop.permute.xlu0 %1929
        %1931 = vrot.lane.b32.xlu0 %v1792, 64
        %v1932 = vpop.permute.xlu0 %1931
        %1933 = vrot.lane.b32.xlu0 %v1794, 64
        %v1934 = vpop.permute.xlu0 %1933
        %1935 = vrot.lane.b32.xlu0 %v1796, 64
        %v1936 = vpop.permute.xlu0 %1935
        %1937 = vrot.lane.b32.xlu0 %v1798, 64
        %v1938 = vpop.permute.xlu0 %1937
        %1939 = vrot.lane.b32.xlu0 %v1800, 64
        %v1940 = vpop.permute.xlu0 %1939
        %1941 = vrot.lane.b32.xlu0 %v1802, 64
        %v1942 = vpop.permute.xlu0 %1941
        %1943 = vrot.lane.b32.xlu0 %v1804, 64
        %v1944 = vpop.permute.xlu0 %1943
        %1945 = vrot.lane.b32.xlu0 %v1806, 64
        %v1946 = vpop.permute.xlu0 %1945
        %1947 = vrot.lane.b32.xlu0 %v1808, 64
        %v1948 = vpop.permute.xlu0 %1947
        %1949 = vrot.lane.b32.xlu0 %v1810, 64
        %v1950 = vpop.permute.xlu0 %1949
        %1951 = vrot.lane.b32.xlu0 %v1812, 64
        %v1952 = vpop.permute.xlu0 %1951
        %1953 = vrot.lane.b32.xlu0 %v1814, 64
        %v1954 = vpop.permute.xlu0 %1953
        %1955 = vrot.lane.b32.xlu0 %v1816, 64
        %v1956 = vpop.permute.xlu0 %1955
        %v1977 = vsel %vm847, %v1698, %v1838
        %v1978 = vsel %vm847, %v1700, %v1840
        %v1979 = vsel %vm847, %v1702, %v1842
        %v1980 = vsel %vm847, %v1704, %v1844
        %v1981 = vsel %vm847, %v1706, %v1846
        %v1982 = vsel %vm847, %v1708, %v1848
        %v1983 = vsel %vm847, %v1710, %v1850
        %v1984 = vsel %vm847, %v1712, %v1852
        %v1985 = vsel %vm847, %v1714, %v1854
        %v1986 = vsel %vm847, %v1716, %v1856
        %v1987 = vsel %vm847, %v1718, %v1858
        %v1988 = vsel %vm847, %v1720, %v1860
        %v1989 = vsel %vm847, %v1722, %v1862
        %v1990 = vsel %vm847, %v1724, %v1864
        %v1991 = vsel %vm847, %v1726, %v1866
        %v1992 = vsel %vm847, %v1728, %v1868
        %v1993 = vsel %vm847, %v1730, %v1870
        %v1994 = vsel %vm847, %v1732, %v1872
        %v1995 = vsel %vm847, %v1734, %v1874
        %v1996 = vsel %vm847, %v1736, %v1876
        %vm1997 = vcmask 523264
        %v1998 = vsel %vm1997, %v1977, %v1918
        %v1999 = vsel %vm1997, %v1978, %v1920
        %v2000 = vsel %vm1997, %v1979, %v1922
        %v2001 = vsel %vm1997, %v1980, %v1924
        %v2002 = vsel %vm1997, %v1981, %v1926
        %v2003 = vsel %vm1997, %v1982, %v1928
        %v2004 = vsel %vm1997, %v1983, %v1930
        %v2005 = vsel %vm1997, %v1984, %v1932
        %v2006 = vsel %vm1997, %v1985, %v1934
        %v2007 = vsel %vm1997, %v1986, %v1936
        %v2008 = vsel %vm1997, %v1987, %v1938
        %v2009 = vsel %vm1997, %v1988, %v1940
        %v2010 = vsel %vm1997, %v1989, %v1942
        %v2011 = vsel %vm1997, %v1990, %v1944
        %v2012 = vsel %vm1997, %v1991, %v1946
        %v2013 = vsel %vm1997, %v1992, %v1948
        %v2014 = vsel %vm1997, %v1993, %v1950
        %v2015 = vsel %vm1997, %v1994, %v1952
        %v2016 = vsel %vm1997, %v1995, %v1954
        %v2017 = vsel %vm1997, %v1996, %v1956
        %s2018 = scalar_lea.vmem %s1, 96
        %v2019 = vld [vmem:[%s2018] sm:$0xff]
        %v2020 = vld [vmem:[%s2018 + $0x8] sm:$0xff]
        %v2021 = vld [vmem:[%s2018 + $0x10] sm:$0xff]
        %v2022 = vld [vmem:[%s2018 + $0x18] sm:$0xff]
        %v2023 = vld [vmem:[%s2018 + $0x20] sm:$0xff]
        %v2024 = vld [vmem:[%s2018 + $0x28] sm:$0xff]
        %v2025 = vld [vmem:[%s2018 + $0x30] sm:$0xff]
        %v2026 = vld [vmem:[%s2018 + $0x38] sm:$0xff]
        %v2027 = vld [vmem:[%s2018 + $0x40] sm:$0xff]
        %v2028 = vld [vmem:[%s2018 + $0x48] sm:$0xff]
        %v2029 = vld [vmem:[%s2018 + $0x50] sm:$0xff]
        %v2030 = vld [vmem:[%s2018 + $0x58] sm:$0xff]
        %s2031 = scalar_lea.vmem %s2, 4
        %v2032 = vld [vmem:[%s2031] sm:$0x7]
        %v2033 = vlaneseq
        %v2034 = vshrl.u32 %v2033, 7
        %v2035 = vsub.s32 0, %v2034
        %v2036 = vrot.slane %v2032, %v2035
        %vm2037 = vcmask 785408
        %v2039 = vsel %vm2037, %v1998, 0
        %v2042 = vsel %vm2037, %v1999, 0
        %v2045 = vsel %vm2037, %v2000, 0
        %v2048 = vsel %vm2037, %v2001, 0
        %v2051 = vsel %vm2037, %v2002, 0
        %v2054 = vsel %vm2037, %v2003, 0
        %v2057 = vsel %vm2037, %v2004, 0
        %v2060 = vsel %vm2037, %v2005, 0
        %v2063 = vsel %vm2037, %v2006, 0
        %v2066 = vsel %vm2037, %v2007, 0
        %v2069 = vsel %vm2037, %v2008, 0
        %v2072 = vsel %vm2037, %v2009, 0
        %v2075 = vsel %vm2037, %v2010, 0
        %v2078 = vsel %vm2037, %v2011, 0
        %v2081 = vsel %vm2037, %v2012, 0
        %v2084 = vsel %vm2037, %v2013, 0
        %v2087 = vsel %vm2037, %v2014, 0
        %v2090 = vsel %vm2037, %v2015, 0
        %v2093 = vsel %vm2037, %v2016, 0
        %v2096 = vsel %vm2037, %v2017, 0
        %2098 = vmatprep.subr.mxu0 0.0
        %2099 = vmatpush1.msra.mxu0 0.0
        %2100 = vmatprep.subr.mxu0 0.0
        %2101 = vmatpush1.msra.mxu0 0.0
        %2102 = vmatprep.subr.mxu0 0.0
        %2103 = vmatpush1.msra.mxu0 0.0
        %2104 = vmatprep.subr.mxu0 0.0
        %2105 = vmatpush1.msra.mxu0 0.0
        %2106 = vmatprep.subr.mxu0 0.0
        %2107 = vmatpush1.msra.mxu0 %v2030
        %2108 = vmatprep.subr.mxu0 0.0
        %2109 = vmatpush1.msra.mxu0 %v2029
        %2110 = vmatprep.subr.mxu0 0.0
        %2111 = vmatpush1.msra.mxu0 %v2028
        %2112 = vmatprep.subr.mxu0 0.0
        %2113 = vmatpush1.msra.mxu0 %v2027
        %2114 = vmatprep.subr.mxu0 0.0
        %2115 = vmatpush1.msra.mxu0 %v2026
        %2116 = vmatprep.subr.mxu0 0.0
        %2117 = vmatpush1.msra.mxu0 %v2025
        %2118 = vmatprep.subr.mxu0 0.0
        %2119 = vmatpush1.msra.mxu0 %v2024
        %2120 = vmatprep.subr.mxu0 0.0
        %2121 = vmatpush1.msra.mxu0 %v2023
        %2122 = vmatprep.subr.mxu0 0.0
        %2123 = vmatpush1.msra.mxu0 %v2022
        %2124 = vmatprep.subr.mxu0 0.0
        %2125 = vmatpush1.msra.mxu0 %v2021
        %2126 = vmatprep.subr.mxu0 0.0
        %2127 = vmatpush1.msra.mxu0 %v2020
        %2128 = vmatprep.subr.mxu0 0.0
        %2129 = vmatpush1.msra.mxu0 %v2019
        %2130 = vmatprep.subr.mxu0 0.0
        %2131 = vmatpush2.msra.mxu0 0.0
        %2132 = vmatprep.subr.mxu0 0.0
        %2133 = vmatpush2.msra.mxu0 0.0
        %2134 = vmatprep.subr.mxu0 0.0
        %2135 = vmatpush2.msra.mxu0 0.0
        %2136 = vmatprep.subr.mxu0 0.0
        %2137 = vmatpush2.msra.mxu0 0.0
        %2138 = vmatprep.subr.mxu0 0.0
        %2139 = vmatpush2.msra.mxu0 0.0
        %2140 = vmatprep.subr.mxu0 0.0
        %2141 = vmatpush2.msra.mxu0 0.0
        %2142 = vmatprep.subr.mxu0 0.0
        %2143 = vmatpush2.msra.mxu0 0.0
        %2144 = vmatprep.subr.mxu0 0.0
        %2145 = vmatpush2.msra.mxu0 0.0
        %2146 = vmatprep.subr.mxu0 0.0
        %2147 = vmatpush2.msra.mxu0 0.0
        %2148 = vmatprep.subr.mxu0 0.0
        %2149 = vmatpush2.msra.mxu0 0.0
        %2150 = vmatprep.subr.mxu0 0.0
        %2151 = vmatpush2.msra.mxu0 0.0
        %2152 = vmatprep.subr.mxu0 0.0
        %2153 = vmatpush2.msra.mxu0 0.0
        %2154 = vmatprep.subr.mxu0 0.0
        %2155 = vmatpush2.msra.mxu0 0.0
        %2156 = vmatprep.subr.mxu0 0.0
        %2157 = vmatpush2.msra.mxu0 0.0
        %2158 = vmatprep.subr.mxu0 0.0
        %2159 = vmatpush2.msra.mxu0 0.0
        %2160 = vmatprep.subr.mxu0 0.0
        %2161 = vmatpush2.msra.mxu0 0.0
        %2162 = vmatprep.mubr.f32.mxu0 0.0
        %2163 = vmatmul.mubr.f32.gmra.mxu0 %v2039
        %v2164 = vpop.f32.mrf.mxu0
        %v2165 = vadd.f32 %v2036, %v2164
        %v2166 = vpop.f32.mrf.mxu0
        %2167 = vmatprep.mubr.f32.mxu0 0.0
        %2168 = vmatmul.mubr.f32.gmra.mxu0 %v2042
        %v2169 = vpop.f32.mrf.mxu0
        %v2170 = vadd.f32 %v2036, %v2169
        %v2171 = vpop.f32.mrf.mxu0
        %2172 = vmatprep.mubr.f32.mxu0 0.0
        %2173 = vmatmul.mubr.f32.gmra.mxu0 %v2045
        %v2174 = vpop.f32.mrf.mxu0
        %v2175 = vadd.f32 %v2036, %v2174
        %v2176 = vpop.f32.mrf.mxu0
        %2177 = vmatprep.mubr.f32.mxu0 0.0
        %2178 = vmatmul.mubr.f32.gmra.mxu0 %v2048
        %v2179 = vpop.f32.mrf.mxu0
        %v2180 = vadd.f32 %v2036, %v2179
        %v2181 = vpop.f32.mrf.mxu0
        %2182 = vmatprep.mubr.f32.mxu0 0.0
        %2183 = vmatmul.mubr.f32.gmra.mxu0 %v2051
        %v2184 = vpop.f32.mrf.mxu0
        %v2185 = vadd.f32 %v2036, %v2184
        %v2186 = vpop.f32.mrf.mxu0
        %2187 = vmatprep.mubr.f32.mxu0 0.0
        %2188 = vmatmul.mubr.f32.gmra.mxu0 %v2054
        %v2189 = vpop.f32.mrf.mxu0
        %v2190 = vadd.f32 %v2036, %v2189
        %v2191 = vpop.f32.mrf.mxu0
        %2192 = vmatprep.mubr.f32.mxu0 0.0
        %2193 = vmatmul.mubr.f32.gmra.mxu0 %v2057
        %v2194 = vpop.f32.mrf.mxu0
        %v2195 = vadd.f32 %v2036, %v2194
        %v2196 = vpop.f32.mrf.mxu0
        %2197 = vmatprep.mubr.f32.mxu0 0.0
        %2198 = vmatmul.mubr.f32.gmra.mxu0 %v2060
        %v2199 = vpop.f32.mrf.mxu0
        %v2200 = vadd.f32 %v2036, %v2199
        %v2201 = vpop.f32.mrf.mxu0
        %2202 = vmatprep.mubr.f32.mxu0 0.0
        %2203 = vmatmul.mubr.f32.gmra.mxu0 %v2063
        %v2204 = vpop.f32.mrf.mxu0
        %v2205 = vadd.f32 %v2036, %v2204
        %v2206 = vpop.f32.mrf.mxu0
        %2207 = vmatprep.mubr.f32.mxu0 0.0
        %2208 = vmatmul.mubr.f32.gmra.mxu0 %v2066
        %v2209 = vpop.f32.mrf.mxu0
        %v2210 = vadd.f32 %v2036, %v2209
        %v2211 = vpop.f32.mrf.mxu0
        %2212 = vmatprep.mubr.f32.mxu0 0.0
        %2213 = vmatmul.mubr.f32.gmra.mxu0 %v2069
        %v2214 = vpop.f32.mrf.mxu0
        %v2215 = vadd.f32 %v2036, %v2214
        %v2216 = vpop.f32.mrf.mxu0
        %2217 = vmatprep.mubr.f32.mxu0 0.0
        %2218 = vmatmul.mubr.f32.gmra.mxu0 %v2072
        %v2219 = vpop.f32.mrf.mxu0
        %v2220 = vadd.f32 %v2036, %v2219
        %v2221 = vpop.f32.mrf.mxu0
        %2222 = vmatprep.mubr.f32.mxu0 0.0
        %2223 = vmatmul.mubr.f32.gmra.mxu0 %v2075
        %v2224 = vpop.f32.mrf.mxu0
        %v2225 = vadd.f32 %v2036, %v2224
        %v2226 = vpop.f32.mrf.mxu0
        %2227 = vmatprep.mubr.f32.mxu0 0.0
        %2228 = vmatmul.mubr.f32.gmra.mxu0 %v2078
        %v2229 = vpop.f32.mrf.mxu0
        %v2230 = vadd.f32 %v2036, %v2229
        %v2231 = vpop.f32.mrf.mxu0
        %2232 = vmatprep.mubr.f32.mxu0 0.0
        %2233 = vmatmul.mubr.f32.gmra.mxu0 %v2081
        %v2234 = vpop.f32.mrf.mxu0
        %v2235 = vadd.f32 %v2036, %v2234
        %v2236 = vpop.f32.mrf.mxu0
        %2237 = vmatprep.mubr.f32.mxu0 0.0
        %2238 = vmatmul.mubr.f32.gmra.mxu0 %v2084
        %v2239 = vpop.f32.mrf.mxu0
        %v2240 = vadd.f32 %v2036, %v2239
        %v2241 = vpop.f32.mrf.mxu0
        %2242 = vmatprep.mubr.f32.mxu0 0.0
        %2243 = vmatmul.mubr.f32.gmra.mxu0 %v2087
        %v2244 = vpop.f32.mrf.mxu0
        %v2245 = vadd.f32 %v2036, %v2244
        %v2246 = vpop.f32.mrf.mxu0
        %2247 = vmatprep.mubr.f32.mxu0 0.0
        %2248 = vmatmul.mubr.f32.gmra.mxu0 %v2090
        %v2249 = vpop.f32.mrf.mxu0
        %v2250 = vadd.f32 %v2036, %v2249
        %v2251 = vpop.f32.mrf.mxu0
        %2252 = vmatprep.mubr.f32.mxu0 0.0
        %2253 = vmatmul.mubr.f32.gmra.mxu0 %v2093
        %v2254 = vpop.f32.mrf.mxu0
        %v2255 = vadd.f32 %v2036, %v2254
        %v2256 = vpop.f32.mrf.mxu0
        %2257 = vmatprep.mubr.f32.mxu0 0.0
        %2258 = vmatmul.mubr.f32.gmra.mxu0 %v2096
        %v2259 = vpop.f32.mrf.mxu0
        %v2260 = vadd.f32 %v2036, %v2259
        %v2261 = vpop.f32.mrf.mxu0
        %2262 = vdwg.mxu0
        %v2263 = vsel %vm847, %v2165, 0.0
        %2264 = vadd.xlane.f32.xlu0 %v2263
        %v2265 = vpop.xlane.xlu0 %2264
        %v2266 = vsel %vm847, %v2170, 0.0
        %2267 = vadd.xlane.f32.xlu0 %v2266
        %v2268 = vpop.xlane.xlu0 %2267
        %v2269 = vsel %vm847, %v2175, 0.0
        %2270 = vadd.xlane.f32.xlu0 %v2269
        %v2271 = vpop.xlane.xlu0 %2270
        %v2272 = vsel %vm847, %v2180, 0.0
        %2273 = vadd.xlane.f32.xlu0 %v2272
        %v2274 = vpop.xlane.xlu0 %2273
        %v2275 = vsel %vm847, %v2185, 0.0
        %2276 = vadd.xlane.f32.xlu0 %v2275
        %v2277 = vpop.xlane.xlu0 %2276
        %v2278 = vsel %vm847, %v2190, 0.0
        %2279 = vadd.xlane.f32.xlu0 %v2278
        %v2280 = vpop.xlane.xlu0 %2279
        %v2281 = vsel %vm847, %v2195, 0.0
        %2282 = vadd.xlane.f32.xlu0 %v2281
        %v2283 = vpop.xlane.xlu0 %2282
        %v2284 = vsel %vm847, %v2200, 0.0
        %2285 = vadd.xlane.f32.xlu0 %v2284
        %v2286 = vpop.xlane.xlu0 %2285
        %v2287 = vsel %vm847, %v2205, 0.0
        %2288 = vadd.xlane.f32.xlu0 %v2287
        %v2289 = vpop.xlane.xlu0 %2288
        %v2290 = vsel %vm847, %v2210, 0.0
        %2291 = vadd.xlane.f32.xlu0 %v2290
        %v2292 = vpop.xlane.xlu0 %2291
        %v2293 = vsel %vm847, %v2215, 0.0
        %2294 = vadd.xlane.f32.xlu0 %v2293
        %v2295 = vpop.xlane.xlu0 %2294
        %v2296 = vsel %vm847, %v2220, 0.0
        %2297 = vadd.xlane.f32.xlu0 %v2296
        %v2298 = vpop.xlane.xlu0 %2297
        %v2299 = vsel %vm847, %v2225, 0.0
        %2300 = vadd.xlane.f32.xlu0 %v2299
        %v2301 = vpop.xlane.xlu0 %2300
        %v2302 = vsel %vm847, %v2230, 0.0
        %2303 = vadd.xlane.f32.xlu0 %v2302
        %v2304 = vpop.xlane.xlu0 %2303
        %v2305 = vsel %vm847, %v2235, 0.0
        %2306 = vadd.xlane.f32.xlu0 %v2305
        %v2307 = vpop.xlane.xlu0 %2306
        %v2308 = vsel %vm847, %v2240, 0.0
        %2309 = vadd.xlane.f32.xlu0 %v2308
        %v2310 = vpop.xlane.xlu0 %2309
        %v2311 = vsel %vm847, %v2245, 0.0
        %2312 = vadd.xlane.f32.xlu0 %v2311
        %v2313 = vpop.xlane.xlu0 %2312
        %v2314 = vsel %vm847, %v2250, 0.0
        %2315 = vadd.xlane.f32.xlu0 %v2314
        %v2316 = vpop.xlane.xlu0 %2315
        %v2317 = vsel %vm847, %v2255, 0.0
        %2318 = vadd.xlane.f32.xlu0 %v2317
        %v2319 = vpop.xlane.xlu0 %2318
        %v2320 = vsel %vm965, %v2260, 0.0
        %2321 = vadd.xlane.f32.xlu0 %v2320
        %v2322 = vpop.xlane.xlu0 %2321
        %v2323 = vmul.f32 %v2265, %v969
        %v2324 = vmul.f32 %v2268, %v969
        %v2325 = vmul.f32 %v2271, %v969
        %v2326 = vmul.f32 %v2274, %v969
        %v2327 = vmul.f32 %v2277, %v969
        %v2328 = vmul.f32 %v2280, %v969
        %v2329 = vmul.f32 %v2283, %v969
        %v2330 = vmul.f32 %v2286, %v969
        %v2331 = vmul.f32 %v2289, %v969
        %v2332 = vmul.f32 %v2292, %v969
        %v2333 = vmul.f32 %v2295, %v969
        %v2334 = vmul.f32 %v2298, %v969
        %v2335 = vmul.f32 %v2301, %v969
        %v2336 = vmul.f32 %v2304, %v969
        %v2337 = vmul.f32 %v2307, %v969
        %v2338 = vmul.f32 %v2310, %v969
        %v2339 = vmul.f32 %v2313, %v969
        %v2340 = vmul.f32 %v2316, %v969
        %v2341 = vmul.f32 %v2319, %v969
        %v2342 = vmul.f32 %v2322, %v969
        %v2343 = vsub.f32 %v2165, %v2323
        %v2344 = vsub.f32 %v2170, %v2324
        %v2345 = vsub.f32 %v2175, %v2325
        %v2346 = vsub.f32 %v2180, %v2326
        %v2347 = vsub.f32 %v2185, %v2327
        %v2348 = vsub.f32 %v2190, %v2328
        %v2349 = vsub.f32 %v2195, %v2329
        %v2350 = vsub.f32 %v2200, %v2330
        %v2351 = vsub.f32 %v2205, %v2331
        %v2352 = vsub.f32 %v2210, %v2332
        %v2353 = vsub.f32 %v2215, %v2333
        %v2354 = vsub.f32 %v2220, %v2334
        %v2355 = vsub.f32 %v2225, %v2335
        %v2356 = vsub.f32 %v2230, %v2336
        %v2357 = vsub.f32 %v2235, %v2337
        %v2358 = vsub.f32 %v2240, %v2338
        %v2359 = vsub.f32 %v2245, %v2339
        %v2360 = vsub.f32 %v2250, %v2340
        %v2361 = vsub.f32 %v2255, %v2341
        %v2362 = vsub.f32 %v2260, %v2342
        %v2363 = vmul.f32 %v2343, %v2343
        %v2364 = vmul.f32 %v2344, %v2344
        %v2365 = vmul.f32 %v2345, %v2345
        %v2366 = vmul.f32 %v2346, %v2346
        %v2367 = vmul.f32 %v2347, %v2347
        %v2368 = vmul.f32 %v2348, %v2348
        %v2369 = vmul.f32 %v2349, %v2349
        %v2370 = vmul.f32 %v2350, %v2350
        %v2371 = vmul.f32 %v2351, %v2351
        %v2372 = vmul.f32 %v2352, %v2352
        %v2373 = vmul.f32 %v2353, %v2353
        %v2374 = vmul.f32 %v2354, %v2354
        %v2375 = vmul.f32 %v2355, %v2355
        %v2376 = vmul.f32 %v2356, %v2356
        %v2377 = vmul.f32 %v2357, %v2357
        %v2378 = vmul.f32 %v2358, %v2358
        %v2379 = vmul.f32 %v2359, %v2359
        %v2380 = vmul.f32 %v2360, %v2360
        %v2381 = vmul.f32 %v2361, %v2361
        %v2382 = vmul.f32 %v2362, %v2362
        %v2383 = vsel %vm847, %v2363, 0.0
        %2384 = vadd.xlane.f32.xlu0 %v2383
        %v2385 = vpop.xlane.xlu0 %2384
        %v2386 = vsel %vm847, %v2364, 0.0
        %2387 = vadd.xlane.f32.xlu0 %v2386
        %v2388 = vpop.xlane.xlu0 %2387
        %v2389 = vsel %vm847, %v2365, 0.0
        %2390 = vadd.xlane.f32.xlu0 %v2389
        %v2391 = vpop.xlane.xlu0 %2390
        %v2392 = vsel %vm847, %v2366, 0.0
        %2393 = vadd.xlane.f32.xlu0 %v2392
        %v2394 = vpop.xlane.xlu0 %2393
        %v2395 = vsel %vm847, %v2367, 0.0
        %2396 = vadd.xlane.f32.xlu0 %v2395
        %v2397 = vpop.xlane.xlu0 %2396
        %v2398 = vsel %vm847, %v2368, 0.0
        %2399 = vadd.xlane.f32.xlu0 %v2398
        %v2400 = vpop.xlane.xlu0 %2399
        %v2401 = vsel %vm847, %v2369, 0.0
        %2402 = vadd.xlane.f32.xlu0 %v2401
        %v2403 = vpop.xlane.xlu0 %2402
        %v2404 = vsel %vm847, %v2370, 0.0
        %2405 = vadd.xlane.f32.xlu0 %v2404
        %v2406 = vpop.xlane.xlu0 %2405
        %v2407 = vsel %vm847, %v2371, 0.0
        %2408 = vadd.xlane.f32.xlu0 %v2407
        %v2409 = vpop.xlane.xlu0 %2408
        %v2410 = vsel %vm847, %v2372, 0.0
        %2411 = vadd.xlane.f32.xlu0 %v2410
        %v2412 = vpop.xlane.xlu0 %2411
        %v2413 = vsel %vm847, %v2373, 0.0
        %2414 = vadd.xlane.f32.xlu0 %v2413
        %v2415 = vpop.xlane.xlu0 %2414
        %v2416 = vsel %vm847, %v2374, 0.0
        %2417 = vadd.xlane.f32.xlu0 %v2416
        %v2418 = vpop.xlane.xlu0 %2417
        %v2419 = vsel %vm847, %v2375, 0.0
        %2420 = vadd.xlane.f32.xlu0 %v2419
        %v2421 = vpop.xlane.xlu0 %2420
        %v2422 = vsel %vm847, %v2376, 0.0
        %2423 = vadd.xlane.f32.xlu0 %v2422
        %v2424 = vpop.xlane.xlu0 %2423
        %v2425 = vsel %vm847, %v2377, 0.0
        %2426 = vadd.xlane.f32.xlu0 %v2425
        %v2427 = vpop.xlane.xlu0 %2426
        %v2428 = vsel %vm847, %v2378, 0.0
        %2429 = vadd.xlane.f32.xlu0 %v2428
        %v2430 = vpop.xlane.xlu0 %2429
        %v2431 = vsel %vm847, %v2379, 0.0
        %2432 = vadd.xlane.f32.xlu0 %v2431
        %v2433 = vpop.xlane.xlu0 %2432
        %v2434 = vsel %vm847, %v2380, 0.0
        %2435 = vadd.xlane.f32.xlu0 %v2434
        %v2436 = vpop.xlane.xlu0 %2435
        %v2437 = vsel %vm847, %v2381, 0.0
        %2438 = vadd.xlane.f32.xlu0 %v2437
        %v2439 = vpop.xlane.xlu0 %2438
        %v2440 = vsel %vm965, %v2382, 0.0
        %2441 = vadd.xlane.f32.xlu0 %v2440
        %v2442 = vpop.xlane.xlu0 %2441
        %v2443 = vmul.f32 %v2385, %v969
        %v2444 = vmul.f32 %v2388, %v969
        %v2445 = vmul.f32 %v2391, %v969
        %v2446 = vmul.f32 %v2394, %v969
        %v2447 = vmul.f32 %v2397, %v969
        %v2448 = vmul.f32 %v2400, %v969
        %v2449 = vmul.f32 %v2403, %v969
        %v2450 = vmul.f32 %v2406, %v969
        %v2451 = vmul.f32 %v2409, %v969
        %v2452 = vmul.f32 %v2412, %v969
        %v2453 = vmul.f32 %v2415, %v969
        %v2454 = vmul.f32 %v2418, %v969
        %v2455 = vmul.f32 %v2421, %v969
        %v2456 = vmul.f32 %v2424, %v969
        %v2457 = vmul.f32 %v2427, %v969
        %v2458 = vmul.f32 %v2430, %v969
        %v2459 = vmul.f32 %v2433, %v969
        %v2460 = vmul.f32 %v2436, %v969
        %v2461 = vmul.f32 %v2439, %v969
        %v2462 = vmul.f32 %v2442, %v969
        %v2463 = vadd.f32 %v2443, 1e-05
        %v2464 = vadd.f32 %v2444, 1e-05
        %v2465 = vadd.f32 %v2445, 1e-05
        %v2466 = vadd.f32 %v2446, 1e-05
        %v2467 = vadd.f32 %v2447, 1e-05
        %v2468 = vadd.f32 %v2448, 1e-05
        %v2469 = vadd.f32 %v2449, 1e-05
        %v2470 = vadd.f32 %v2450, 1e-05
        %v2471 = vadd.f32 %v2451, 1e-05
        %v2472 = vadd.f32 %v2452, 1e-05
        %v2473 = vadd.f32 %v2453, 1e-05
        %v2474 = vadd.f32 %v2454, 1e-05
        %v2475 = vadd.f32 %v2455, 1e-05
        %v2476 = vadd.f32 %v2456, 1e-05
        %v2477 = vadd.f32 %v2457, 1e-05
        %v2478 = vadd.f32 %v2458, 1e-05
        %v2479 = vadd.f32 %v2459, 1e-05
        %v2480 = vadd.f32 %v2460, 1e-05
        %v2481 = vadd.f32 %v2461, 1e-05
        %v2482 = vadd.f32 %v2462, 1e-05
        %v2483 = vrsqrt.pop %v2463
        %v2484 = vrsqrt.pop %v2464
        %v2485 = vrsqrt.pop %v2465
        %v2486 = vrsqrt.pop %v2466
        %v2487 = vrsqrt.pop %v2467
        %v2488 = vrsqrt.pop %v2468
        %v2489 = vrsqrt.pop %v2469
        %v2490 = vrsqrt.pop %v2470
        %v2491 = vrsqrt.pop %v2471
        %v2492 = vrsqrt.pop %v2472
        %v2493 = vrsqrt.pop %v2473
        %v2494 = vrsqrt.pop %v2474
        %v2495 = vrsqrt.pop %v2475
        %v2496 = vrsqrt.pop %v2476
        %v2497 = vrsqrt.pop %v2477
        %v2498 = vrsqrt.pop %v2478
        %v2499 = vrsqrt.pop %v2479
        %v2500 = vrsqrt.pop %v2480
        %v2501 = vrsqrt.pop %v2481
        %v2502 = vrsqrt.pop %v2482
        %v2503 = vmul.f32 %v2343, %v2483
        %v2504 = vmul.f32 %v2344, %v2484
        %v2505 = vmul.f32 %v2345, %v2485
        %v2506 = vmul.f32 %v2346, %v2486
        %v2507 = vmul.f32 %v2347, %v2487
        %v2508 = vmul.f32 %v2348, %v2488
        %v2509 = vmul.f32 %v2349, %v2489
        %v2510 = vmul.f32 %v2350, %v2490
        %v2511 = vmul.f32 %v2351, %v2491
        %v2512 = vmul.f32 %v2352, %v2492
        %v2513 = vmul.f32 %v2353, %v2493
        %v2514 = vmul.f32 %v2354, %v2494
        %v2515 = vmul.f32 %v2355, %v2495
        %v2516 = vmul.f32 %v2356, %v2496
        %v2517 = vmul.f32 %v2357, %v2497
        %v2518 = vmul.f32 %v2358, %v2498
        %v2519 = vmul.f32 %v2359, %v2499
        %v2520 = vmul.f32 %v2360, %v2500
        %v2521 = vmul.f32 %v2361, %v2501
        %v2522 = vmul.f32 %v2362, %v2502
        %v2523 = vlaneseq
        %v2524 = vshrl.u32 %v2523, 7
        %v2525 = vsub.s32 1, %v2524
        %v2526 = vrot.slane %v2032, %v2525
        %v2527 = vmul.f32 %v2503, %v2526
        %v2528 = vmul.f32 %v2504, %v2526
        %v2529 = vmul.f32 %v2505, %v2526
        %v2530 = vmul.f32 %v2506, %v2526
        %v2531 = vmul.f32 %v2507, %v2526
        %v2532 = vmul.f32 %v2508, %v2526
        %v2533 = vmul.f32 %v2509, %v2526
        %v2534 = vmul.f32 %v2510, %v2526
        %v2535 = vmul.f32 %v2511, %v2526
        %v2536 = vmul.f32 %v2512, %v2526
        %v2537 = vmul.f32 %v2513, %v2526
        %v2538 = vmul.f32 %v2514, %v2526
        %v2539 = vmul.f32 %v2515, %v2526
        %v2540 = vmul.f32 %v2516, %v2526
        %v2541 = vmul.f32 %v2517, %v2526
        %v2542 = vmul.f32 %v2518, %v2526
        %v2543 = vmul.f32 %v2519, %v2526
        %v2544 = vmul.f32 %v2520, %v2526
        %v2545 = vmul.f32 %v2521, %v2526
        %v2546 = vmul.f32 %v2522, %v2526
        %v2547 = vlaneseq
        %v2548 = vshrl.u32 %v2547, 7
        %v2549 = vsub.s32 2, %v2548
        %v2550 = vrot.slane %v2032, %v2549
        %v2551 = vadd.f32 %v2527, %v2550
        %v2552 = vadd.f32 %v2528, %v2550
        %v2553 = vadd.f32 %v2529, %v2550
        %v2554 = vadd.f32 %v2530, %v2550
        %v2555 = vadd.f32 %v2531, %v2550
        %v2556 = vadd.f32 %v2532, %v2550
        %v2557 = vadd.f32 %v2533, %v2550
        %v2558 = vadd.f32 %v2534, %v2550
        %v2559 = vadd.f32 %v2535, %v2550
        %v2560 = vadd.f32 %v2536, %v2550
        %v2561 = vadd.f32 %v2537, %v2550
        %v2562 = vadd.f32 %v2538, %v2550
        %v2563 = vadd.f32 %v2539, %v2550
        %v2564 = vadd.f32 %v2540, %v2550
        %v2565 = vadd.f32 %v2541, %v2550
        %v2566 = vadd.f32 %v2542, %v2550
        %v2567 = vadd.f32 %v2543, %v2550
        %v2568 = vadd.f32 %v2544, %v2550
        %v2569 = vadd.f32 %v2545, %v2550
        %v2570 = vadd.f32 %v2546, %v2550
        %v2571 = vmul.f32 %v2551, 0.5
        %v2572 = vmul.f32 %v2552, 0.5
        %v2573 = vmul.f32 %v2553, 0.5
        %v2574 = vmul.f32 %v2554, 0.5
        %v2575 = vmul.f32 %v2555, 0.5
        %v2576 = vmul.f32 %v2556, 0.5
        %v2577 = vmul.f32 %v2557, 0.5
        %v2578 = vmul.f32 %v2558, 0.5
        %v2579 = vmul.f32 %v2559, 0.5
        %v2580 = vmul.f32 %v2560, 0.5
        %v2581 = vmul.f32 %v2561, 0.5
        %v2582 = vmul.f32 %v2562, 0.5
        %v2583 = vmul.f32 %v2563, 0.5
        %v2584 = vmul.f32 %v2564, 0.5
        %v2585 = vmul.f32 %v2565, 0.5
        %v2586 = vmul.f32 %v2566, 0.5
        %v2587 = vmul.f32 %v2567, 0.5
        %v2588 = vmul.f32 %v2568, 0.5
        %v2589 = vmul.f32 %v2569, 0.5
        %v2590 = vmul.f32 %v2570, 0.5
        %v2591 = vmul.f32 %v2551, 0.70710677
        %v2592 = vmul.f32 %v2552, 0.70710677
        %v2593 = vmul.f32 %v2553, 0.70710677
        %v2594 = vmul.f32 %v2554, 0.70710677
        %v2595 = vmul.f32 %v2555, 0.70710677
        %v2596 = vmul.f32 %v2556, 0.70710677
        %v2597 = vmul.f32 %v2557, 0.70710677
        %v2598 = vmul.f32 %v2558, 0.70710677
        %v2599 = vmul.f32 %v2559, 0.70710677
        %v2600 = vmul.f32 %v2560, 0.70710677
        %v2601 = vmul.f32 %v2561, 0.70710677
        %v2602 = vmul.f32 %v2562, 0.70710677
        %v2603 = vmul.f32 %v2563, 0.70710677
        %v2604 = vmul.f32 %v2564, 0.70710677
        %v2605 = vmul.f32 %v2565, 0.70710677
        %v2606 = vmul.f32 %v2566, 0.70710677
        %v2607 = vmul.f32 %v2567, 0.70710677
        %v2608 = vmul.f32 %v2568, 0.70710677
        %v2609 = vmul.f32 %v2569, 0.70710677
        %v2610 = vmul.f32 %v2570, 0.70710677
        %v2611 = verf.f32.pop %v2591
        %v2612 = verf.f32.pop %v2592
        %v2613 = verf.f32.pop %v2593
        %v2614 = verf.f32.pop %v2594
        %v2615 = verf.f32.pop %v2595
        %v2616 = verf.f32.pop %v2596
        %v2617 = verf.f32.pop %v2597
        %v2618 = verf.f32.pop %v2598
        %v2619 = verf.f32.pop %v2599
        %v2620 = verf.f32.pop %v2600
        %v2621 = verf.f32.pop %v2601
        %v2622 = verf.f32.pop %v2602
        %v2623 = verf.f32.pop %v2603
        %v2624 = verf.f32.pop %v2604
        %v2625 = verf.f32.pop %v2605
        %v2626 = verf.f32.pop %v2606
        %v2627 = verf.f32.pop %v2607
        %v2628 = verf.f32.pop %v2608
        %v2629 = verf.f32.pop %v2609
        %v2630 = verf.f32.pop %v2610
        %v2631 = vadd.f32 %v2611, 1.0
        %v2632 = vadd.f32 %v2612, 1.0
        %v2633 = vadd.f32 %v2613, 1.0
        %v2634 = vadd.f32 %v2614, 1.0
        %v2635 = vadd.f32 %v2615, 1.0
        %v2636 = vadd.f32 %v2616, 1.0
        %v2637 = vadd.f32 %v2617, 1.0
        %v2638 = vadd.f32 %v2618, 1.0
        %v2639 = vadd.f32 %v2619, 1.0
        %v2640 = vadd.f32 %v2620, 1.0
        %v2641 = vadd.f32 %v2621, 1.0
        %v2642 = vadd.f32 %v2622, 1.0
        %v2643 = vadd.f32 %v2623, 1.0
        %v2644 = vadd.f32 %v2624, 1.0
        %v2645 = vadd.f32 %v2625, 1.0
        %v2646 = vadd.f32 %v2626, 1.0
        %v2647 = vadd.f32 %v2627, 1.0
        %v2648 = vadd.f32 %v2628, 1.0
        %v2649 = vadd.f32 %v2629, 1.0
        %v2650 = vadd.f32 %v2630, 1.0
        %v2651 = vmul.f32 %v2571, %v2631
        %v2652 = vmul.f32 %v2572, %v2632
        %v2653 = vmul.f32 %v2573, %v2633
        %v2654 = vmul.f32 %v2574, %v2634
        %v2655 = vmul.f32 %v2575, %v2635
        %v2656 = vmul.f32 %v2576, %v2636
        %v2657 = vmul.f32 %v2577, %v2637
        %v2658 = vmul.f32 %v2578, %v2638
        %v2659 = vmul.f32 %v2579, %v2639
        %v2660 = vmul.f32 %v2580, %v2640
        %v2661 = vmul.f32 %v2581, %v2641
        %v2662 = vmul.f32 %v2582, %v2642
        %v2663 = vmul.f32 %v2583, %v2643
        %v2664 = vmul.f32 %v2584, %v2644
        %v2665 = vmul.f32 %v2585, %v2645
        %v2666 = vmul.f32 %v2586, %v2646
        %v2667 = vmul.f32 %v2587, %v2647
        %v2668 = vmul.f32 %v2588, %v2648
        %v2669 = vmul.f32 %v2589, %v2649
        %v2670 = vmul.f32 %v2590, %v2650
        %2671 = vst.msk [vmem:[#allocation3] sm:$0xff] %vm847, %v2651
        %2672 = vst.msk [vmem:[#allocation3 + $0x8] sm:$0xff] %vm847, %v2652
        %2673 = vst.msk [vmem:[#allocation3 + $0x10] sm:$0xff] %vm847, %v2653
        %2674 = vst.msk [vmem:[#allocation3 + $0x18] sm:$0xff] %vm847, %v2654
        %2675 = vst.msk [vmem:[#allocation3 + $0x20] sm:$0xff] %vm847, %v2655
        %2676 = vst.msk [vmem:[#allocation3 + $0x28] sm:$0xff] %vm847, %v2656
        %2677 = vst.msk [vmem:[#allocation3 + $0x30] sm:$0xff] %vm847, %v2657
        %2678 = vst.msk [vmem:[#allocation3 + $0x38] sm:$0xff] %vm847, %v2658
        %2679 = vst.msk [vmem:[#allocation3 + $0x40] sm:$0xff] %vm847, %v2659
        %2680 = vst.msk [vmem:[#allocation3 + $0x48] sm:$0xff] %vm847, %v2660
        %2681 = vst.msk [vmem:[#allocation3 + $0x50] sm:$0xff] %vm847, %v2661
        %2682 = vst.msk [vmem:[#allocation3 + $0x58] sm:$0xff] %vm847, %v2662
        %2683 = vst.msk [vmem:[#allocation3 + $0x60] sm:$0xff] %vm847, %v2663
        %2684 = vst.msk [vmem:[#allocation3 + $0x68] sm:$0xff] %vm847, %v2664
        %2685 = vst.msk [vmem:[#allocation3 + $0x70] sm:$0xff] %vm847, %v2665
        %2686 = vst.msk [vmem:[#allocation3 + $0x78] sm:$0xff] %vm847, %v2666
        %2687 = vst.msk [vmem:[#allocation3 + $0x80] sm:$0xff] %vm847, %v2667
        %2688 = vst.msk [vmem:[#allocation3 + $0x88] sm:$0xff] %vm847, %v2668
        %2689 = vst.msk [vmem:[#allocation3 + $0x90] sm:$0xff] %vm847, %v2669
        %2690 = vst.msk [vmem:[#allocation3 + $0x98] sm:$0x7f] %vm965, %v2670
        %v2691 = vld [vmem:[#allocation3] ss:$2 sm:$0xff]
        %s2692 = scalar_lea.vmem [#allocation3], 16
        %v2693 = vld [vmem:[%s2692] ss:$2 sm:$0xff]
        %s2694 = scalar_lea.vmem [#allocation3], 32
        %v2695 = vld [vmem:[%s2694] ss:$2 sm:$0xff]
        %s2696 = scalar_lea.vmem [#allocation3], 48
        %v2697 = vld [vmem:[%s2696] ss:$2 sm:$0xff]
        %s2698 = scalar_lea.vmem [#allocation3], 64
        %v2699 = vld [vmem:[%s2698] ss:$2 sm:$0xff]
        %s2700 = scalar_lea.vmem [#allocation3], 80
        %v2701 = vld [vmem:[%s2700] ss:$2 sm:$0xff]
        %s2702 = scalar_lea.vmem [#allocation3], 96
        %v2703 = vld [vmem:[%s2702] ss:$2 sm:$0xff]
        %s2704 = scalar_lea.vmem [#allocation3], 112
        %v2705 = vld [vmem:[%s2704] ss:$2 sm:$0xff]
        %s2706 = scalar_lea.vmem [#allocation3], 128
        %v2707 = vld [vmem:[%s2706] ss:$2 sm:$0xff]
        %s2708 = scalar_lea.vmem [#allocation3], 144
        %v2709 = vld [vmem:[%s2708] ss:$2 sm:$0x7f]
        %s2710 = scalar_lea.vmem [#allocation3], 1
        %v2711 = vld [vmem:[%s2710] ss:$2 sm:$0xff]
        %s2712 = scalar_lea.vmem [#allocation3], 17
        %v2713 = vld [vmem:[%s2712] ss:$2 sm:$0xff]
        %s2714 = scalar_lea.vmem [#allocation3], 33
        %v2715 = vld [vmem:[%s2714] ss:$2 sm:$0xff]
        %s2716 = scalar_lea.vmem [#allocation3], 49
        %v2717 = vld [vmem:[%s2716] ss:$2 sm:$0xff]
        %s2718 = scalar_lea.vmem [#allocation3], 65
        %v2719 = vld [vmem:[%s2718] ss:$2 sm:$0xff]
        %s2720 = scalar_lea.vmem [#allocation3], 81
        %v2721 = vld [vmem:[%s2720] ss:$2 sm:$0xff]
        %s2722 = scalar_lea.vmem [#allocation3], 97
        %v2723 = vld [vmem:[%s2722] ss:$2 sm:$0xff]
        %s2724 = scalar_lea.vmem [#allocation3], 113
        %v2725 = vld [vmem:[%s2724] ss:$2 sm:$0xff]
        %s2726 = scalar_lea.vmem [#allocation3], 129
        %v2727 = vld [vmem:[%s2726] ss:$2 sm:$0xff]
        %s2728 = scalar_lea.vmem [#allocation3], 145
        %v2729 = vld [vmem:[%s2728] ss:$2 sm:$0x7f]
        %s2730 = scalar_lea.vmem [#allocation3], 2
        %v2731 = vld [vmem:[%s2730] ss:$2 sm:$0xff]
        %s2732 = scalar_lea.vmem [#allocation3], 18
        %v2733 = vld [vmem:[%s2732] ss:$2 sm:$0xff]
        %s2734 = scalar_lea.vmem [#allocation3], 34
        %v2735 = vld [vmem:[%s2734] ss:$2 sm:$0xff]
        %s2736 = scalar_lea.vmem [#allocation3], 50
        %v2737 = vld [vmem:[%s2736] ss:$2 sm:$0xff]
        %s2738 = scalar_lea.vmem [#allocation3], 66
        %v2739 = vld [vmem:[%s2738] ss:$2 sm:$0xff]
        %s2740 = scalar_lea.vmem [#allocation3], 82
        %v2741 = vld [vmem:[%s2740] ss:$2 sm:$0xff]
        %s2742 = scalar_lea.vmem [#allocation3], 98
        %v2743 = vld [vmem:[%s2742] ss:$2 sm:$0xff]
        %s2744 = scalar_lea.vmem [#allocation3], 114
        %v2745 = vld [vmem:[%s2744] ss:$2 sm:$0xff]
        %s2746 = scalar_lea.vmem [#allocation3], 130
        %v2747 = vld [vmem:[%s2746] ss:$2 sm:$0xff]
        %s2748 = scalar_lea.vmem [#allocation3], 146
        %v2749 = vld [vmem:[%s2748] ss:$2 sm:$0x7f]
        %2760 = vrot.lane.b32.xlu0 %v2711, 32
        %v2761 = vpop.permute.xlu0 %2760
        %2762 = vrot.lane.b32.xlu0 %v2713, 32
        %v2763 = vpop.permute.xlu0 %2762
        %2764 = vrot.lane.b32.xlu0 %v2715, 32
        %v2765 = vpop.permute.xlu0 %2764
        %2766 = vrot.lane.b32.xlu0 %v2717, 32
        %v2767 = vpop.permute.xlu0 %2766
        %2768 = vrot.lane.b32.xlu0 %v2719, 32
        %v2769 = vpop.permute.xlu0 %2768
        %2770 = vrot.lane.b32.xlu0 %v2721, 32
        %v2771 = vpop.permute.xlu0 %2770
        %2772 = vrot.lane.b32.xlu0 %v2723, 32
        %v2773 = vpop.permute.xlu0 %2772
        %2774 = vrot.lane.b32.xlu0 %v2725, 32
        %v2775 = vpop.permute.xlu0 %2774
        %2776 = vrot.lane.b32.xlu0 %v2727, 32
        %v2777 = vpop.permute.xlu0 %2776
        %2778 = vrot.lane.b32.xlu0 %v2729, 32
        %v2779 = vpop.permute.xlu0 %2778
        %2800 = vrot.lane.b32.xlu0 %v2731, 64
        %v2801 = vpop.permute.xlu0 %2800
        %2802 = vrot.lane.b32.xlu0 %v2733, 64
        %v2803 = vpop.permute.xlu0 %2802
        %2804 = vrot.lane.b32.xlu0 %v2735, 64
        %v2805 = vpop.permute.xlu0 %2804
        %2806 = vrot.lane.b32.xlu0 %v2737, 64
        %v2807 = vpop.permute.xlu0 %2806
        %2808 = vrot.lane.b32.xlu0 %v2739, 64
        %v2809 = vpop.permute.xlu0 %2808
        %2810 = vrot.lane.b32.xlu0 %v2741, 64
        %v2811 = vpop.permute.xlu0 %2810
        %2812 = vrot.lane.b32.xlu0 %v2743, 64
        %v2813 = vpop.permute.xlu0 %2812
        %2814 = vrot.lane.b32.xlu0 %v2745, 64
        %v2815 = vpop.permute.xlu0 %2814
        %2816 = vrot.lane.b32.xlu0 %v2747, 64
        %v2817 = vpop.permute.xlu0 %2816
        %2818 = vrot.lane.b32.xlu0 %v2749, 64
        %v2819 = vpop.permute.xlu0 %2818
        %v2830 = vsel %vm847, %v2691, %v2761
        %v2831 = vsel %vm847, %v2693, %v2763
        %v2832 = vsel %vm847, %v2695, %v2765
        %v2833 = vsel %vm847, %v2697, %v2767
        %v2834 = vsel %vm847, %v2699, %v2769
        %v2835 = vsel %vm847, %v2701, %v2771
        %v2836 = vsel %vm847, %v2703, %v2773
        %v2837 = vsel %vm847, %v2705, %v2775
        %v2838 = vsel %vm847, %v2707, %v2777
        %v2839 = vsel %vm847, %v2709, %v2779
        %v2840 = vsel %vm1997, %v2830, %v2801
        %v2841 = vsel %vm1997, %v2831, %v2803
        %v2842 = vsel %vm1997, %v2832, %v2805
        %v2843 = vsel %vm1997, %v2833, %v2807
        %v2844 = vsel %vm1997, %v2834, %v2809
        %v2845 = vsel %vm1997, %v2835, %v2811
        %v2846 = vsel %vm1997, %v2836, %v2813
        %v2847 = vsel %vm1997, %v2837, %v2815
        %v2848 = vsel %vm1997, %v2838, %v2817
        %v2849 = vsel %vm1997, %v2839, %v2819
        %s2850 = scalar_lea.vmem %s1, 192
        %v2851 = vld [vmem:[%s2850] sm:$0xff]
        %v2852 = vld [vmem:[%s2850 + $0x8] sm:$0xff]
        %v2853 = vld [vmem:[%s2850 + $0x10] sm:$0xff]
        %v2854 = vld [vmem:[%s2850 + $0x18] sm:$0xff]
        %v2855 = vld [vmem:[%s2850 + $0x20] sm:$0xff]
        %v2856 = vld [vmem:[%s2850 + $0x28] sm:$0xff]
        %v2857 = vld [vmem:[%s2850 + $0x30] sm:$0xff]
        %v2858 = vld [vmem:[%s2850 + $0x38] sm:$0xff]
        %v2859 = vld [vmem:[%s2850 + $0x40] sm:$0xff]
        %v2860 = vld [vmem:[%s2850 + $0x48] sm:$0xff]
        %v2861 = vld [vmem:[%s2850 + $0x50] sm:$0xff]
        %v2862 = vld [vmem:[%s2850 + $0x58] sm:$0xff]
        %s2863 = scalar_lea.vmem %s2, 8
        %v2864 = vld [vmem:[%s2863] sm:$0x7]
        %v2865 = vlaneseq
        %v2866 = vshrl.u32 %v2865, 7
        %v2867 = vsub.s32 0, %v2866
        %v2868 = vrot.slane %v2864, %v2867
        %v2870 = vsel %vm2037, %v2840, 0
        %v2873 = vsel %vm2037, %v2841, 0
        %v2876 = vsel %vm2037, %v2842, 0
        %v2879 = vsel %vm2037, %v2843, 0
        %v2882 = vsel %vm2037, %v2844, 0
        %v2885 = vsel %vm2037, %v2845, 0
        %v2888 = vsel %vm2037, %v2846, 0
        %v2891 = vsel %vm2037, %v2847, 0
        %v2894 = vsel %vm2037, %v2848, 0
        %v2897 = vsel %vm2037, %v2849, 0
        %2899 = vmatprep.subr.mxu0 0.0
        %2900 = vmatpush1.msra.mxu0 0.0
        %2901 = vmatprep.subr.mxu0 0.0
        %2902 = vmatpush1.msra.mxu0 0.0
        %2903 = vmatprep.subr.mxu0 0.0
        %2904 = vmatpush1.msra.mxu0 0.0
        %2905 = vmatprep.subr.mxu0 0.0
        %2906 = vmatpush1.msra.mxu0 0.0
        %2907 = vmatprep.subr.mxu0 0.0
        %2908 = vmatpush1.msra.mxu0 %v2862
        %2909 = vmatprep.subr.mxu0 0.0
        %2910 = vmatpush1.msra.mxu0 %v2861
        %2911 = vmatprep.subr.mxu0 0.0
        %2912 = vmatpush1.msra.mxu0 %v2860
        %2913 = vmatprep.subr.mxu0 0.0
        %2914 = vmatpush1.msra.mxu0 %v2859
        %2915 = vmatprep.subr.mxu0 0.0
        %2916 = vmatpush1.msra.mxu0 %v2858
        %2917 = vmatprep.subr.mxu0 0.0
        %2918 = vmatpush1.msra.mxu0 %v2857
        %2919 = vmatprep.subr.mxu0 0.0
        %2920 = vmatpush1.msra.mxu0 %v2856
        %2921 = vmatprep.subr.mxu0 0.0
        %2922 = vmatpush1.msra.mxu0 %v2855
        %2923 = vmatprep.subr.mxu0 0.0
        %2924 = vmatpush1.msra.mxu0 %v2854
        %2925 = vmatprep.subr.mxu0 0.0
        %2926 = vmatpush1.msra.mxu0 %v2853
        %2927 = vmatprep.subr.mxu0 0.0
        %2928 = vmatpush1.msra.mxu0 %v2852
        %2929 = vmatprep.subr.mxu0 0.0
        %2930 = vmatpush1.msra.mxu0 %v2851
        %2931 = vmatprep.subr.mxu0 0.0
        %2932 = vmatpush2.msra.mxu0 0.0
        %2933 = vmatprep.subr.mxu0 0.0
        %2934 = vmatpush2.msra.mxu0 0.0
        %2935 = vmatprep.subr.mxu0 0.0
        %2936 = vmatpush2.msra.mxu0 0.0
        %2937 = vmatprep.subr.mxu0 0.0
        %2938 = vmatpush2.msra.mxu0 0.0
        %2939 = vmatprep.subr.mxu0 0.0
        %2940 = vmatpush2.msra.mxu0 0.0
        %2941 = vmatprep.subr.mxu0 0.0
        %2942 = vmatpush2.msra.mxu0 0.0
        %2943 = vmatprep.subr.mxu0 0.0
        %2944 = vmatpush2.msra.mxu0 0.0
        %2945 = vmatprep.subr.mxu0 0.0
        %2946 = vmatpush2.msra.mxu0 0.0
        %2947 = vmatprep.subr.mxu0 0.0
        %2948 = vmatpush2.msra.mxu0 0.0
        %2949 = vmatprep.subr.mxu0 0.0
        %2950 = vmatpush2.msra.mxu0 0.0
        %2951 = vmatprep.subr.mxu0 0.0
        %2952 = vmatpush2.msra.mxu0 0.0
        %2953 = vmatprep.subr.mxu0 0.0
        %2954 = vmatpush2.msra.mxu0 0.0
        %2955 = vmatprep.subr.mxu0 0.0
        %2956 = vmatpush2.msra.mxu0 0.0
        %2957 = vmatprep.subr.mxu0 0.0
        %2958 = vmatpush2.msra.mxu0 0.0
        %2959 = vmatprep.subr.mxu0 0.0
        %2960 = vmatpush2.msra.mxu0 0.0
        %2961 = vmatprep.subr.mxu0 0.0
        %2962 = vmatpush2.msra.mxu0 0.0
        %2963 = vmatprep.mubr.f32.mxu0 0.0
        %2964 = vmatmul.mubr.f32.gmra.mxu0 %v2870
        %v2965 = vpop.f32.mrf.mxu0
        %v2966 = vadd.f32 %v2868, %v2965
        %v2967 = vpop.f32.mrf.mxu0
        %2968 = vmatprep.mubr.f32.mxu0 0.0
        %2969 = vmatmul.mubr.f32.gmra.mxu0 %v2873
        %v2970 = vpop.f32.mrf.mxu0
        %v2971 = vadd.f32 %v2868, %v2970
        %v2972 = vpop.f32.mrf.mxu0
        %2973 = vmatprep.mubr.f32.mxu0 0.0
        %2974 = vmatmul.mubr.f32.gmra.mxu0 %v2876
        %v2975 = vpop.f32.mrf.mxu0
        %v2976 = vadd.f32 %v2868, %v2975
        %v2977 = vpop.f32.mrf.mxu0
        %2978 = vmatprep.mubr.f32.mxu0 0.0
        %2979 = vmatmul.mubr.f32.gmra.mxu0 %v2879
        %v2980 = vpop.f32.mrf.mxu0
        %v2981 = vadd.f32 %v2868, %v2980
        %v2982 = vpop.f32.mrf.mxu0
        %2983 = vmatprep.mubr.f32.mxu0 0.0
        %2984 = vmatmul.mubr.f32.gmra.mxu0 %v2882
        %v2985 = vpop.f32.mrf.mxu0
        %v2986 = vadd.f32 %v2868, %v2985
        %v2987 = vpop.f32.mrf.mxu0
        %2988 = vmatprep.mubr.f32.mxu0 0.0
        %2989 = vmatmul.mubr.f32.gmra.mxu0 %v2885
        %v2990 = vpop.f32.mrf.mxu0
        %v2991 = vadd.f32 %v2868, %v2990
        %v2992 = vpop.f32.mrf.mxu0
        %2993 = vmatprep.mubr.f32.mxu0 0.0
        %2994 = vmatmul.mubr.f32.gmra.mxu0 %v2888
        %v2995 = vpop.f32.mrf.mxu0
        %v2996 = vadd.f32 %v2868, %v2995
        %v2997 = vpop.f32.mrf.mxu0
        %2998 = vmatprep.mubr.f32.mxu0 0.0
        %2999 = vmatmul.mubr.f32.gmra.mxu0 %v2891
        %v3000 = vpop.f32.mrf.mxu0
        %v3001 = vadd.f32 %v2868, %v3000
        %v3002 = vpop.f32.mrf.mxu0
        %3003 = vmatprep.mubr.f32.mxu0 0.0
        %3004 = vmatmul.mubr.f32.gmra.mxu0 %v2894
        %v3005 = vpop.f32.mrf.mxu0
        %v3006 = vadd.f32 %v2868, %v3005
        %v3007 = vpop.f32.mrf.mxu0
        %3008 = vmatprep.mubr.f32.mxu0 0.0
        %3009 = vmatmul.mubr.f32.gmra.mxu0 %v2897
        %v3010 = vpop.f32.mrf.mxu0
        %v3011 = vadd.f32 %v2868, %v3010
        %v3012 = vpop.f32.mrf.mxu0
        %3013 = vdwg.mxu0
        %v3014 = vsel %vm847, %v2966, 0.0
        %3015 = vadd.xlane.f32.xlu0 %v3014
        %v3016 = vpop.xlane.xlu0 %3015
        %v3017 = vsel %vm847, %v2971, 0.0
        %3018 = vadd.xlane.f32.xlu0 %v3017
        %v3019 = vpop.xlane.xlu0 %3018
        %v3020 = vsel %vm847, %v2976, 0.0
        %3021 = vadd.xlane.f32.xlu0 %v3020
        %v3022 = vpop.xlane.xlu0 %3021
        %v3023 = vsel %vm847, %v2981, 0.0
        %3024 = vadd.xlane.f32.xlu0 %v3023
        %v3025 = vpop.xlane.xlu0 %3024
        %v3026 = vsel %vm847, %v2986, 0.0
        %3027 = vadd.xlane.f32.xlu0 %v3026
        %v3028 = vpop.xlane.xlu0 %3027
        %v3029 = vsel %vm847, %v2991, 0.0
        %3030 = vadd.xlane.f32.xlu0 %v3029
        %v3031 = vpop.xlane.xlu0 %3030
        %v3032 = vsel %vm847, %v2996, 0.0
        %3033 = vadd.xlane.f32.xlu0 %v3032
        %v3034 = vpop.xlane.xlu0 %3033
        %v3035 = vsel %vm847, %v3001, 0.0
        %3036 = vadd.xlane.f32.xlu0 %v3035
        %v3037 = vpop.xlane.xlu0 %3036
        %v3038 = vsel %vm847, %v3006, 0.0
        %3039 = vadd.xlane.f32.xlu0 %v3038
        %v3040 = vpop.xlane.xlu0 %3039
        %v3041 = vsel %vm965, %v3011, 0.0
        %3042 = vadd.xlane.f32.xlu0 %v3041
        %v3043 = vpop.xlane.xlu0 %3042
        %v3044 = vmul.f32 %v3016, %v969
        %v3045 = vmul.f32 %v3019, %v969
        %v3046 = vmul.f32 %v3022, %v969
        %v3047 = vmul.f32 %v3025, %v969
        %v3048 = vmul.f32 %v3028, %v969
        %v3049 = vmul.f32 %v3031, %v969
        %v3050 = vmul.f32 %v3034, %v969
        %v3051 = vmul.f32 %v3037, %v969
        %v3052 = vmul.f32 %v3040, %v969
        %v3053 = vmul.f32 %v3043, %v969
        %v3054 = vsub.f32 %v2966, %v3044
        %v3055 = vsub.f32 %v2971, %v3045
        %v3056 = vsub.f32 %v2976, %v3046
        %v3057 = vsub.f32 %v2981, %v3047
        %v3058 = vsub.f32 %v2986, %v3048
        %v3059 = vsub.f32 %v2991, %v3049
        %v3060 = vsub.f32 %v2996, %v3050
        %v3061 = vsub.f32 %v3001, %v3051
        %v3062 = vsub.f32 %v3006, %v3052
        %v3063 = vsub.f32 %v3011, %v3053
        %v3064 = vmul.f32 %v3054, %v3054
        %v3065 = vmul.f32 %v3055, %v3055
        %v3066 = vmul.f32 %v3056, %v3056
        %v3067 = vmul.f32 %v3057, %v3057
        %v3068 = vmul.f32 %v3058, %v3058
        %v3069 = vmul.f32 %v3059, %v3059
        %v3070 = vmul.f32 %v3060, %v3060
        %v3071 = vmul.f32 %v3061, %v3061
        %v3072 = vmul.f32 %v3062, %v3062
        %v3073 = vmul.f32 %v3063, %v3063
        %v3074 = vsel %vm847, %v3064, 0.0
        %3075 = vadd.xlane.f32.xlu0 %v3074
        %v3076 = vpop.xlane.xlu0 %3075
        %v3077 = vsel %vm847, %v3065, 0.0
        %3078 = vadd.xlane.f32.xlu0 %v3077
        %v3079 = vpop.xlane.xlu0 %3078
        %v3080 = vsel %vm847, %v3066, 0.0
        %3081 = vadd.xlane.f32.xlu0 %v3080
        %v3082 = vpop.xlane.xlu0 %3081
        %v3083 = vsel %vm847, %v3067, 0.0
        %3084 = vadd.xlane.f32.xlu0 %v3083
        %v3085 = vpop.xlane.xlu0 %3084
        %v3086 = vsel %vm847, %v3068, 0.0
        %3087 = vadd.xlane.f32.xlu0 %v3086
        %v3088 = vpop.xlane.xlu0 %3087
        %v3089 = vsel %vm847, %v3069, 0.0
        %3090 = vadd.xlane.f32.xlu0 %v3089
        %v3091 = vpop.xlane.xlu0 %3090
        %v3092 = vsel %vm847, %v3070, 0.0
        %3093 = vadd.xlane.f32.xlu0 %v3092
        %v3094 = vpop.xlane.xlu0 %3093
        %v3095 = vsel %vm847, %v3071, 0.0
        %3096 = vadd.xlane.f32.xlu0 %v3095
        %v3097 = vpop.xlane.xlu0 %3096
        %v3098 = vsel %vm847, %v3072, 0.0
        %3099 = vadd.xlane.f32.xlu0 %v3098
        %v3100 = vpop.xlane.xlu0 %3099
        %v3101 = vsel %vm965, %v3073, 0.0
        %3102 = vadd.xlane.f32.xlu0 %v3101
        %v3103 = vpop.xlane.xlu0 %3102
        %v3104 = vmul.f32 %v3076, %v969
        %v3105 = vmul.f32 %v3079, %v969
        %v3106 = vmul.f32 %v3082, %v969
        %v3107 = vmul.f32 %v3085, %v969
        %v3108 = vmul.f32 %v3088, %v969
        %v3109 = vmul.f32 %v3091, %v969
        %v3110 = vmul.f32 %v3094, %v969
        %v3111 = vmul.f32 %v3097, %v969
        %v3112 = vmul.f32 %v3100, %v969
        %v3113 = vmul.f32 %v3103, %v969
        %v3114 = vadd.f32 %v3104, 1e-05
        %v3115 = vadd.f32 %v3105, 1e-05
        %v3116 = vadd.f32 %v3106, 1e-05
        %v3117 = vadd.f32 %v3107, 1e-05
        %v3118 = vadd.f32 %v3108, 1e-05
        %v3119 = vadd.f32 %v3109, 1e-05
        %v3120 = vadd.f32 %v3110, 1e-05
        %v3121 = vadd.f32 %v3111, 1e-05
        %v3122 = vadd.f32 %v3112, 1e-05
        %v3123 = vadd.f32 %v3113, 1e-05
        %v3124 = vrsqrt.pop %v3114
        %v3125 = vrsqrt.pop %v3115
        %v3126 = vrsqrt.pop %v3116
        %v3127 = vrsqrt.pop %v3117
        %v3128 = vrsqrt.pop %v3118
        %v3129 = vrsqrt.pop %v3119
        %v3130 = vrsqrt.pop %v3120
        %v3131 = vrsqrt.pop %v3121
        %v3132 = vrsqrt.pop %v3122
        %v3133 = vrsqrt.pop %v3123
        %v3134 = vmul.f32 %v3054, %v3124
        %v3135 = vmul.f32 %v3055, %v3125
        %v3136 = vmul.f32 %v3056, %v3126
        %v3137 = vmul.f32 %v3057, %v3127
        %v3138 = vmul.f32 %v3058, %v3128
        %v3139 = vmul.f32 %v3059, %v3129
        %v3140 = vmul.f32 %v3060, %v3130
        %v3141 = vmul.f32 %v3061, %v3131
        %v3142 = vmul.f32 %v3062, %v3132
        %v3143 = vmul.f32 %v3063, %v3133
        %v3144 = vlaneseq
        %v3145 = vshrl.u32 %v3144, 7
        %v3146 = vsub.s32 1, %v3145
        %v3147 = vrot.slane %v2864, %v3146
        %v3148 = vmul.f32 %v3134, %v3147
        %v3149 = vmul.f32 %v3135, %v3147
        %v3150 = vmul.f32 %v3136, %v3147
        %v3151 = vmul.f32 %v3137, %v3147
        %v3152 = vmul.f32 %v3138, %v3147
        %v3153 = vmul.f32 %v3139, %v3147
        %v3154 = vmul.f32 %v3140, %v3147
        %v3155 = vmul.f32 %v3141, %v3147
        %v3156 = vmul.f32 %v3142, %v3147
        %v3157 = vmul.f32 %v3143, %v3147
        %v3158 = vlaneseq
        %v3159 = vshrl.u32 %v3158, 7
        %v3160 = vsub.s32 2, %v3159
        %v3161 = vrot.slane %v2864, %v3160
        %v3162 = vadd.f32 %v3148, %v3161
        %v3163 = vadd.f32 %v3149, %v3161
        %v3164 = vadd.f32 %v3150, %v3161
        %v3165 = vadd.f32 %v3151, %v3161
        %v3166 = vadd.f32 %v3152, %v3161
        %v3167 = vadd.f32 %v3153, %v3161
        %v3168 = vadd.f32 %v3154, %v3161
        %v3169 = vadd.f32 %v3155, %v3161
        %v3170 = vadd.f32 %v3156, %v3161
        %v3171 = vadd.f32 %v3157, %v3161
        %v3172 = vmul.f32 %v3162, 0.5
        %v3173 = vmul.f32 %v3163, 0.5
        %v3174 = vmul.f32 %v3164, 0.5
        %v3175 = vmul.f32 %v3165, 0.5
        %v3176 = vmul.f32 %v3166, 0.5
        %v3177 = vmul.f32 %v3167, 0.5
        %v3178 = vmul.f32 %v3168, 0.5
        %v3179 = vmul.f32 %v3169, 0.5
        %v3180 = vmul.f32 %v3170, 0.5
        %v3181 = vmul.f32 %v3171, 0.5
        %v3182 = vmul.f32 %v3162, 0.70710677
        %v3183 = vmul.f32 %v3163, 0.70710677
        %v3184 = vmul.f32 %v3164, 0.70710677
        %v3185 = vmul.f32 %v3165, 0.70710677
        %v3186 = vmul.f32 %v3166, 0.70710677
        %v3187 = vmul.f32 %v3167, 0.70710677
        %v3188 = vmul.f32 %v3168, 0.70710677
        %v3189 = vmul.f32 %v3169, 0.70710677
        %v3190 = vmul.f32 %v3170, 0.70710677
        %v3191 = vmul.f32 %v3171, 0.70710677
        %v3192 = verf.f32.pop %v3182
        %v3193 = verf.f32.pop %v3183
        %v3194 = verf.f32.pop %v3184
        %v3195 = verf.f32.pop %v3185
        %v3196 = verf.f32.pop %v3186
        %v3197 = verf.f32.pop %v3187
        %v3198 = verf.f32.pop %v3188
        %v3199 = verf.f32.pop %v3189
        %v3200 = verf.f32.pop %v3190
        %v3201 = verf.f32.pop %v3191
        %v3202 = vadd.f32 %v3192, 1.0
        %v3203 = vadd.f32 %v3193, 1.0
        %v3204 = vadd.f32 %v3194, 1.0
        %v3205 = vadd.f32 %v3195, 1.0
        %v3206 = vadd.f32 %v3196, 1.0
        %v3207 = vadd.f32 %v3197, 1.0
        %v3208 = vadd.f32 %v3198, 1.0
        %v3209 = vadd.f32 %v3199, 1.0
        %v3210 = vadd.f32 %v3200, 1.0
        %v3211 = vadd.f32 %v3201, 1.0
        %v3212 = vmul.f32 %v3172, %v3202
        %v3213 = vmul.f32 %v3173, %v3203
        %v3214 = vmul.f32 %v3174, %v3204
        %v3215 = vmul.f32 %v3175, %v3205
        %v3216 = vmul.f32 %v3176, %v3206
        %v3217 = vmul.f32 %v3177, %v3207
        %v3218 = vmul.f32 %v3178, %v3208
        %v3219 = vmul.f32 %v3179, %v3209
        %v3220 = vmul.f32 %v3180, %v3210
        %v3221 = vmul.f32 %v3181, %v3211
        %3222 = vst.msk [vmem:[#allocation2] sm:$0xff] %vm847, %v3212
        %3223 = vst.msk [vmem:[#allocation2 + $0x8] sm:$0xff] %vm847, %v3213
        %3224 = vst.msk [vmem:[#allocation2 + $0x10] sm:$0xff] %vm847, %v3214
        %3225 = vst.msk [vmem:[#allocation2 + $0x18] sm:$0xff] %vm847, %v3215
        %3226 = vst.msk [vmem:[#allocation2 + $0x20] sm:$0xff] %vm847, %v3216
        %3227 = vst.msk [vmem:[#allocation2 + $0x28] sm:$0xff] %vm847, %v3217
        %3228 = vst.msk [vmem:[#allocation2 + $0x30] sm:$0xff] %vm847, %v3218
        %3229 = vst.msk [vmem:[#allocation2 + $0x38] sm:$0xff] %vm847, %v3219
        %3230 = vst.msk [vmem:[#allocation2 + $0x40] sm:$0xff] %vm847, %v3220
        %3231 = vst.msk [vmem:[#allocation2 + $0x48] sm:$0x7f] %vm965, %v3221
        %v3232 = vld [vmem:[#allocation2] ss:$2 sm:$0xff]
        %v3233 = vld [vmem:[%s1699] ss:$2 sm:$0xff]
        %v3234 = vld [vmem:[%s1701] ss:$2 sm:$0xff]
        %v3235 = vld [vmem:[%s1703] ss:$2 sm:$0xff]
        %v3236 = vld [vmem:[%s1705] ss:$2 sm:$0x7f]
        %v3237 = vld [vmem:[%s1737] ss:$2 sm:$0xff]
        %v3238 = vld [vmem:[%s1739] ss:$2 sm:$0xff]
        %v3239 = vld [vmem:[%s1741] ss:$2 sm:$0xff]
        %v3240 = vld [vmem:[%s1743] ss:$2 sm:$0xff]
        %v3241 = vld [vmem:[%s1745] ss:$2 sm:$0x7f]
        %v3242 = vld [vmem:[%s1777] ss:$2 sm:$0xff]
        %v3243 = vld [vmem:[%s1779] ss:$2 sm:$0xff]
        %v3244 = vld [vmem:[%s1781] ss:$2 sm:$0xff]
        %v3245 = vld [vmem:[%s1783] ss:$2 sm:$0xff]
        %v3246 = vld [vmem:[%s1785] ss:$2 sm:$0x7f]
        %3252 = vrot.lane.b32.xlu0 %v3237, 32
        %v3253 = vpop.permute.xlu0 %3252
        %3254 = vrot.lane.b32.xlu0 %v3238, 32
        %v3255 = vpop.permute.xlu0 %3254
        %3256 = vrot.lane.b32.xlu0 %v3239, 32
        %v3257 = vpop.permute.xlu0 %3256
        %3258 = vrot.lane.b32.xlu0 %v3240, 32
        %v3259 = vpop.permute.xlu0 %3258
        %3260 = vrot.lane.b32.xlu0 %v3241, 32
        %v3261 = vpop.permute.xlu0 %3260
        %3272 = vrot.lane.b32.xlu0 %v3242, 64
        %v3273 = vpop.permute.xlu0 %3272
        %3274 = vrot.lane.b32.xlu0 %v3243, 64
        %v3275 = vpop.permute.xlu0 %3274
        %3276 = vrot.lane.b32.xlu0 %v3244, 64
        %v3277 = vpop.permute.xlu0 %3276
        %3278 = vrot.lane.b32.xlu0 %v3245, 64
        %v3279 = vpop.permute.xlu0 %3278
        %3280 = vrot.lane.b32.xlu0 %v3246, 64
        %v3281 = vpop.permute.xlu0 %3280
        %v3287 = vsel %vm847, %v3232, %v3253
        %v3288 = vsel %vm847, %v3233, %v3255
        %v3289 = vsel %vm847, %v3234, %v3257
        %v3290 = vsel %vm847, %v3235, %v3259
        %v3291 = vsel %vm847, %v3236, %v3261
        %v3292 = vsel %vm1997, %v3287, %v3273
        %v3293 = vsel %vm1997, %v3288, %v3275
        %v3294 = vsel %vm1997, %v3289, %v3277
        %v3295 = vsel %vm1997, %v3290, %v3279
        %v3296 = vsel %vm1997, %v3291, %v3281
        %s3297 = scalar_lea.vmem %s1, 288
        %v3298 = vld [vmem:[%s3297] sm:$0xff]
        %v3299 = vld [vmem:[%s3297 + $0x8] sm:$0xff]
        %v3300 = vld [vmem:[%s3297 + $0x10] sm:$0xff]
        %v3301 = vld [vmem:[%s3297 + $0x18] sm:$0xff]
        %v3302 = vld [vmem:[%s3297 + $0x20] sm:$0xff]
        %v3303 = vld [vmem:[%s3297 + $0x28] sm:$0xff]
        %v3304 = vld [vmem:[%s3297 + $0x30] sm:$0xff]
        %v3305 = vld [vmem:[%s3297 + $0x38] sm:$0xff]
        %v3306 = vld [vmem:[%s3297 + $0x40] sm:$0xff]
        %v3307 = vld [vmem:[%s3297 + $0x48] sm:$0xff]
        %v3308 = vld [vmem:[%s3297 + $0x50] sm:$0xff]
        %v3309 = vld [vmem:[%s3297 + $0x58] sm:$0xff]
        %s3310 = scalar_lea.vmem %s2, 12
        %v3311 = vld [vmem:[%s3310] sm:$0x7]
        %v3312 = vlaneseq
        %v3313 = vshrl.u32 %v3312, 7
        %v3314 = vsub.s32 0, %v3313
        %v3315 = vrot.slane %v3311, %v3314
        %v3317 = vsel %vm2037, %v3292, 0
        %v3320 = vsel %vm2037, %v3293, 0
        %v3323 = vsel %vm2037, %v3294, 0
        %v3326 = vsel %vm2037, %v3295, 0
        %v3329 = vsel %vm2037, %v3296, 0
        %3331 = vmatprep.subr.mxu0 0.0
        %3332 = vmatpush1.msra.mxu0 0.0
        %3333 = vmatprep.subr.mxu0 0.0
        %3334 = vmatpush1.msra.mxu0 0.0
        %3335 = vmatprep.subr.mxu0 0.0
        %3336 = vmatpush1.msra.mxu0 0.0
        %3337 = vmatprep.subr.mxu0 0.0
        %3338 = vmatpush1.msra.mxu0 0.0
        %3339 = vmatprep.subr.mxu0 0.0
        %3340 = vmatpush1.msra.mxu0 %v3309
        %3341 = vmatprep.subr.mxu0 0.0
        %3342 = vmatpush1.msra.mxu0 %v3308
        %3343 = vmatprep.subr.mxu0 0.0
        %3344 = vmatpush1.msra.mxu0 %v3307
        %3345 = vmatprep.subr.mxu0 0.0
        %3346 = vmatpush1.msra.mxu0 %v3306
        %3347 = vmatprep.subr.mxu0 0.0
        %3348 = vmatpush1.msra.mxu0 %v3305
        %3349 = vmatprep.subr.mxu0 0.0
        %3350 = vmatpush1.msra.mxu0 %v3304
        %3351 = vmatprep.subr.mxu0 0.0
        %3352 = vmatpush1.msra.mxu0 %v3303
        %3353 = vmatprep.subr.mxu0 0.0
        %3354 = vmatpush1.msra.mxu0 %v3302
        %3355 = vmatprep.subr.mxu0 0.0
        %3356 = vmatpush1.msra.mxu0 %v3301
        %3357 = vmatprep.subr.mxu0 0.0
        %3358 = vmatpush1.msra.mxu0 %v3300
        %3359 = vmatprep.subr.mxu0 0.0
        %3360 = vmatpush1.msra.mxu0 %v3299
        %3361 = vmatprep.subr.mxu0 0.0
        %3362 = vmatpush1.msra.mxu0 %v3298
        %3363 = vmatprep.subr.mxu0 0.0
        %3364 = vmatpush2.msra.mxu0 0.0
        %3365 = vmatprep.subr.mxu0 0.0
        %3366 = vmatpush2.msra.mxu0 0.0
        %3367 = vmatprep.subr.mxu0 0.0
        %3368 = vmatpush2.msra.mxu0 0.0
        %3369 = vmatprep.subr.mxu0 0.0
        %3370 = vmatpush2.msra.mxu0 0.0
        %3371 = vmatprep.subr.mxu0 0.0
        %3372 = vmatpush2.msra.mxu0 0.0
        %3373 = vmatprep.subr.mxu0 0.0
        %3374 = vmatpush2.msra.mxu0 0.0
        %3375 = vmatprep.subr.mxu0 0.0
        %3376 = vmatpush2.msra.mxu0 0.0
        %3377 = vmatprep.subr.mxu0 0.0
        %3378 = vmatpush2.msra.mxu0 0.0
        %3379 = vmatprep.subr.mxu0 0.0
        %3380 = vmatpush2.msra.mxu0 0.0
        %3381 = vmatprep.subr.mxu0 0.0
        %3382 = vmatpush2.msra.mxu0 0.0
        %3383 = vmatprep.subr.mxu0 0.0
        %3384 = vmatpush2.msra.mxu0 0.0
        %3385 = vmatprep.subr.mxu0 0.0
        %3386 = vmatpush2.msra.mxu0 0.0
        %3387 = vmatprep.subr.mxu0 0.0
        %3388 = vmatpush2.msra.mxu0 0.0
        %3389 = vmatprep.subr.mxu0 0.0
        %3390 = vmatpush2.msra.mxu0 0.0
        %3391 = vmatprep.subr.mxu0 0.0
        %3392 = vmatpush2.msra.mxu0 0.0
        %3393 = vmatprep.subr.mxu0 0.0
        %3394 = vmatpush2.msra.mxu0 0.0
        %3395 = vmatprep.mubr.f32.mxu0 0.0
        %3396 = vmatmul.mubr.f32.gmra.mxu0 %v3317
        %v3397 = vpop.f32.mrf.mxu0
        %v3398 = vadd.f32 %v3315, %v3397
        %v3399 = vpop.f32.mrf.mxu0
        %3400 = vmatprep.mubr.f32.mxu0 0.0
        %3401 = vmatmul.mubr.f32.gmra.mxu0 %v3320
        %v3402 = vpop.f32.mrf.mxu0
        %v3403 = vadd.f32 %v3315, %v3402
        %v3404 = vpop.f32.mrf.mxu0
        %3405 = vmatprep.mubr.f32.mxu0 0.0
        %3406 = vmatmul.mubr.f32.gmra.mxu0 %v3323
        %v3407 = vpop.f32.mrf.mxu0
        %v3408 = vadd.f32 %v3315, %v3407
        %v3409 = vpop.f32.mrf.mxu0
        %3410 = vmatprep.mubr.f32.mxu0 0.0
        %3411 = vmatmul.mubr.f32.gmra.mxu0 %v3326
        %v3412 = vpop.f32.mrf.mxu0
        %v3413 = vadd.f32 %v3315, %v3412
        %v3414 = vpop.f32.mrf.mxu0
        %3415 = vmatprep.mubr.f32.mxu0 0.0
        %3416 = vmatmul.mubr.f32.gmra.mxu0 %v3329
        %v3417 = vpop.f32.mrf.mxu0
        %v3418 = vadd.f32 %v3315, %v3417
        %v3419 = vpop.f32.mrf.mxu0
        %3420 = vdwg.mxu0
        %v3421 = vsel %vm847, %v3398, 0.0
        %3422 = vadd.xlane.f32.xlu0 %v3421
        %v3423 = vpop.xlane.xlu0 %3422
        %v3424 = vsel %vm847, %v3403, 0.0
        %3425 = vadd.xlane.f32.xlu0 %v3424
        %v3426 = vpop.xlane.xlu0 %3425
        %v3427 = vsel %vm847, %v3408, 0.0
        %3428 = vadd.xlane.f32.xlu0 %v3427
        %v3429 = vpop.xlane.xlu0 %3428
        %v3430 = vsel %vm847, %v3413, 0.0
        %3431 = vadd.xlane.f32.xlu0 %v3430
        %v3432 = vpop.xlane.xlu0 %3431
        %v3433 = vsel %vm965, %v3418, 0.0
        %3434 = vadd.xlane.f32.xlu0 %v3433
        %v3435 = vpop.xlane.xlu0 %3434
        %v3436 = vmul.f32 %v3423, %v969
        %v3437 = vmul.f32 %v3426, %v969
        %v3438 = vmul.f32 %v3429, %v969
        %v3439 = vmul.f32 %v3432, %v969
        %v3440 = vmul.f32 %v3435, %v969
        %v3441 = vsub.f32 %v3398, %v3436
        %v3442 = vsub.f32 %v3403, %v3437
        %v3443 = vsub.f32 %v3408, %v3438
        %v3444 = vsub.f32 %v3413, %v3439
        %v3445 = vsub.f32 %v3418, %v3440
        %v3446 = vmul.f32 %v3441, %v3441
        %v3447 = vmul.f32 %v3442, %v3442
        %v3448 = vmul.f32 %v3443, %v3443
        %v3449 = vmul.f32 %v3444, %v3444
        %v3450 = vmul.f32 %v3445, %v3445
        %v3451 = vsel %vm847, %v3446, 0.0
        %3452 = vadd.xlane.f32.xlu0 %v3451
        %v3453 = vpop.xlane.xlu0 %3452
        %v3454 = vsel %vm847, %v3447, 0.0
        %3455 = vadd.xlane.f32.xlu0 %v3454
        %v3456 = vpop.xlane.xlu0 %3455
        %v3457 = vsel %vm847, %v3448, 0.0
        %3458 = vadd.xlane.f32.xlu0 %v3457
        %v3459 = vpop.xlane.xlu0 %3458
        %v3460 = vsel %vm847, %v3449, 0.0
        %3461 = vadd.xlane.f32.xlu0 %v3460
        %v3462 = vpop.xlane.xlu0 %3461
        %v3463 = vsel %vm965, %v3450, 0.0
        %3464 = vadd.xlane.f32.xlu0 %v3463
        %v3465 = vpop.xlane.xlu0 %3464
        %v3466 = vmul.f32 %v3453, %v969
        %v3467 = vmul.f32 %v3456, %v969
        %v3468 = vmul.f32 %v3459, %v969
        %v3469 = vmul.f32 %v3462, %v969
        %v3470 = vmul.f32 %v3465, %v969
        %v3471 = vadd.f32 %v3466, 1e-05
        %v3472 = vadd.f32 %v3467, 1e-05
        %v3473 = vadd.f32 %v3468, 1e-05
        %v3474 = vadd.f32 %v3469, 1e-05
        %v3475 = vadd.f32 %v3470, 1e-05
        %v3476 = vrsqrt.pop %v3471
        %v3477 = vrsqrt.pop %v3472
        %v3478 = vrsqrt.pop %v3473
        %v3479 = vrsqrt.pop %v3474
        %v3480 = vrsqrt.pop %v3475
        %v3481 = vmul.f32 %v3441, %v3476
        %v3482 = vmul.f32 %v3442, %v3477
        %v3483 = vmul.f32 %v3443, %v3478
        %v3484 = vmul.f32 %v3444, %v3479
        %v3485 = vmul.f32 %v3445, %v3480
        %v3486 = vlaneseq
        %v3487 = vshrl.u32 %v3486, 7
        %v3488 = vsub.s32 1, %v3487
        %v3489 = vrot.slane %v3311, %v3488
        %v3490 = vmul.f32 %v3481, %v3489
        %v3491 = vmul.f32 %v3482, %v3489
        %v3492 = vmul.f32 %v3483, %v3489
        %v3493 = vmul.f32 %v3484, %v3489
        %v3494 = vmul.f32 %v3485, %v3489
        %v3495 = vlaneseq
        %v3496 = vshrl.u32 %v3495, 7
        %v3497 = vsub.s32 2, %v3496
        %v3498 = vrot.slane %v3311, %v3497
        %v3499 = vadd.f32 %v3490, %v3498
        %v3500 = vadd.f32 %v3491, %v3498
        %v3501 = vadd.f32 %v3492, %v3498
        %v3502 = vadd.f32 %v3493, %v3498
        %v3503 = vadd.f32 %v3494, %v3498
        %v3504 = vmul.f32 %v3499, 0.5
        %v3505 = vmul.f32 %v3500, 0.5
        %v3506 = vmul.f32 %v3501, 0.5
        %v3507 = vmul.f32 %v3502, 0.5
        %v3508 = vmul.f32 %v3503, 0.5
        %v3509 = vmul.f32 %v3499, 0.70710677
        %v3510 = vmul.f32 %v3500, 0.70710677
        %v3511 = vmul.f32 %v3501, 0.70710677
        %v3512 = vmul.f32 %v3502, 0.70710677
        %v3513 = vmul.f32 %v3503, 0.70710677
        %v3514 = verf.f32.pop %v3509
        %v3515 = verf.f32.pop %v3510
        %v3516 = verf.f32.pop %v3511
        %v3517 = verf.f32.pop %v3512
        %v3518 = verf.f32.pop %v3513
        %v3519 = vadd.f32 %v3514, 1.0
        %v3520 = vadd.f32 %v3515, 1.0
        %v3521 = vadd.f32 %v3516, 1.0
        %v3522 = vadd.f32 %v3517, 1.0
        %v3523 = vadd.f32 %v3518, 1.0
        %v3524 = vmul.f32 %v3504, %v3519
        %v3525 = vmul.f32 %v3505, %v3520
        %v3526 = vmul.f32 %v3506, %v3521
        %v3527 = vmul.f32 %v3507, %v3522
        %v3528 = vmul.f32 %v3508, %v3523
        %3529 = vst.msk [vmem:[#allocation3] sm:$0xff] %vm847, %v3524
        %3530 = vst.msk [vmem:[#allocation3 + $0x8] sm:$0xff] %vm847, %v3525
        %3531 = vst.msk [vmem:[#allocation3 + $0x10] sm:$0xff] %vm847, %v3526
        %3532 = vst.msk [vmem:[#allocation3 + $0x18] sm:$0xff] %vm847, %v3527
        %3533 = vst.msk [vmem:[#allocation3 + $0x20] sm:$0x7f] %vm965, %v3528
        %v3534 = vld [vmem:[#allocation3] ss:$2 sm:$0xff]
        %v3535 = vld [vmem:[%s2692] ss:$2 sm:$0xff]
        %v3536 = vld [vmem:[%s2694] ss:$2 sm:$0x7]
        %v3537 = vld [vmem:[%s2710] ss:$2 sm:$0xff]
        %v3538 = vld [vmem:[%s2712] ss:$2 sm:$0xff]
        %v3539 = vld [vmem:[%s2714] ss:$2 sm:$0x7]
        %v3540 = vld [vmem:[%s2730] ss:$2 sm:$0xff]
        %v3541 = vld [vmem:[%s2732] ss:$2 sm:$0xff]
        %v3542 = vld [vmem:[%s2734] ss:$2 sm:$0x7]
        %3546 = vrot.lane.b32.xlu0 %v3537, 32
        %v3547 = vpop.permute.xlu0 %3546
        %3548 = vrot.lane.b32.xlu0 %v3538, 32
        %v3549 = vpop.permute.xlu0 %3548
        %3550 = vrot.lane.b32.xlu0 %v3539, 32
        %v3551 = vpop.permute.xlu0 %3550
        %3558 = vrot.lane.b32.xlu0 %v3540, 64
        %v3559 = vpop.permute.xlu0 %3558
        %3560 = vrot.lane.b32.xlu0 %v3541, 64
        %v3561 = vpop.permute.xlu0 %3560
        %3562 = vrot.lane.b32.xlu0 %v3542, 64
        %v3563 = vpop.permute.xlu0 %3562
        %v3567 = vsel %vm847, %v3534, %v3547
        %v3568 = vsel %vm847, %v3535, %v3549
        %v3569 = vsel %vm847, %v3536, %v3551
        %v3570 = vsel %vm1997, %v3567, %v3559
        %v3571 = vsel %vm1997, %v3568, %v3561
        %v3572 = vsel %vm1997, %v3569, %v3563
        %s3573 = scalar_lea.vmem %s1, 384
        %v3574 = vld [vmem:[%s3573] sm:$0xff]
        %v3575 = vld [vmem:[%s3573 + $0x8] sm:$0xff]
        %v3576 = vld [vmem:[%s3573 + $0x10] sm:$0xff]
        %v3577 = vld [vmem:[%s3573 + $0x18] sm:$0xff]
        %v3578 = vld [vmem:[%s3573 + $0x20] sm:$0xff]
        %v3579 = vld [vmem:[%s3573 + $0x28] sm:$0xff]
        %v3580 = vld [vmem:[%s3573 + $0x30] sm:$0xff]
        %v3581 = vld [vmem:[%s3573 + $0x38] sm:$0xff]
        %v3582 = vld [vmem:[%s3573 + $0x40] sm:$0xff]
        %v3583 = vld [vmem:[%s3573 + $0x48] sm:$0xff]
        %v3584 = vld [vmem:[%s3573 + $0x50] sm:$0xff]
        %v3585 = vld [vmem:[%s3573 + $0x58] sm:$0xff]
        %s3586 = scalar_lea.vmem %s2, 16
        %v3587 = vld [vmem:[%s3586] sm:$0x7]
        %v3588 = vlaneseq
        %v3589 = vshrl.u32 %v3588, 7
        %v3590 = vsub.s32 0, %v3589
        %v3591 = vrot.slane %v3587, %v3590
        %v3593 = vsel %vm2037, %v3570, 0
        %v3596 = vsel %vm2037, %v3571, 0
        %v3599 = vsel %vm2037, %v3572, 0
        %3601 = vmatprep.subr.mxu0 0.0
        %3602 = vmatpush1.msra.mxu0 0.0
        %3603 = vmatprep.subr.mxu0 0.0
        %3604 = vmatpush1.msra.mxu0 0.0
        %3605 = vmatprep.subr.mxu0 0.0
        %3606 = vmatpush1.msra.mxu0 0.0
        %3607 = vmatprep.subr.mxu0 0.0
        %3608 = vmatpush1.msra.mxu0 0.0
        %3609 = vmatprep.subr.mxu0 0.0
        %3610 = vmatpush1.msra.mxu0 %v3585
        %3611 = vmatprep.subr.mxu0 0.0
        %3612 = vmatpush1.msra.mxu0 %v3584
        %3613 = vmatprep.subr.mxu0 0.0
        %3614 = vmatpush1.msra.mxu0 %v3583
        %3615 = vmatprep.subr.mxu0 0.0
        %3616 = vmatpush1.msra.mxu0 %v3582
        %3617 = vmatprep.subr.mxu0 0.0
        %3618 = vmatpush1.msra.mxu0 %v3581
        %3619 = vmatprep.subr.mxu0 0.0
        %3620 = vmatpush1.msra.mxu0 %v3580
        %3621 = vmatprep.subr.mxu0 0.0
        %3622 = vmatpush1.msra.mxu0 %v3579
        %3623 = vmatprep.subr.mxu0 0.0
        %3624 = vmatpush1.msra.mxu0 %v3578
        %3625 = vmatprep.subr.mxu0 0.0
        %3626 = vmatpush1.msra.mxu0 %v3577
        %3627 = vmatprep.subr.mxu0 0.0
        %3628 = vmatpush1.msra.mxu0 %v3576
        %3629 = vmatprep.subr.mxu0 0.0
        %3630 = vmatpush1.msra.mxu0 %v3575
        %3631 = vmatprep.subr.mxu0 0.0
        %3632 = vmatpush1.msra.mxu0 %v3574
        %3633 = vmatprep.subr.mxu0 0.0
        %3634 = vmatpush2.msra.mxu0 0.0
        %3635 = vmatprep.subr.mxu0 0.0
        %3636 = vmatpush2.msra.mxu0 0.0
        %3637 = vmatprep.subr.mxu0 0.0
        %3638 = vmatpush2.msra.mxu0 0.0
        %3639 = vmatprep.subr.mxu0 0.0
        %3640 = vmatpush2.msra.mxu0 0.0
        %3641 = vmatprep.subr.mxu0 0.0
        %3642 = vmatpush2.msra.mxu0 0.0
        %3643 = vmatprep.subr.mxu0 0.0
        %3644 = vmatpush2.msra.mxu0 0.0
        %3645 = vmatprep.subr.mxu0 0.0
        %3646 = vmatpush2.msra.mxu0 0.0
        %3647 = vmatprep.subr.mxu0 0.0
        %3648 = vmatpush2.msra.mxu0 0.0
        %3649 = vmatprep.subr.mxu0 0.0
        %3650 = vmatpush2.msra.mxu0 0.0
        %3651 = vmatprep.subr.mxu0 0.0
        %3652 = vmatpush2.msra.mxu0 0.0
        %3653 = vmatprep.subr.mxu0 0.0
        %3654 = vmatpush2.msra.mxu0 0.0
        %3655 = vmatprep.subr.mxu0 0.0
        %3656 = vmatpush2.msra.mxu0 0.0
        %3657 = vmatprep.subr.mxu0 0.0
        %3658 = vmatpush2.msra.mxu0 0.0
        %3659 = vmatprep.subr.mxu0 0.0
        %3660 = vmatpush2.msra.mxu0 0.0
        %3661 = vmatprep.subr.mxu0 0.0
        %3662 = vmatpush2.msra.mxu0 0.0
        %3663 = vmatprep.subr.mxu0 0.0
        %3664 = vmatpush2.msra.mxu0 0.0
        %3665 = vmatprep.mubr.f32.mxu0 0.0
        %3666 = vmatmul.mubr.f32.gmra.mxu0 %v3593
        %v3667 = vpop.f32.mrf.mxu0
        %v3668 = vadd.f32 %v3591, %v3667
        %v3669 = vpop.f32.mrf.mxu0
        %3670 = vmatprep.mubr.f32.mxu0 0.0
        %3671 = vmatmul.mubr.f32.gmra.mxu0 %v3596
        %v3672 = vpop.f32.mrf.mxu0
        %v3673 = vadd.f32 %v3591, %v3672
        %v3674 = vpop.f32.mrf.mxu0
        %3675 = vmatprep.mubr.f32.mxu0 0.0
        %3676 = vmatmul.mubr.f32.gmra.mxu0 %v3599
        %v3677 = vpop.f32.mrf.mxu0
        %v3678 = vadd.f32 %v3591, %v3677
        %v3679 = vpop.f32.mrf.mxu0
        %3680 = vdwg.mxu0
        %v3681 = vsel %vm847, %v3668, 0.0
        %3682 = vadd.xlane.f32.xlu0 %v3681
        %v3683 = vpop.xlane.xlu0 %3682
        %v3684 = vsel %vm847, %v3673, 0.0
        %3685 = vadd.xlane.f32.xlu0 %v3684
        %v3686 = vpop.xlane.xlu0 %3685
        %vm3687 = vcmask 256000
        %v3688 = vsel %vm3687, %v3678, 0.0
        %3689 = vadd.xlane.f32.xlu0 %v3688
        %v3690 = vpop.xlane.xlu0 %3689
        %v3691 = vmul.f32 %v3683, %v969
        %v3692 = vmul.f32 %v3686, %v969
        %v3693 = vmul.f32 %v3690, %v969
        %v3694 = vsub.f32 %v3668, %v3691
        %v3695 = vsub.f32 %v3673, %v3692
        %v3696 = vsub.f32 %v3678, %v3693
        %v3697 = vmul.f32 %v3694, %v3694
        %v3698 = vmul.f32 %v3695, %v3695
        %v3699 = vmul.f32 %v3696, %v3696
        %v3700 = vsel %vm847, %v3697, 0.0
        %3701 = vadd.xlane.f32.xlu0 %v3700
        %v3702 = vpop.xlane.xlu0 %3701
        %v3703 = vsel %vm847, %v3698, 0.0
        %3704 = vadd.xlane.f32.xlu0 %v3703
        %v3705 = vpop.xlane.xlu0 %3704
        %v3706 = vsel %vm3687, %v3699, 0.0
        %3707 = vadd.xlane.f32.xlu0 %v3706
        %v3708 = vpop.xlane.xlu0 %3707
        %v3709 = vmul.f32 %v3702, %v969
        %v3710 = vmul.f32 %v3705, %v969
        %v3711 = vmul.f32 %v3708, %v969
        %v3712 = vadd.f32 %v3709, 1e-05
        %v3713 = vadd.f32 %v3710, 1e-05
        %v3714 = vadd.f32 %v3711, 1e-05
        %v3715 = vrsqrt.pop %v3712
        %v3716 = vrsqrt.pop %v3713
        %v3717 = vrsqrt.pop %v3714
        %v3718 = vmul.f32 %v3694, %v3715
        %v3719 = vmul.f32 %v3695, %v3716
        %v3720 = vmul.f32 %v3696, %v3717
        %v3721 = vlaneseq
        %v3722 = vshrl.u32 %v3721, 7
        %v3723 = vsub.s32 1, %v3722
        %v3724 = vrot.slane %v3587, %v3723
        %v3725 = vmul.f32 %v3718, %v3724
        %v3726 = vmul.f32 %v3719, %v3724
        %v3727 = vmul.f32 %v3720, %v3724
        %v3728 = vlaneseq
        %v3729 = vshrl.u32 %v3728, 7
        %v3730 = vsub.s32 2, %v3729
        %v3731 = vrot.slane %v3587, %v3730
        %v3732 = vadd.f32 %v3725, %v3731
        %v3733 = vadd.f32 %v3726, %v3731
        %v3734 = vadd.f32 %v3727, %v3731
        %v3735 = vmul.f32 %v3732, 0.5
        %v3736 = vmul.f32 %v3733, 0.5
        %v3737 = vmul.f32 %v3734, 0.5
        %v3738 = vmul.f32 %v3732, 0.70710677
        %v3739 = vmul.f32 %v3733, 0.70710677
        %v3740 = vmul.f32 %v3734, 0.70710677
        %v3741 = verf.f32.pop %v3738
        %v3742 = verf.f32.pop %v3739
        %v3743 = verf.f32.pop %v3740
        %v3744 = vadd.f32 %v3741, 1.0
        %v3745 = vadd.f32 %v3742, 1.0
        %v3746 = vadd.f32 %v3743, 1.0
        %v3747 = vmul.f32 %v3735, %v3744
        %v3748 = vmul.f32 %v3736, %v3745
        %v3749 = vmul.f32 %v3737, %v3746
        %3750 = vst.msk [vmem:[#allocation2] sm:$0xff] %vm847, %v3747
        %3751 = vst.msk [vmem:[#allocation2 + $0x8] sm:$0xff] %vm847, %v3748
        %3752 = vst.msk [vmem:[#allocation2 + $0x10] sm:$0x7] %vm3687, %v3749
        %v3753 = vld [vmem:[#allocation2] ss:$2 sm:$0xff]
        %v3754 = vld [vmem:[%s1699] ss:$2 sm:$0x1]
        %v3755 = vld [vmem:[%s1737] ss:$2 sm:$0xff]
        %v3756 = vld [vmem:[%s1739] ss:$2 sm:$0x1]
        %3759 = vrot.lane.b32.xlu0 %v3755, 32
        %v3760 = vpop.permute.xlu0 %3759
        %3761 = vrot.lane.b32.xlu0 %v3756, 32
        %v3762 = vpop.permute.xlu0 %3761
        %v3765 = vsel %vm847, %v3753, %v3760
        %v3766 = vsel %vm847, %v3754, %v3762
        %s3767 = scalar_lea.vmem %s1, 480
        %v3768 = vld [vmem:[%s3767] sm:$0xff]
        %v3769 = vld [vmem:[%s3767 + $0x8] sm:$0xff]
        %v3770 = vld [vmem:[%s3767 + $0x10] sm:$0xff]
        %v3771 = vld [vmem:[%s3767 + $0x18] sm:$0xff]
        %v3772 = vld [vmem:[%s3767 + $0x20] sm:$0xff]
        %v3773 = vld [vmem:[%s3767 + $0x28] sm:$0xff]
        %v3774 = vld [vmem:[%s3767 + $0x30] sm:$0xff]
        %v3775 = vld [vmem:[%s3767 + $0x38] sm:$0xff]
        %s3776 = scalar_lea.vmem %s2, 20
        %v3777 = vld [vmem:[%s3776] sm:$0x7]
        %v3778 = vlaneseq
        %v3779 = vshrl.u32 %v3778, 7
        %v3780 = vsub.s32 0, %v3779
        %v3781 = vrot.slane %v3777, %v3780
        %v3783 = vsel %vm1997, %v3765, 0
        %v3786 = vsel %vm1997, %v3766, 0
        %3788 = vmatprep.subr.mxu0 0.0
        %3789 = vmatpush1.msra.mxu0 0.0
        %3790 = vmatprep.subr.mxu0 0.0
        %3791 = vmatpush1.msra.mxu0 0.0
        %3792 = vmatprep.subr.mxu0 0.0
        %3793 = vmatpush1.msra.mxu0 0.0
        %3794 = vmatprep.subr.mxu0 0.0
        %3795 = vmatpush1.msra.mxu0 0.0
        %3796 = vmatprep.subr.mxu0 0.0
        %3797 = vmatpush1.msra.mxu0 0.0
        %3798 = vmatprep.subr.mxu0 0.0
        %3799 = vmatpush1.msra.mxu0 0.0
        %3800 = vmatprep.subr.mxu0 0.0
        %3801 = vmatpush1.msra.mxu0 0.0
        %3802 = vmatprep.subr.mxu0 0.0
        %3803 = vmatpush1.msra.mxu0 0.0
        %3804 = vmatprep.subr.mxu0 0.0
        %3805 = vmatpush1.msra.mxu0 %v3775
        %3806 = vmatprep.subr.mxu0 0.0
        %3807 = vmatpush1.msra.mxu0 %v3774
        %3808 = vmatprep.subr.mxu0 0.0
        %3809 = vmatpush1.msra.mxu0 %v3773
        %3810 = vmatprep.subr.mxu0 0.0
        %3811 = vmatpush1.msra.mxu0 %v3772
        %3812 = vmatprep.subr.mxu0 0.0
        %3813 = vmatpush1.msra.mxu0 %v3771
        %3814 = vmatprep.subr.mxu0 0.0
        %3815 = vmatpush1.msra.mxu0 %v3770
        %3816 = vmatprep.subr.mxu0 0.0
        %3817 = vmatpush1.msra.mxu0 %v3769
        %3818 = vmatprep.subr.mxu0 0.0
        %3819 = vmatpush1.msra.mxu0 %v3768
        %3820 = vmatprep.subr.mxu0 0.0
        %3821 = vmatpush2.msra.mxu0 0.0
        %3822 = vmatprep.subr.mxu0 0.0
        %3823 = vmatpush2.msra.mxu0 0.0
        %3824 = vmatprep.subr.mxu0 0.0
        %3825 = vmatpush2.msra.mxu0 0.0
        %3826 = vmatprep.subr.mxu0 0.0
        %3827 = vmatpush2.msra.mxu0 0.0
        %3828 = vmatprep.subr.mxu0 0.0
        %3829 = vmatpush2.msra.mxu0 0.0
        %3830 = vmatprep.subr.mxu0 0.0
        %3831 = vmatpush2.msra.mxu0 0.0
        %3832 = vmatprep.subr.mxu0 0.0
        %3833 = vmatpush2.msra.mxu0 0.0
        %3834 = vmatprep.subr.mxu0 0.0
        %3835 = vmatpush2.msra.mxu0 0.0
        %3836 = vmatprep.subr.mxu0 0.0
        %3837 = vmatpush2.msra.mxu0 0.0
        %3838 = vmatprep.subr.mxu0 0.0
        %3839 = vmatpush2.msra.mxu0 0.0
        %3840 = vmatprep.subr.mxu0 0.0
        %3841 = vmatpush2.msra.mxu0 0.0
        %3842 = vmatprep.subr.mxu0 0.0
        %3843 = vmatpush2.msra.mxu0 0.0
        %3844 = vmatprep.subr.mxu0 0.0
        %3845 = vmatpush2.msra.mxu0 0.0
        %3846 = vmatprep.subr.mxu0 0.0
        %3847 = vmatpush2.msra.mxu0 0.0
        %3848 = vmatprep.subr.mxu0 0.0
        %3849 = vmatpush2.msra.mxu0 0.0
        %3850 = vmatprep.subr.mxu0 0.0
        %3851 = vmatpush2.msra.mxu0 0.0
        %3852 = vmatprep.mubr.f32.mxu0 0.0
        %3853 = vmatmul.mubr.f32.gmra.mxu0 %v3783
        %v3854 = vpop.f32.mrf.mxu0
        %v3855 = vadd.f32 %v3781, %v3854
        %v3856 = vpop.f32.mrf.mxu0
        %3857 = vmatprep.mubr.f32.mxu0 0.0
        %3858 = vmatmul.mubr.f32.gmra.mxu0 %v3786
        %v3859 = vpop.f32.mrf.mxu0
        %v3860 = vadd.f32 %v3781, %v3859
        %v3861 = vpop.f32.mrf.mxu0
        %3862 = vdwg.mxu0
        %v3863 = vsel %vm847, %v3855, 0.0
        %3864 = vadd.xlane.f32.xlu0 %v3863
        %v3865 = vpop.xlane.xlu0 %3864
        %vm3866 = vcmask 253952
        %v3867 = vsel %vm3866, %v3860, 0.0
        %3868 = vadd.xlane.f32.xlu0 %v3867
        %v3869 = vpop.xlane.xlu0 %3868
        %v3870 = vmul.f32 %v3865, %v969
        %v3871 = vmul.f32 %v3869, %v969
        %v3872 = vsub.f32 %v3855, %v3870
        %v3873 = vsub.f32 %v3860, %v3871
        %v3874 = vmul.f32 %v3872, %v3872
        %v3875 = vmul.f32 %v3873, %v3873
        %v3876 = vsel %vm847, %v3874, 0.0
        %3877 = vadd.xlane.f32.xlu0 %v3876
        %v3878 = vpop.xlane.xlu0 %3877
        %v3879 = vsel %vm3866, %v3875, 0.0
        %3880 = vadd.xlane.f32.xlu0 %v3879
        %v3881 = vpop.xlane.xlu0 %3880
        %v3882 = vmul.f32 %v3878, %v969
        %v3883 = vmul.f32 %v3881, %v969
        %v3884 = vadd.f32 %v3882, 1e-05
        %v3885 = vadd.f32 %v3883, 1e-05
        %v3886 = vrsqrt.pop %v3884
        %v3887 = vrsqrt.pop %v3885
        %v3888 = vmul.f32 %v3872, %v3886
        %v3889 = vmul.f32 %v3873, %v3887
        %v3890 = vlaneseq
        %v3891 = vshrl.u32 %v3890, 7
        %v3892 = vsub.s32 1, %v3891
        %v3893 = vrot.slane %v3777, %v3892
        %v3894 = vmul.f32 %v3888, %v3893
        %v3895 = vmul.f32 %v3889, %v3893
        %v3896 = vlaneseq
        %v3897 = vshrl.u32 %v3896, 7
        %v3898 = vsub.s32 2, %v3897
        %v3899 = vrot.slane %v3777, %v3898
        %v3900 = vadd.f32 %v3894, %v3899
        %v3901 = vadd.f32 %v3895, %v3899
        %v3902 = vmul.f32 %v3900, 0.5
        %v3903 = vmul.f32 %v3901, 0.5
        %v3904 = vmul.f32 %v3900, 0.70710677
        %v3905 = vmul.f32 %v3901, 0.70710677
        %v3906 = verf.f32.pop %v3904
        %v3907 = verf.f32.pop %v3905
        %v3908 = vadd.f32 %v3906, 1.0
        %v3909 = vadd.f32 %v3907, 1.0
        %v3910 = vmul.f32 %v3902, %v3908
        %v3911 = vmul.f32 %v3903, %v3909
        %3912 = vst.msk [vmem:[#allocation3] sm:$0xff] %vm847, %v3910
        %3913 = vst.msk [vmem:[#allocation3 + $0x8] sm:$0x1] %vm3866, %v3911
        %v3914 = vld [vmem:[#allocation3] ss:$2 sm:$0xf]
        %v3915 = vld [vmem:[%s2710] ss:$2 sm:$0xf]
        %3917 = vrot.lane.b32.xlu0 %v3915, 32
        %v3918 = vpop.permute.xlu0 %3917
        %v3920 = vsel %vm847, %v3914, %v3918
        %s3921 = scalar_lea.vmem %s1, 576
        %v3922 = vld [vmem:[%s3921] sm:$0xff]
        %v3923 = vld [vmem:[%s3921 + $0x8] sm:$0xff]
        %v3924 = vld [vmem:[%s3921 + $0x10] sm:$0xff]
        %v3925 = vld [vmem:[%s3921 + $0x18] sm:$0xff]
        %v3926 = vld [vmem:[%s3921 + $0x20] sm:$0xff]
        %v3927 = vld [vmem:[%s3921 + $0x28] sm:$0xff]
        %v3928 = vld [vmem:[%s3921 + $0x30] sm:$0xff]
        %v3929 = vld [vmem:[%s3921 + $0x38] sm:$0xff]
        %s3930 = scalar_lea.vmem %s2, 24
        %v3931 = vld [vmem:[%s3930] sm:$0x7]
        %v3932 = vlaneseq
        %v3933 = vshrl.u32 %v3932, 7
        %v3934 = vsub.s32 0, %v3933
        %v3935 = vrot.slane %v3931, %v3934
        %v3937 = vsel %vm1997, %v3920, 0
        %3939 = vmatprep.subr.mxu0 0.0
        %3940 = vmatpush1.msra.mxu0 0.0
        %3941 = vmatprep.subr.mxu0 0.0
        %3942 = vmatpush1.msra.mxu0 0.0
        %3943 = vmatprep.subr.mxu0 0.0
        %3944 = vmatpush1.msra.mxu0 0.0
        %3945 = vmatprep.subr.mxu0 0.0
        %3946 = vmatpush1.msra.mxu0 0.0
        %3947 = vmatprep.subr.mxu0 0.0
        %3948 = vmatpush1.msra.mxu0 0.0
        %3949 = vmatprep.subr.mxu0 0.0
        %3950 = vmatpush1.msra.mxu0 0.0
        %3951 = vmatprep.subr.mxu0 0.0
        %3952 = vmatpush1.msra.mxu0 0.0
        %3953 = vmatprep.subr.mxu0 0.0
        %3954 = vmatpush1.msra.mxu0 0.0
        %3955 = vmatprep.subr.mxu0 0.0
        %3956 = vmatpush1.msra.mxu0 %v3929
        %3957 = vmatprep.subr.mxu0 0.0
        %3958 = vmatpush1.msra.mxu0 %v3928
        %3959 = vmatprep.subr.mxu0 0.0
        %3960 = vmatpush1.msra.mxu0 %v3927
        %3961 = vmatprep.subr.mxu0 0.0
        %3962 = vmatpush1.msra.mxu0 %v3926
        %3963 = vmatprep.subr.mxu0 0.0
        %3964 = vmatpush1.msra.mxu0 %v3925
        %3965 = vmatprep.subr.mxu0 0.0
        %3966 = vmatpush1.msra.mxu0 %v3924
        %3967 = vmatprep.subr.mxu0 0.0
        %3968 = vmatpush1.msra.mxu0 %v3923
        %3969 = vmatprep.subr.mxu0 0.0
        %3970 = vmatpush1.msra.mxu0 %v3922
        %3971 = vmatprep.subr.mxu0 0.0
        %3972 = vmatpush2.msra.mxu0 0.0
        %3973 = vmatprep.subr.mxu0 0.0
        %3974 = vmatpush2.msra.mxu0 0.0
        %3975 = vmatprep.subr.mxu0 0.0
        %3976 = vmatpush2.msra.mxu0 0.0
        %3977 = vmatprep.subr.mxu0 0.0
        %3978 = vmatpush2.msra.mxu0 0.0
        %3979 = vmatprep.subr.mxu0 0.0
        %3980 = vmatpush2.msra.mxu0 0.0
        %3981 = vmatprep.subr.mxu0 0.0
        %3982 = vmatpush2.msra.mxu0 0.0
        %3983 = vmatprep.subr.mxu0 0.0
        %3984 = vmatpush2.msra.mxu0 0.0
        %3985 = vmatprep.subr.mxu0 0.0
        %3986 = vmatpush2.msra.mxu0 0.0
        %3987 = vmatprep.subr.mxu0 0.0
        %3988 = vmatpush2.msra.mxu0 0.0
        %3989 = vmatprep.subr.mxu0 0.0
        %3990 = vmatpush2.msra.mxu0 0.0
        %3991 = vmatprep.subr.mxu0 0.0
        %3992 = vmatpush2.msra.mxu0 0.0
        %3993 = vmatprep.subr.mxu0 0.0
        %3994 = vmatpush2.msra.mxu0 0.0
        %3995 = vmatprep.subr.mxu0 0.0
        %3996 = vmatpush2.msra.mxu0 0.0
        %3997 = vmatprep.subr.mxu0 0.0
        %3998 = vmatpush2.msra.mxu0 0.0
        %3999 = vmatprep.subr.mxu0 0.0
        %4000 = vmatpush2.msra.mxu0 0.0
        %4001 = vmatprep.subr.mxu0 0.0
        %4002 = vmatpush2.msra.mxu0 0.0
        %4003 = vmatprep.mubr.f32.mxu0 0.0
        %4004 = vmatmul.mubr.f32.gmra.mxu0 %v3937
        %v4005 = vpop.f32.mrf.mxu0
        %v4006 = vadd.f32 %v3935, %v4005
        %v4007 = vpop.f32.mrf.mxu0
        %4008 = vdwg.mxu0
        %vm4009 = vcmask 257024
        %v4010 = vsel %vm4009, %v4006, 0.0
        %4011 = vadd.xlane.f32.xlu0 %v4010
        %v4012 = vpop.xlane.xlu0 %4011
        %v4013 = vmul.f32 %v4012, %v969
        %v4014 = vsub.f32 %v4006, %v4013
        %v4015 = vmul.f32 %v4014, %v4014
        %v4016 = vsel %vm4009, %v4015, 0.0
        %4017 = vadd.xlane.f32.xlu0 %v4016
        %v4018 = vpop.xlane.xlu0 %4017
        %v4019 = vmul.f32 %v4018, %v969
        %v4020 = vadd.f32 %v4019, 1e-05
        %v4021 = vrsqrt.pop %v4020
        %v4022 = vmul.f32 %v4014, %v4021
        %v4023 = vlaneseq
        %v4024 = vshrl.u32 %v4023, 7
        %v4025 = vsub.s32 1, %v4024
        %v4026 = vrot.slane %v3931, %v4025
        %v4027 = vmul.f32 %v4022, %v4026
        %v4028 = vlaneseq
        %v4029 = vshrl.u32 %v4028, 7
        %v4030 = vsub.s32 2, %v4029
        %v4031 = vrot.slane %v3931, %v4030
        %v4032 = vadd.f32 %v4027, %v4031
        %v4033 = vmul.f32 %v4032, 0.5
        %v4034 = vmul.f32 %v4032, 0.70710677
        %v4035 = verf.f32.pop %v4034
        %v4036 = vadd.f32 %v4035, 1.0
        %v4037 = vmul.f32 %v4033, %v4036
        %4038 = vst.msk [vmem:[%s163] sm:$0xf] %vm4009, %v4037
        %s4039 = sand.u32 %s93, 1
        %s4040 = scalar_lea.sflag [#allocation5], %s4039
        %s4041 = sand.u32 %s93, 1
        %s4042 = smul.addr %s4041, 4
        %s4043 = scalar_lea.vmem [#allocation4], %s4042
        // Predicated region
        $region33: #{xlsr_encoder_feats.1} parent=31 // pred_check
          %p4044 = pneg %p103
        $region34: #{xlsr_encoder_feats.1} parent=31 // pred_check_branch
          %4046 = sbr.rel (%p4044) target = $region36
        $region35: #{xlsr_encoder_feats.1} parent=31 // pred_region
          %s4048 = ssub.s32 64, 64
          %4049 = vsyncadd %s4040, %s4048
          %s4050 = smul.addr %s17, 64
          %s4051 = scalar_lea.hbm %s3, %s4050
          %s4053 = sshll.u32 %s4043, 4
          %s4054 = int_to_ptr.vmem [resolvable:$true] %s4053
          %4056 = dma.vmem_to_hbm [thread:$0]  %s4054, 64, %s4051, %s4040
        $region36: #{xlsr_encoder_feats.1} parent=31 // pred_fallthru
          _
      $region32: #{xlsr_encoder_feats.1} parent=5 // pred_fallthru
        _
      %p4057 = scmp.le.s32.totalorder 2, %s12
      // Predicated region
      $region37: #{xlsr_encoder_feats.1} parent=5 // pred_check
        %p4058 = pneg %p4057
      $region38: #{xlsr_encoder_feats.1} parent=5 // pred_check_branch
        %4060 = sbr.rel (%p4058) target = $region40
      $region39: #{xlsr_encoder_feats.1} parent=5 // pred_region
        %s4061 = ssub.s32 %s12, 2
        // Predicated region
        $region41: #{xlsr_encoder_feats.1} parent=39 // pred_check
          %p4062 = pneg %p109
        $region42: #{xlsr_encoder_feats.1} parent=39 // pred_check_branch
          %4064 = sbr.rel (%p4062) target = $region44
        $region43: #{xlsr_encoder_feats.1} parent=39 // pred_region
          %s4065 = sand.u32 %s94, 1
          %s4066 = scalar_lea.sflag [#allocation5], %s4065
          %s4067 = sand.u32 %s94, 1
          %s4068 = smul.addr %s4067, 4
          %s4069 = scalar_lea.vmem [#allocation4], %s4068
          %4070 = dma.done %s4066, 64
        $region44: #{xlsr_encoder_feats.1} parent=39 // pred_fallthru
          _
      $region40: #{xlsr_encoder_feats.1} parent=5 // pred_fallthru
        _
    $region6: #{xlsr_encoder_feats.1} parent=1 // loop_footer
      %s16 = sadd.s32 1, %s12
    $region7: #{xlsr_encoder_feats.1} parent=1 // loop_footer_branch
      %11 = sbr.rel target = $region3
    $region8: #{xlsr_encoder_feats.1} parent=1 // loop_exit
      _
    %4071 = vsyncpa [#allocation5], 1
    %s4072 = scalar_lea.sflag [#allocation5], 1
    %4073 = vsyncpa %s4072, 1

</llo_original>
